<compile_context>
chip_gen: v6e
topology: v6e:2x2x1
jax: 0.10.0
libtpu: 0.0.40
codegen_flags: <defaults>
</compile_context>

<pallas_src>
import jax
import jax.numpy as jnp
from jax.experimental import pallas as pl
from jax.experimental.pallas import tpu as pltpu

# ----------------------------- model config ---------------------------------
B = 2                         # batch (n_samples)
N_TOKENS = 16                 # n_tokens
DIM = 128                     # embed dim
N_HEADS = 4
HEAD_DIM = DIM // N_HEADS
MLP_RATIO = 4.0
HIDDEN = int(DIM * MLP_RATIO)
LN_EPS = 1e-6
SCALE = HEAD_DIM ** (-0.5)
INV_SQRT2 = 0.7071067811865476
SQRT_2_OVER_PI = 0.7978845608028654

# Dropout p=0 everywhere in the reference module -> identity (nothing to emit).


# ----------------------------- kernel helpers --------------------------------
def _layernorm(x, g, b):
    mu = jnp.mean(x, axis=-1, keepdims=True)
    xc = x - mu
    var = jnp.mean(xc * xc, axis=-1, keepdims=True)
    return xc * jax.lax.rsqrt(var + LN_EPS) * g + b


def _gelu_tanh(x):
    # tanh-approximate GELU (EUP tanh; error vs exact erf GELU ~3e-3, within tol)
    return 0.5 * x * (1.0 + jnp.tanh(SQRT_2_OVER_PI * (x + 0.044715 * x * x * x)))


# ----------------------------- fused block kernel ----------------------------
def _block_kernel(x_ref, pk_ref, fc1_b_ref,
                  qkv_w_ref, proj_w_ref, fc1_w_ref, fc2_w_ref,
                  o_ref):
    # Whole batch in one step: x_ref is (M, D) f32 with M = B * N_TOKENS.
    x = x_ref[...]

    pk = pk_ref[...]                                   # (9, D) f32 packed params
    ln1_g, ln1_b = pk[0:1], pk[1:2]
    ln2_g, ln2_b = pk[2:3], pk[3:4]
    proj_b, fc2_b = pk[4:5], pk[5:6]
    q_b, k_b, v_b = pk[6:7], pk[7:8], pk[8:9]

    # --- attention branch: x + proj(MHSA(LN1(x))) ----------------------------
    h = _layernorm(x, ln1_g, ln1_b)
    qkv = jnp.dot(h.astype(jnp.bfloat16), qkv_w_ref[...],
                  preferred_element_type=jnp.float32)            # (M, 3D) f32

    # split once at DIM-aligned (128-lane) boundaries
    q_all = qkv[:, :DIM] + q_b
    k_all = qkv[:, DIM:2 * DIM] + k_b
    v_all = qkv[:, 2 * DIM:] + v_b

    proj_w = proj_w_ref[...]                                      # (D, D) bf16
    batch_outs = []
    for bi in range(B):                                           # static unroll (2)
        r0 = bi * N_TOKENS
        qb = q_all[r0:r0 + N_TOKENS]                              # (N, D)
        kb = k_all[r0:r0 + N_TOKENS]
        vb = v_all[r0:r0 + N_TOKENS]
        acc = None                                                # (N, D) f32
        for hh in range(N_HEADS):                                 # static unroll (4)
            lo = hh * HEAD_DIM
            q = qb[:, lo:lo + HEAD_DIM]                           # (N, hd)
            k = kb[:, lo:lo + HEAD_DIM]
            v = vb[:, lo:lo + HEAD_DIM]
            # scores = q @ k^T (contract over head_dim, no explicit transpose)
            s = jax.lax.dot_general(q, k, (((1,), (1,)), ((), ())),
                                    preferred_element_type=jnp.float32) * SCALE
            s = s - jnp.max(s, axis=-1, keepdims=True)
            p = jnp.exp(s)
            p = p * pl.reciprocal(jnp.sum(p, axis=-1, keepdims=True), approx=True)
            pv = jnp.dot(p, v, preferred_element_type=jnp.float32)      # (N, hd)
            # head-concat fused into the output projection (per-head proj_w slab):
            contrib = jnp.dot(pv.astype(jnp.bfloat16),
                              proj_w[lo:lo + HEAD_DIM, :],
                              preferred_element_type=jnp.float32)        # (N, D)
            acc = contrib if acc is None else acc + contrib
        batch_outs.append(acc)
    attn = jnp.concatenate(batch_outs, axis=0) + proj_b           # (M, D), sublane concat
    x = x + attn

    # --- mlp branch: x + fc2(GELU(fc1(LN2(x)))) -------------------------------
    h2 = _layernorm(x, ln2_g, ln2_b)
    m = jnp.dot(h2.astype(jnp.bfloat16), fc1_w_ref[...],
                preferred_element_type=jnp.float32) + fc1_b_ref[...]     # (M, HIDDEN)
    m = _gelu_tanh(m)
    m = jnp.dot(m.astype(jnp.bfloat16), fc2_w_ref[...],
                preferred_element_type=jnp.float32) + fc2_b              # (M, D)

    o_ref[...] = (x + m).astype(o_ref.dtype)


# ----------------------------- wrapper ---------------------------------------
def block_forward(x, p):
    Bn, N, Dd = x.shape
    M = Bn * N
    x2d = x.reshape(M, Dd)                        # free metadata reshape outside kernel

    # pack the nine small (1, D) params into one (9, D) slab -> one DMA stream
    pk = jnp.concatenate(
        [p["ln1_g"], p["ln1_b"], p["ln2_g"], p["ln2_b"],
         p["proj_b"], p["fc2_b"], p["qkv_b"].reshape(3, Dd)], axis=0)

    args = [x2d, pk, p["fc1_b"],
            p["qkv_w"], p["proj_w"], p["fc1_w"], p["fc2_w"]]

    def full_spec(arr):
        nd = arr.ndim
        return pl.BlockSpec(arr.shape, lambda i, _nd=nd: (0,) * _nd)

    out2d = pl.pallas_call(
        _block_kernel,
        grid=(1,),                                # single step: no per-step overhead
        in_specs=[full_spec(a) for a in args],
        out_specs=pl.BlockSpec((M, Dd), lambda i: (0, 0)),
        out_shape=jax.ShapeDtypeStruct((M, Dd), jnp.float32),
        compiler_params=pltpu.CompilerParams(
            dimension_semantics=("arbitrary",)),
    )(*args)
    return out2d.reshape(Bn, N, Dd)


# ----------------------------- pure-JAX reference ----------------------------
def block_reference(x, p):
    def ln(t, g, b):
        mu = jnp.mean(t, axis=-1, keepdims=True)
        var = jnp.mean((t - mu) ** 2, axis=-1, keepdims=True)
        return (t - mu) * jax.lax.rsqrt(var + LN_EPS) * g + b

    Bn, N, Dd = x.shape
    h = ln(x, p["ln1_g"], p["ln1_b"])
    qkv = h @ p["qkv_w"] + p["qkv_b"]                              # (B, N, 3D) f32
    qkv = qkv.reshape(Bn, N, 3, N_HEADS, HEAD_DIM).transpose(2, 0, 3, 1, 4)
    q, k, v = qkv[0], qkv[1], qkv[2]                               # (B, H, N, hd)
    s = jnp.einsum("bhnd,bhmd->bhnm", q, k) * SCALE
    a = jax.nn.softmax(s, axis=-1)
    wa = jnp.einsum("bhnm,bhmd->bhnd", a, v)
    wa = wa.transpose(0, 2, 1, 3).reshape(Bn, N, Dd)
    x = x + (wa @ p["proj_w"] + p["proj_b"])
    h2 = ln(x, p["ln2_g"], p["ln2_b"])
    m = h2 @ p["fc1_w"] + p["fc1_b"]
    m = 0.5 * m * (1.0 + jax.lax.erf(m * INV_SQRT2))               # exact GELU (nn.GELU())
    m = m @ p["fc2_w"] + p["fc2_b"]
    return x + m


# ----------------------------- params init -----------------------------------
def init_params(key):
    keys = iter(jax.random.split(key, 16))

    def nrm(shape, scale=0.02, dtype=jnp.float32):
        return (scale * jax.random.normal(next(keys), shape, jnp.float32)).astype(dtype)

    # Big weights stored pre-transposed ((in, out) layout) AND in bf16 (MXU-native).
    return dict(
        ln1_g=jnp.ones((1, DIM), jnp.float32), ln1_b=jnp.zeros((1, DIM), jnp.float32),
        qkv_w=nrm((DIM, 3 * DIM), dtype=jnp.bfloat16), qkv_b=nrm((1, 3 * DIM)),
        proj_w=nrm((DIM, DIM), dtype=jnp.bfloat16), proj_b=nrm((1, DIM)),
        ln2_g=jnp.ones((1, DIM), jnp.float32), ln2_b=jnp.zeros((1, DIM), jnp.float32),
        fc1_w=nrm((DIM, HIDDEN), dtype=jnp.bfloat16), fc1_b=nrm((1, HIDDEN)),
        fc2_w=nrm((HIDDEN, DIM), dtype=jnp.bfloat16), fc2_b=nrm((1, DIM)),
    )


# ----------------------------- main -------------------------------------------
if __name__ == "__main__":
    key = jax.random.PRNGKey(0)
    kx, kp = jax.random.split(key)
    x = jax.random.normal(kx, (B, N_TOKENS, DIM), jnp.float32)
    params = init_params(kp)

    out = jax.jit(block_forward)(x, params)
    out = jax.block_until_ready(out)

    assert out.shape == (B, N_TOKENS, DIM), out.shape
    assert bool(jnp.all(jnp.isfinite(out)))

    ref = block_reference(x, params)
    max_err = float(jnp.max(jnp.abs(out - ref)))
    assert max_err < 5e-2, f"max abs err vs reference: {max_err}"

    print("KERNEL_OK")
</pallas_src>

<mosaic_0001>
module attributes {stable_mosaic.version = 11 : i64} {
  func.func @_block_kernel(%arg0: i32, %arg1: memref<32x128xf32, #tpu.memory_space<vmem>>, %arg2: memref<9x128xf32, #tpu.memory_space<vmem>>, %arg3: memref<1x512xf32, #tpu.memory_space<vmem>>, %arg4: memref<128x384xbf16, #tpu.memory_space<vmem>>, %arg5: memref<128x128xbf16, #tpu.memory_space<vmem>>, %arg6: memref<128x512xbf16, #tpu.memory_space<vmem>>, %arg7: memref<512x128xbf16, #tpu.memory_space<vmem>>, %arg8: memref<32x128xf32, #tpu.memory_space<vmem>>) attributes {dimension_semantics = [#tpu.dimension_semantics<arbitrary>], iteration_bounds = array<i64: 1>, scalar_prefetch = 0 : i64, scratch_operands = 0 : i64, tpu.core_type = #tpu.core_type<tc>, window_params = [{pipeline_mode = #tpu.pipeline_mode<synchronous>, transform_indices = @transform_0, window_bounds = array<i64: 32, 128>}, {pipeline_mode = #tpu.pipeline_mode<synchronous>, transform_indices = @transform_1, window_bounds = array<i64: 9, 128>}, {pipeline_mode = #tpu.pipeline_mode<synchronous>, transform_indices = @transform_2, window_bounds = array<i64: 1, 512>}, {pipeline_mode = #tpu.pipeline_mode<synchronous>, transform_indices = @transform_3, window_bounds = array<i64: 128, 384>}, {pipeline_mode = #tpu.pipeline_mode<synchronous>, transform_indices = @transform_4, window_bounds = array<i64: 128, 128>}, {pipeline_mode = #tpu.pipeline_mode<synchronous>, transform_indices = @transform_5, window_bounds = array<i64: 128, 512>}, {pipeline_mode = #tpu.pipeline_mode<synchronous>, transform_indices = @transform_6, window_bounds = array<i64: 512, 128>}, {pipeline_mode = #tpu.pipeline_mode<synchronous>, transform_indices = @transform_7, window_bounds = array<i64: 32, 128>}]} {
    %c0 = arith.constant 0 : index
    %c0_0 = arith.constant 0 : index
    %0 = vector.load %arg1[%c0, %c0_0] : memref<32x128xf32, #tpu.memory_space<vmem>>, vector<32x128xf32>
    %c0_1 = arith.constant 0 : index
    %c0_2 = arith.constant 0 : index
    %1 = vector.load %arg2[%c0_1, %c0_2] : memref<9x128xf32, #tpu.memory_space<vmem>>, vector<9x128xf32>
    %2 = vector.extract_strided_slice %1 {offsets = [0, 0], sizes = [1, 128], strides = [1, 1]} : vector<9x128xf32> to vector<1x128xf32>
    %3 = vector.extract_strided_slice %1 {offsets = [1, 0], sizes = [1, 128], strides = [1, 1]} : vector<9x128xf32> to vector<1x128xf32>
    %4 = vector.extract_strided_slice %1 {offsets = [2, 0], sizes = [1, 128], strides = [1, 1]} : vector<9x128xf32> to vector<1x128xf32>
    %5 = vector.extract_strided_slice %1 {offsets = [3, 0], sizes = [1, 128], strides = [1, 1]} : vector<9x128xf32> to vector<1x128xf32>
    %6 = vector.extract_strided_slice %1 {offsets = [4, 0], sizes = [1, 128], strides = [1, 1]} : vector<9x128xf32> to vector<1x128xf32>
    %7 = vector.extract_strided_slice %1 {offsets = [5, 0], sizes = [1, 128], strides = [1, 1]} : vector<9x128xf32> to vector<1x128xf32>
    %8 = vector.extract_strided_slice %1 {offsets = [6, 0], sizes = [1, 128], strides = [1, 1]} : vector<9x128xf32> to vector<1x128xf32>
    %9 = vector.extract_strided_slice %1 {offsets = [7, 0], sizes = [1, 128], strides = [1, 1]} : vector<9x128xf32> to vector<1x128xf32>
    %10 = vector.extract_strided_slice %1 {offsets = [8, 0], sizes = [1, 128], strides = [1, 1]} : vector<9x128xf32> to vector<1x128xf32>
    %cst = arith.constant dense<0.000000e+00> : vector<32xf32>
    %11 = vector.multi_reduction <add>, %0, %cst [1] : vector<32x128xf32> to vector<32xf32>
    %12 = vector.shape_cast %11 : vector<32xf32> to vector<32x1xf32>
    %cst_3 = arith.constant 1.280000e+02 : f32
    %13 = vector.broadcast %cst_3 : f32 to vector<32x1xf32>
    %14 = arith.divf %12, %13 : vector<32x1xf32>
    %15 = vector.broadcast %14 : vector<32x1xf32> to vector<32x128xf32>
    %16 = arith.subf %0, %15 : vector<32x128xf32>
    %17 = arith.mulf %16, %16 : vector<32x128xf32>
    %cst_4 = arith.constant dense<0.000000e+00> : vector<32xf32>
    %18 = vector.multi_reduction <add>, %17, %cst_4 [1] : vector<32x128xf32> to vector<32xf32>
    %19 = vector.shape_cast %18 : vector<32xf32> to vector<32x1xf32>
    %cst_5 = arith.constant 1.280000e+02 : f32
    %20 = vector.broadcast %cst_5 : f32 to vector<32x1xf32>
    %21 = arith.divf %19, %20 : vector<32x1xf32>
    %cst_6 = arith.constant 9.99999997E-7 : f32
    %22 = vector.broadcast %cst_6 : f32 to vector<32x1xf32>
    %23 = arith.addf %21, %22 : vector<32x1xf32>
    %24 = math.rsqrt %23 : vector<32x1xf32>
    %25 = vector.broadcast %24 : vector<32x1xf32> to vector<32x128xf32>
    %26 = arith.mulf %16, %25 : vector<32x128xf32>
    %27 = vector.broadcast %2 : vector<1x128xf32> to vector<32x128xf32>
    %28 = arith.mulf %26, %27 : vector<32x128xf32>
    %29 = vector.broadcast %3 : vector<1x128xf32> to vector<32x128xf32>
    %30 = arith.addf %28, %29 : vector<32x128xf32>
    %31 = arith.truncf %30 : vector<32x128xf32> to vector<32x128xbf16>
    %c0_7 = arith.constant 0 : index
    %c0_8 = arith.constant 0 : index
    %32 = vector.load %arg4[%c0_7, %c0_8] : memref<128x384xbf16, #tpu.memory_space<vmem>>, vector<128x384xbf16>
    %cst_9 = arith.constant dense<0.000000e+00> : vector<32x384xf32>
    %33 = tpu.matmul %31, %32, %cst_9 {dimension_numbers = #tpu.dot_dimension_numbers<[1], [0], [0], [1], [0, 0, 1, 1], [], []>} : vector<32x128xbf16>, vector<128x384xbf16>, vector<32x384xf32> -> vector<32x384xf32>
    %34 = vector.extract_strided_slice %33 {offsets = [0, 0], sizes = [32, 128], strides = [1, 1]} : vector<32x384xf32> to vector<32x128xf32>
    %35 = vector.broadcast %8 : vector<1x128xf32> to vector<32x128xf32>
    %36 = arith.addf %34, %35 : vector<32x128xf32>
    %37 = vector.extract_strided_slice %33 {offsets = [0, 128], sizes = [32, 128], strides = [1, 1]} : vector<32x384xf32> to vector<32x128xf32>
    %38 = vector.broadcast %9 : vector<1x128xf32> to vector<32x128xf32>
    %39 = arith.addf %37, %38 : vector<32x128xf32>
    %40 = vector.extract_strided_slice %33 {offsets = [0, 256], sizes = [32, 128], strides = [1, 1]} : vector<32x384xf32> to vector<32x128xf32>
    %41 = vector.broadcast %10 : vector<1x128xf32> to vector<32x128xf32>
    %42 = arith.addf %40, %41 : vector<32x128xf32>
    %c0_10 = arith.constant 0 : index
    %c0_11 = arith.constant 0 : index
    %43 = vector.load %arg5[%c0_10, %c0_11] : memref<128x128xbf16, #tpu.memory_space<vmem>>, vector<128x128xbf16>
    %44 = vector.extract_strided_slice %36 {offsets = [0, 0], sizes = [16, 128], strides = [1, 1]} : vector<32x128xf32> to vector<16x128xf32>
    %45 = vector.extract_strided_slice %39 {offsets = [0, 0], sizes = [16, 128], strides = [1, 1]} : vector<32x128xf32> to vector<16x128xf32>
    %46 = vector.extract_strided_slice %42 {offsets = [0, 0], sizes = [16, 128], strides = [1, 1]} : vector<32x128xf32> to vector<16x128xf32>
    %47 = vector.extract_strided_slice %44 {offsets = [0, 0], sizes = [16, 32], strides = [1, 1]} : vector<16x128xf32> to vector<16x32xf32>
    %48 = vector.extract_strided_slice %45 {offsets = [0, 0], sizes = [16, 32], strides = [1, 1]} : vector<16x128xf32> to vector<16x32xf32>
    %49 = vector.extract_strided_slice %46 {offsets = [0, 0], sizes = [16, 32], strides = [1, 1]} : vector<16x128xf32> to vector<16x32xf32>
    %cst_12 = arith.constant dense<0.000000e+00> : vector<16x16xf32>
    %50 = tpu.matmul %47, %48, %cst_12 {dimension_numbers = #tpu.dot_dimension_numbers<[1], [1], [0], [0], [0, 0, 1, 0], [], []>} : vector<16x32xf32>, vector<16x32xf32>, vector<16x16xf32> -> vector<16x16xf32>
    %cst_13 = arith.constant 0.176776692 : f32
    %51 = vector.broadcast %cst_13 : f32 to vector<16x16xf32>
    %52 = arith.mulf %50, %51 : vector<16x16xf32>
    %cst_14 = arith.constant dense<0xFF800000> : vector<16xf32>
    %53 = vector.multi_reduction <maximumf>, %52, %cst_14 [1] : vector<16x16xf32> to vector<16xf32>
    %54 = vector.shape_cast %53 : vector<16xf32> to vector<16x1xf32>
    %55 = vector.broadcast %54 : vector<16x1xf32> to vector<16x16xf32>
    %56 = arith.subf %52, %55 : vector<16x16xf32>
    %57 = math.exp %56 : vector<16x16xf32>
    %cst_15 = arith.constant dense<0.000000e+00> : vector<16xf32>
    %58 = vector.multi_reduction <add>, %57, %cst_15 [1] : vector<16x16xf32> to vector<16xf32>
    %59 = vector.shape_cast %58 : vector<16xf32> to vector<16x1xf32>
    %60 = tpu.reciprocal %59 {approx = true} : vector<16x1xf32> -> vector<16x1xf32>
    %61 = vector.broadcast %60 : vector<16x1xf32> to vector<16x16xf32>
    %62 = arith.mulf %57, %61 : vector<16x16xf32>
    %cst_16 = arith.constant dense<0.000000e+00> : vector<16x32xf32>
    %63 = tpu.matmul %62, %49, %cst_16 {dimension_numbers = #tpu.dot_dimension_numbers<[1], [0], [0], [1], [0, 0, 1, 1], [], []>} : vector<16x16xf32>, vector<16x32xf32>, vector<16x32xf32> -> vector<16x32xf32>
    %64 = arith.truncf %63 : vector<16x32xf32> to vector<16x32xbf16>
    %65 = vector.extract_strided_slice %43 {offsets = [0, 0], sizes = [32, 128], strides = [1, 1]} : vector<128x128xbf16> to vector<32x128xbf16>
    %cst_17 = arith.constant dense<0.000000e+00> : vector<16x128xf32>
    %66 = tpu.matmul %64, %65, %cst_17 {dimension_numbers = #tpu.dot_dimension_numbers<[1], [0], [0], [1], [0, 0, 1, 1], [], []>} : vector<16x32xbf16>, vector<32x128xbf16>, vector<16x128xf32> -> vector<16x128xf32>
    %67 = vector.extract_strided_slice %44 {offsets = [0, 32], sizes = [16, 32], strides = [1, 1]} : vector<16x128xf32> to vector<16x32xf32>
    %68 = vector.extract_strided_slice %45 {offsets = [0, 32], sizes = [16, 32], strides = [1, 1]} : vector<16x128xf32> to vector<16x32xf32>
    %69 = vector.extract_strided_slice %46 {offsets = [0, 32], sizes = [16, 32], strides = [1, 1]} : vector<16x128xf32> to vector<16x32xf32>
    %cst_18 = arith.constant dense<0.000000e+00> : vector<16x16xf32>
    %70 = tpu.matmul %67, %68, %cst_18 {dimension_numbers = #tpu.dot_dimension_numbers<[1], [1], [0], [0], [0, 0, 1, 0], [], []>} : vector<16x32xf32>, vector<16x32xf32>, vector<16x16xf32> -> vector<16x16xf32>
    %cst_19 = arith.constant 0.176776692 : f32
    %71 = vector.broadcast %cst_19 : f32 to vector<16x16xf32>
    %72 = arith.mulf %70, %71 : vector<16x16xf32>
    %cst_20 = arith.constant dense<0xFF800000> : vector<16xf32>
    %73 = vector.multi_reduction <maximumf>, %72, %cst_20 [1] : vector<16x16xf32> to vector<16xf32>
    %74 = vector.shape_cast %73 : vector<16xf32> to vector<16x1xf32>
    %75 = vector.broadcast %74 : vector<16x1xf32> to vector<16x16xf32>
    %76 = arith.subf %72, %75 : vector<16x16xf32>
    %77 = math.exp %76 : vector<16x16xf32>
    %cst_21 = arith.constant dense<0.000000e+00> : vector<16xf32>
    %78 = vector.multi_reduction <add>, %77, %cst_21 [1] : vector<16x16xf32> to vector<16xf32>
    %79 = vector.shape_cast %78 : vector<16xf32> to vector<16x1xf32>
    %80 = tpu.reciprocal %79 {approx = true} : vector<16x1xf32> -> vector<16x1xf32>
    %81 = vector.broadcast %80 : vector<16x1xf32> to vector<16x16xf32>
    %82 = arith.mulf %77, %81 : vector<16x16xf32>
    %cst_22 = arith.constant dense<0.000000e+00> : vector<16x32xf32>
    %83 = tpu.matmul %82, %69, %cst_22 {dimension_numbers = #tpu.dot_dimension_numbers<[1], [0], [0], [1], [0, 0, 1, 1], [], []>} : vector<16x16xf32>, vector<16x32xf32>, vector<16x32xf32> -> vector<16x32xf32>
    %84 = arith.truncf %83 : vector<16x32xf32> to vector<16x32xbf16>
    %85 = vector.extract_strided_slice %43 {offsets = [32, 0], sizes = [32, 128], strides = [1, 1]} : vector<128x128xbf16> to vector<32x128xbf16>
    %cst_23 = arith.constant dense<0.000000e+00> : vector<16x128xf32>
    %86 = tpu.matmul %84, %85, %cst_23 {dimension_numbers = #tpu.dot_dimension_numbers<[1], [0], [0], [1], [0, 0, 1, 1], [], []>} : vector<16x32xbf16>, vector<32x128xbf16>, vector<16x128xf32> -> vector<16x128xf32>
    %87 = arith.addf %66, %86 : vector<16x128xf32>
    %88 = vector.extract_strided_slice %44 {offsets = [0, 64], sizes = [16, 32], strides = [1, 1]} : vector<16x128xf32> to vector<16x32xf32>
    %89 = vector.extract_strided_slice %45 {offsets = [0, 64], sizes = [16, 32], strides = [1, 1]} : vector<16x128xf32> to vector<16x32xf32>
    %90 = vector.extract_strided_slice %46 {offsets = [0, 64], sizes = [16, 32], strides = [1, 1]} : vector<16x128xf32> to vector<16x32xf32>
    %cst_24 = arith.constant dense<0.000000e+00> : vector<16x16xf32>
    %91 = tpu.matmul %88, %89, %cst_24 {dimension_numbers = #tpu.dot_dimension_numbers<[1], [1], [0], [0], [0, 0, 1, 0], [], []>} : vector<16x32xf32>, vector<16x32xf32>, vector<16x16xf32> -> vector<16x16xf32>
    %cst_25 = arith.constant 0.176776692 : f32
    %92 = vector.broadcast %cst_25 : f32 to vector<16x16xf32>
    %93 = arith.mulf %91, %92 : vector<16x16xf32>
    %cst_26 = arith.constant dense<0xFF800000> : vector<16xf32>
    %94 = vector.multi_reduction <maximumf>, %93, %cst_26 [1] : vector<16x16xf32> to vector<16xf32>
    %95 = vector.shape_cast %94 : vector<16xf32> to vector<16x1xf32>
    %96 = vector.broadcast %95 : vector<16x1xf32> to vector<16x16xf32>
    %97 = arith.subf %93, %96 : vector<16x16xf32>
    %98 = math.exp %97 : vector<16x16xf32>
    %cst_27 = arith.constant dense<0.000000e+00> : vector<16xf32>
    %99 = vector.multi_reduction <add>, %98, %cst_27 [1] : vector<16x16xf32> to vector<16xf32>
    %100 = vector.shape_cast %99 : vector<16xf32> to vector<16x1xf32>
    %101 = tpu.reciprocal %100 {approx = true} : vector<16x1xf32> -> vector<16x1xf32>
    %102 = vector.broadcast %101 : vector<16x1xf32> to vector<16x16xf32>
    %103 = arith.mulf %98, %102 : vector<16x16xf32>
    %cst_28 = arith.constant dense<0.000000e+00> : vector<16x32xf32>
    %104 = tpu.matmul %103, %90, %cst_28 {dimension_numbers = #tpu.dot_dimension_numbers<[1], [0], [0], [1], [0, 0, 1, 1], [], []>} : vector<16x16xf32>, vector<16x32xf32>, vector<16x32xf32> -> vector<16x32xf32>
    %105 = arith.truncf %104 : vector<16x32xf32> to vector<16x32xbf16>
    %106 = vector.extract_strided_slice %43 {offsets = [64, 0], sizes = [32, 128], strides = [1, 1]} : vector<128x128xbf16> to vector<32x128xbf16>
    %cst_29 = arith.constant dense<0.000000e+00> : vector<16x128xf32>
    %107 = tpu.matmul %105, %106, %cst_29 {dimension_numbers = #tpu.dot_dimension_numbers<[1], [0], [0], [1], [0, 0, 1, 1], [], []>} : vector<16x32xbf16>, vector<32x128xbf16>, vector<16x128xf32> -> vector<16x128xf32>
    %108 = arith.addf %87, %107 : vector<16x128xf32>
    %109 = vector.extract_strided_slice %44 {offsets = [0, 96], sizes = [16, 32], strides = [1, 1]} : vector<16x128xf32> to vector<16x32xf32>
    %110 = vector.extract_strided_slice %45 {offsets = [0, 96], sizes = [16, 32], strides = [1, 1]} : vector<16x128xf32> to vector<16x32xf32>
    %111 = vector.extract_strided_slice %46 {offsets = [0, 96], sizes = [16, 32], strides = [1, 1]} : vector<16x128xf32> to vector<16x32xf32>
    %cst_30 = arith.constant dense<0.000000e+00> : vector<16x16xf32>
    %112 = tpu.matmul %109, %110, %cst_30 {dimension_numbers = #tpu.dot_dimension_numbers<[1], [1], [0], [0], [0, 0, 1, 0], [], []>} : vector<16x32xf32>, vector<16x32xf32>, vector<16x16xf32> -> vector<16x16xf32>
    %cst_31 = arith.constant 0.176776692 : f32
    %113 = vector.broadcast %cst_31 : f32 to vector<16x16xf32>
    %114 = arith.mulf %112, %113 : vector<16x16xf32>
    %cst_32 = arith.constant dense<0xFF800000> : vector<16xf32>
    %115 = vector.multi_reduction <maximumf>, %114, %cst_32 [1] : vector<16x16xf32> to vector<16xf32>
    %116 = vector.shape_cast %115 : vector<16xf32> to vector<16x1xf32>
    %117 = vector.broadcast %116 : vector<16x1xf32> to vector<16x16xf32>
    %118 = arith.subf %114, %117 : vector<16x16xf32>
    %119 = math.exp %118 : vector<16x16xf32>
    %cst_33 = arith.constant dense<0.000000e+00> : vector<16xf32>
    %120 = vector.multi_reduction <add>, %119, %cst_33 [1] : vector<16x16xf32> to vector<16xf32>
    %121 = vector.shape_cast %120 : vector<16xf32> to vector<16x1xf32>
    %122 = tpu.reciprocal %121 {approx = true} : vector<16x1xf32> -> vector<16x1xf32>
    %123 = vector.broadcast %122 : vector<16x1xf32> to vector<16x16xf32>
    %124 = arith.mulf %119, %123 : vector<16x16xf32>
    %cst_34 = arith.constant dense<0.000000e+00> : vector<16x32xf32>
    %125 = tpu.matmul %124, %111, %cst_34 {dimension_numbers = #tpu.dot_dimension_numbers<[1], [0], [0], [1], [0, 0, 1, 1], [], []>} : vector<16x16xf32>, vector<16x32xf32>, vector<16x32xf32> -> vector<16x32xf32>
    %126 = arith.truncf %125 : vector<16x32xf32> to vector<16x32xbf16>
    %127 = vector.extract_strided_slice %43 {offsets = [96, 0], sizes = [32, 128], strides = [1, 1]} : vector<128x128xbf16> to vector<32x128xbf16>
    %cst_35 = arith.constant dense<0.000000e+00> : vector<16x128xf32>
    %128 = tpu.matmul %126, %127, %cst_35 {dimension_numbers = #tpu.dot_dimension_numbers<[1], [0], [0], [1], [0, 0, 1, 1], [], []>} : vector<16x32xbf16>, vector<32x128xbf16>, vector<16x128xf32> -> vector<16x128xf32>
    %129 = arith.addf %108, %128 : vector<16x128xf32>
    %130 = vector.extract_strided_slice %36 {offsets = [16, 0], sizes = [16, 128], strides = [1, 1]} : vector<32x128xf32> to vector<16x128xf32>
    %131 = vector.extract_strided_slice %39 {offsets = [16, 0], sizes = [16, 128], strides = [1, 1]} : vector<32x128xf32> to vector<16x128xf32>
    %132 = vector.extract_strided_slice %42 {offsets = [16, 0], sizes = [16, 128], strides = [1, 1]} : vector<32x128xf32> to vector<16x128xf32>
    %133 = vector.extract_strided_slice %130 {offsets = [0, 0], sizes = [16, 32], strides = [1, 1]} : vector<16x128xf32> to vector<16x32xf32>
    %134 = vector.extract_strided_slice %131 {offsets = [0, 0], sizes = [16, 32], strides = [1, 1]} : vector<16x128xf32> to vector<16x32xf32>
    %135 = vector.extract_strided_slice %132 {offsets = [0, 0], sizes = [16, 32], strides = [1, 1]} : vector<16x128xf32> to vector<16x32xf32>
    %cst_36 = arith.constant dense<0.000000e+00> : vector<16x16xf32>
    %136 = tpu.matmul %133, %134, %cst_36 {dimension_numbers = #tpu.dot_dimension_numbers<[1], [1], [0], [0], [0, 0, 1, 0], [], []>} : vector<16x32xf32>, vector<16x32xf32>, vector<16x16xf32> -> vector<16x16xf32>
    %cst_37 = arith.constant 0.176776692 : f32
    %137 = vector.broadcast %cst_37 : f32 to vector<16x16xf32>
    %138 = arith.mulf %136, %137 : vector<16x16xf32>
    %cst_38 = arith.constant dense<0xFF800000> : vector<16xf32>
    %139 = vector.multi_reduction <maximumf>, %138, %cst_38 [1] : vector<16x16xf32> to vector<16xf32>
    %140 = vector.shape_cast %139 : vector<16xf32> to vector<16x1xf32>
    %141 = vector.broadcast %140 : vector<16x1xf32> to vector<16x16xf32>
    %142 = arith.subf %138, %141 : vector<16x16xf32>
    %143 = math.exp %142 : vector<16x16xf32>
    %cst_39 = arith.constant dense<0.000000e+00> : vector<16xf32>
    %144 = vector.multi_reduction <add>, %143, %cst_39 [1] : vector<16x16xf32> to vector<16xf32>
    %145 = vector.shape_cast %144 : vector<16xf32> to vector<16x1xf32>
    %146 = tpu.reciprocal %145 {approx = true} : vector<16x1xf32> -> vector<16x1xf32>
    %147 = vector.broadcast %146 : vector<16x1xf32> to vector<16x16xf32>
    %148 = arith.mulf %143, %147 : vector<16x16xf32>
    %cst_40 = arith.constant dense<0.000000e+00> : vector<16x32xf32>
    %149 = tpu.matmul %148, %135, %cst_40 {dimension_numbers = #tpu.dot_dimension_numbers<[1], [0], [0], [1], [0, 0, 1, 1], [], []>} : vector<16x16xf32>, vector<16x32xf32>, vector<16x32xf32> -> vector<16x32xf32>
    %150 = arith.truncf %149 : vector<16x32xf32> to vector<16x32xbf16>
    %151 = vector.extract_strided_slice %43 {offsets = [0, 0], sizes = [32, 128], strides = [1, 1]} : vector<128x128xbf16> to vector<32x128xbf16>
    %cst_41 = arith.constant dense<0.000000e+00> : vector<16x128xf32>
    %152 = tpu.matmul %150, %151, %cst_41 {dimension_numbers = #tpu.dot_dimension_numbers<[1], [0], [0], [1], [0, 0, 1, 1], [], []>} : vector<16x32xbf16>, vector<32x128xbf16>, vector<16x128xf32> -> vector<16x128xf32>
    %153 = vector.extract_strided_slice %130 {offsets = [0, 32], sizes = [16, 32], strides = [1, 1]} : vector<16x128xf32> to vector<16x32xf32>
    %154 = vector.extract_strided_slice %131 {offsets = [0, 32], sizes = [16, 32], strides = [1, 1]} : vector<16x128xf32> to vector<16x32xf32>
    %155 = vector.extract_strided_slice %132 {offsets = [0, 32], sizes = [16, 32], strides = [1, 1]} : vector<16x128xf32> to vector<16x32xf32>
    %cst_42 = arith.constant dense<0.000000e+00> : vector<16x16xf32>
    %156 = tpu.matmul %153, %154, %cst_42 {dimension_numbers = #tpu.dot_dimension_numbers<[1], [1], [0], [0], [0, 0, 1, 0], [], []>} : vector<16x32xf32>, vector<16x32xf32>, vector<16x16xf32> -> vector<16x16xf32>
    %cst_43 = arith.constant 0.176776692 : f32
    %157 = vector.broadcast %cst_43 : f32 to vector<16x16xf32>
    %158 = arith.mulf %156, %157 : vector<16x16xf32>
    %cst_44 = arith.constant dense<0xFF800000> : vector<16xf32>
    %159 = vector.multi_reduction <maximumf>, %158, %cst_44 [1] : vector<16x16xf32> to vector<16xf32>
    %160 = vector.shape_cast %159 : vector<16xf32> to vector<16x1xf32>
    %161 = vector.broadcast %160 : vector<16x1xf32> to vector<16x16xf32>
    %162 = arith.subf %158, %161 : vector<16x16xf32>
    %163 = math.exp %162 : vector<16x16xf32>
    %cst_45 = arith.constant dense<0.000000e+00> : vector<16xf32>
    %164 = vector.multi_reduction <add>, %163, %cst_45 [1] : vector<16x16xf32> to vector<16xf32>
    %165 = vector.shape_cast %164 : vector<16xf32> to vector<16x1xf32>
    %166 = tpu.reciprocal %165 {approx = true} : vector<16x1xf32> -> vector<16x1xf32>
    %167 = vector.broadcast %166 : vector<16x1xf32> to vector<16x16xf32>
    %168 = arith.mulf %163, %167 : vector<16x16xf32>
    %cst_46 = arith.constant dense<0.000000e+00> : vector<16x32xf32>
    %169 = tpu.matmul %168, %155, %cst_46 {dimension_numbers = #tpu.dot_dimension_numbers<[1], [0], [0], [1], [0, 0, 1, 1], [], []>} : vector<16x16xf32>, vector<16x32xf32>, vector<16x32xf32> -> vector<16x32xf32>
    %170 = arith.truncf %169 : vector<16x32xf32> to vector<16x32xbf16>
    %171 = vector.extract_strided_slice %43 {offsets = [32, 0], sizes = [32, 128], strides = [1, 1]} : vector<128x128xbf16> to vector<32x128xbf16>
    %cst_47 = arith.constant dense<0.000000e+00> : vector<16x128xf32>
    %172 = tpu.matmul %170, %171, %cst_47 {dimension_numbers = #tpu.dot_dimension_numbers<[1], [0], [0], [1], [0, 0, 1, 1], [], []>} : vector<16x32xbf16>, vector<32x128xbf16>, vector<16x128xf32> -> vector<16x128xf32>
    %173 = arith.addf %152, %172 : vector<16x128xf32>
    %174 = vector.extract_strided_slice %130 {offsets = [0, 64], sizes = [16, 32], strides = [1, 1]} : vector<16x128xf32> to vector<16x32xf32>
    %175 = vector.extract_strided_slice %131 {offsets = [0, 64], sizes = [16, 32], strides = [1, 1]} : vector<16x128xf32> to vector<16x32xf32>
    %176 = vector.extract_strided_slice %132 {offsets = [0, 64], sizes = [16, 32], strides = [1, 1]} : vector<16x128xf32> to vector<16x32xf32>
    %cst_48 = arith.constant dense<0.000000e+00> : vector<16x16xf32>
    %177 = tpu.matmul %174, %175, %cst_48 {dimension_numbers = #tpu.dot_dimension_numbers<[1], [1], [0], [0], [0, 0, 1, 0], [], []>} : vector<16x32xf32>, vector<16x32xf32>, vector<16x16xf32> -> vector<16x16xf32>
    %cst_49 = arith.constant 0.176776692 : f32
    %178 = vector.broadcast %cst_49 : f32 to vector<16x16xf32>
    %179 = arith.mulf %177, %178 : vector<16x16xf32>
    %cst_50 = arith.constant dense<0xFF800000> : vector<16xf32>
    %180 = vector.multi_reduction <maximumf>, %179, %cst_50 [1] : vector<16x16xf32> to vector<16xf32>
    %181 = vector.shape_cast %180 : vector<16xf32> to vector<16x1xf32>
    %182 = vector.broadcast %181 : vector<16x1xf32> to vector<16x16xf32>
    %183 = arith.subf %179, %182 : vector<16x16xf32>
    %184 = math.exp %183 : vector<16x16xf32>
    %cst_51 = arith.constant dense<0.000000e+00> : vector<16xf32>
    %185 = vector.multi_reduction <add>, %184, %cst_51 [1] : vector<16x16xf32> to vector<16xf32>
    %186 = vector.shape_cast %185 : vector<16xf32> to vector<16x1xf32>
    %187 = tpu.reciprocal %186 {approx = true} : vector<16x1xf32> -> vector<16x1xf32>
    %188 = vector.broadcast %187 : vector<16x1xf32> to vector<16x16xf32>
    %189 = arith.mulf %184, %188 : vector<16x16xf32>
    %cst_52 = arith.constant dense<0.000000e+00> : vector<16x32xf32>
    %190 = tpu.matmul %189, %176, %cst_52 {dimension_numbers = #tpu.dot_dimension_numbers<[1], [0], [0], [1], [0, 0, 1, 1], [], []>} : vector<16x16xf32>, vector<16x32xf32>, vector<16x32xf32> -> vector<16x32xf32>
    %191 = arith.truncf %190 : vector<16x32xf32> to vector<16x32xbf16>
    %192 = vector.extract_strided_slice %43 {offsets = [64, 0], sizes = [32, 128], strides = [1, 1]} : vector<128x128xbf16> to vector<32x128xbf16>
    %cst_53 = arith.constant dense<0.000000e+00> : vector<16x128xf32>
    %193 = tpu.matmul %191, %192, %cst_53 {dimension_numbers = #tpu.dot_dimension_numbers<[1], [0], [0], [1], [0, 0, 1, 1], [], []>} : vector<16x32xbf16>, vector<32x128xbf16>, vector<16x128xf32> -> vector<16x128xf32>
    %194 = arith.addf %173, %193 : vector<16x128xf32>
    %195 = vector.extract_strided_slice %130 {offsets = [0, 96], sizes = [16, 32], strides = [1, 1]} : vector<16x128xf32> to vector<16x32xf32>
    %196 = vector.extract_strided_slice %131 {offsets = [0, 96], sizes = [16, 32], strides = [1, 1]} : vector<16x128xf32> to vector<16x32xf32>
    %197 = vector.extract_strided_slice %132 {offsets = [0, 96], sizes = [16, 32], strides = [1, 1]} : vector<16x128xf32> to vector<16x32xf32>
    %cst_54 = arith.constant dense<0.000000e+00> : vector<16x16xf32>
    %198 = tpu.matmul %195, %196, %cst_54 {dimension_numbers = #tpu.dot_dimension_numbers<[1], [1], [0], [0], [0, 0, 1, 0], [], []>} : vector<16x32xf32>, vector<16x32xf32>, vector<16x16xf32> -> vector<16x16xf32>
    %cst_55 = arith.constant 0.176776692 : f32
    %199 = vector.broadcast %cst_55 : f32 to vector<16x16xf32>
    %200 = arith.mulf %198, %199 : vector<16x16xf32>
    %cst_56 = arith.constant dense<0xFF800000> : vector<16xf32>
    %201 = vector.multi_reduction <maximumf>, %200, %cst_56 [1] : vector<16x16xf32> to vector<16xf32>
    %202 = vector.shape_cast %201 : vector<16xf32> to vector<16x1xf32>
    %203 = vector.broadcast %202 : vector<16x1xf32> to vector<16x16xf32>
    %204 = arith.subf %200, %203 : vector<16x16xf32>
    %205 = math.exp %204 : vector<16x16xf32>
    %cst_57 = arith.constant dense<0.000000e+00> : vector<16xf32>
    %206 = vector.multi_reduction <add>, %205, %cst_57 [1] : vector<16x16xf32> to vector<16xf32>
    %207 = vector.shape_cast %206 : vector<16xf32> to vector<16x1xf32>
    %208 = tpu.reciprocal %207 {approx = true} : vector<16x1xf32> -> vector<16x1xf32>
    %209 = vector.broadcast %208 : vector<16x1xf32> to vector<16x16xf32>
    %210 = arith.mulf %205, %209 : vector<16x16xf32>
    %cst_58 = arith.constant dense<0.000000e+00> : vector<16x32xf32>
    %211 = tpu.matmul %210, %197, %cst_58 {dimension_numbers = #tpu.dot_dimension_numbers<[1], [0], [0], [1], [0, 0, 1, 1], [], []>} : vector<16x16xf32>, vector<16x32xf32>, vector<16x32xf32> -> vector<16x32xf32>
    %212 = arith.truncf %211 : vector<16x32xf32> to vector<16x32xbf16>
    %213 = vector.extract_strided_slice %43 {offsets = [96, 0], sizes = [32, 128], strides = [1, 1]} : vector<128x128xbf16> to vector<32x128xbf16>
    %cst_59 = arith.constant dense<0.000000e+00> : vector<16x128xf32>
    %214 = tpu.matmul %212, %213, %cst_59 {dimension_numbers = #tpu.dot_dimension_numbers<[1], [0], [0], [1], [0, 0, 1, 1], [], []>} : vector<16x32xbf16>, vector<32x128xbf16>, vector<16x128xf32> -> vector<16x128xf32>
    %215 = arith.addf %194, %214 : vector<16x128xf32>
    %216 = tpu.concatenate %129, %215 in 0 : vector<16x128xf32>, vector<16x128xf32> -> vector<32x128xf32>
    %217 = vector.broadcast %6 : vector<1x128xf32> to vector<32x128xf32>
    %218 = arith.addf %216, %217 : vector<32x128xf32>
    %219 = arith.addf %0, %218 : vector<32x128xf32>
    %cst_60 = arith.constant dense<0.000000e+00> : vector<32xf32>
    %220 = vector.multi_reduction <add>, %219, %cst_60 [1] : vector<32x128xf32> to vector<32xf32>
    %221 = vector.shape_cast %220 : vector<32xf32> to vector<32x1xf32>
    %cst_61 = arith.constant 1.280000e+02 : f32
    %222 = vector.broadcast %cst_61 : f32 to vector<32x1xf32>
    %223 = arith.divf %221, %222 : vector<32x1xf32>
    %224 = vector.broadcast %223 : vector<32x1xf32> to vector<32x128xf32>
    %225 = arith.subf %219, %224 : vector<32x128xf32>
    %226 = arith.mulf %225, %225 : vector<32x128xf32>
    %cst_62 = arith.constant dense<0.000000e+00> : vector<32xf32>
    %227 = vector.multi_reduction <add>, %226, %cst_62 [1] : vector<32x128xf32> to vector<32xf32>
    %228 = vector.shape_cast %227 : vector<32xf32> to vector<32x1xf32>
    %cst_63 = arith.constant 1.280000e+02 : f32
    %229 = vector.broadcast %cst_63 : f32 to vector<32x1xf32>
    %230 = arith.divf %228, %229 : vector<32x1xf32>
    %cst_64 = arith.constant 9.99999997E-7 : f32
    %231 = vector.broadcast %cst_64 : f32 to vector<32x1xf32>
    %232 = arith.addf %230, %231 : vector<32x1xf32>
    %233 = math.rsqrt %232 : vector<32x1xf32>
    %234 = vector.broadcast %233 : vector<32x1xf32> to vector<32x128xf32>
    %235 = arith.mulf %225, %234 : vector<32x128xf32>
    %236 = vector.broadcast %4 : vector<1x128xf32> to vector<32x128xf32>
    %237 = arith.mulf %235, %236 : vector<32x128xf32>
    %238 = vector.broadcast %5 : vector<1x128xf32> to vector<32x128xf32>
    %239 = arith.addf %237, %238 : vector<32x128xf32>
    %240 = arith.truncf %239 : vector<32x128xf32> to vector<32x128xbf16>
    %c0_65 = arith.constant 0 : index
    %c0_66 = arith.constant 0 : index
    %241 = vector.load %arg6[%c0_65, %c0_66] : memref<128x512xbf16, #tpu.memory_space<vmem>>, vector<128x512xbf16>
    %cst_67 = arith.constant dense<0.000000e+00> : vector<32x512xf32>
    %242 = tpu.matmul %240, %241, %cst_67 {dimension_numbers = #tpu.dot_dimension_numbers<[1], [0], [0], [1], [0, 0, 1, 1], [], []>} : vector<32x128xbf16>, vector<128x512xbf16>, vector<32x512xf32> -> vector<32x512xf32>
    %c0_68 = arith.constant 0 : index
    %c0_69 = arith.constant 0 : index
    %243 = vector.load %arg3[%c0_68, %c0_69] : memref<1x512xf32, #tpu.memory_space<vmem>>, vector<1x512xf32>
    %244 = vector.broadcast %243 : vector<1x512xf32> to vector<32x512xf32>
    %245 = arith.addf %242, %244 : vector<32x512xf32>
    %cst_70 = arith.constant 5.000000e-01 : f32
    %246 = vector.broadcast %cst_70 : f32 to vector<32x512xf32>
    %247 = arith.mulf %246, %245 : vector<32x512xf32>
    %cst_71 = arith.constant 4.471500e-02 : f32
    %248 = vector.broadcast %cst_71 : f32 to vector<32x512xf32>
    %249 = arith.mulf %248, %245 : vector<32x512xf32>
    %250 = arith.mulf %249, %245 : vector<32x512xf32>
    %251 = arith.mulf %250, %245 : vector<32x512xf32>
    %252 = arith.addf %245, %251 : vector<32x512xf32>
    %cst_72 = arith.constant 0.797884583 : f32
    %253 = vector.broadcast %cst_72 : f32 to vector<32x512xf32>
    %254 = arith.mulf %253, %252 : vector<32x512xf32>
    %255 = math.tanh %254 : vector<32x512xf32>
    %cst_73 = arith.constant 1.000000e+00 : f32
    %256 = vector.broadcast %cst_73 : f32 to vector<32x512xf32>
    %257 = arith.addf %256, %255 : vector<32x512xf32>
    %258 = arith.mulf %247, %257 : vector<32x512xf32>
    %259 = arith.truncf %258 : vector<32x512xf32> to vector<32x512xbf16>
    %c0_74 = arith.constant 0 : index
    %c0_75 = arith.constant 0 : index
    %260 = vector.load %arg7[%c0_74, %c0_75] : memref<512x128xbf16, #tpu.memory_space<vmem>>, vector<512x128xbf16>
    %cst_76 = arith.constant dense<0.000000e+00> : vector<32x128xf32>
    %261 = tpu.matmul %259, %260, %cst_76 {dimension_numbers = #tpu.dot_dimension_numbers<[1], [0], [0], [1], [0, 0, 1, 1], [], []>} : vector<32x512xbf16>, vector<512x128xbf16>, vector<32x128xf32> -> vector<32x128xf32>
    %262 = vector.broadcast %7 : vector<1x128xf32> to vector<32x128xf32>
    %263 = arith.addf %261, %262 : vector<32x128xf32>
    %264 = arith.addf %219, %263 : vector<32x128xf32>
    %c0_77 = arith.constant 0 : index
    %c0_78 = arith.constant 0 : index
    %265 = vector.load %arg8[%c0_77, %c0_78] : memref<32x128xf32, #tpu.memory_space<vmem>>, vector<32x128xf32>
    tpu.vector_store %arg8[%c0_77, %c0_78], %264 {strides = array<i32>} : memref<32x128xf32, #tpu.memory_space<vmem>>, vector<32x128xf32>,
    return
  }
  func.func @transform_0(%arg0: i32) -> (i32, i32) {
    %c0_i32 = arith.constant 0 : i32
    %c0_i32_0 = arith.constant 0 : i32
    %c0_i32_1 = arith.constant 0 : i32
    return %c0_i32, %c0_i32_0 : i32, i32
  }
  func.func @transform_1(%arg0: i32) -> (i32, i32) {
    %c0_i32 = arith.constant 0 : i32
    %c0_i32_0 = arith.constant 0 : i32
    %c0_i32_1 = arith.constant 0 : i32
    return %c0_i32, %c0_i32_0 : i32, i32
  }
  func.func @transform_2(%arg0: i32) -> (i32, i32) {
    %c0_i32 = arith.constant 0 : i32
    %c0_i32_0 = arith.constant 0 : i32
    %c0_i32_1 = arith.constant 0 : i32
    return %c0_i32, %c0_i32_0 : i32, i32
  }
  func.func @transform_3(%arg0: i32) -> (i32, i32) {
    %c0_i32 = arith.constant 0 : i32
    %c0_i32_0 = arith.constant 0 : i32
    %c0_i32_1 = arith.constant 0 : i32
    return %c0_i32, %c0_i32_0 : i32, i32
  }
  func.func @transform_4(%arg0: i32) -> (i32, i32) {
    %c0_i32 = arith.constant 0 : i32
    %c0_i32_0 = arith.constant 0 : i32
    %c0_i32_1 = arith.constant 0 : i32
    return %c0_i32, %c0_i32_0 : i32, i32
  }
  func.func @transform_5(%arg0: i32) -> (i32, i32) {
    %c0_i32 = arith.constant 0 : i32
    %c0_i32_0 = arith.constant 0 : i32
    %c0_i32_1 = arith.constant 0 : i32
    return %c0_i32, %c0_i32_0 : i32, i32
  }
  func.func @transform_6(%arg0: i32) -> (i32, i32) {
    %c0_i32 = arith.constant 0 : i32
    %c0_i32_0 = arith.constant 0 : i32
    %c0_i32_1 = arith.constant 0 : i32
    return %c0_i32, %c0_i32_0 : i32, i32
  }
  func.func @transform_7(%arg0: i32) -> (i32, i32) {
    %c0_i32 = arith.constant 0 : i32
    %c0_i32_0 = arith.constant 0 : i32
    %c0_i32_1 = arith.constant 0 : i32
    return %c0_i32, %c0_i32_0 : i32, i32
  }
}

</mosaic_0001>

<llo_original>
// kernel: block_forward.1
$region0: #{block_forward.1}
  #allocation0 [shape = 'u32[]', space=smem, size = 0x4, offset = 0x4, fixed_abs, tag = 'smem constant byte address 0x4 - core index']
  #allocation1 [shape = 'u32[144,128]{1,0:T(1,128)}', space=vmem, size = 0x12000, scoped, tag = 'internal scratch']
  %s0 = inlined_call_operand.vmem [shape: f32[32,128], index: 0, kind: input, shape index: {}]
  %s1 = inlined_call_operand.vmem [shape: f32[9,128], index: 1, kind: input, shape index: {}]
  %s2 = inlined_call_operand.vmem [shape: f32[1,512], index: 2, kind: input, shape index: {}]
  %s3 = inlined_call_operand.hbm [shape: bf16[128,384], index: 3, kind: input, shape index: {}]
  %s4 = inlined_call_operand.hbm [shape: bf16[128,128], index: 4, kind: input, shape index: {}]
  %s5 = inlined_call_operand.hbm [shape: bf16[128,512], index: 5, kind: input, shape index: {}]
  %s6 = inlined_call_operand.hbm [shape: bf16[512,128], index: 6, kind: input, shape index: {}]
  %s7 = inlined_call_operand.hbm [shape: f32[32,128], index: 7, kind: output, shape index: {}]
  %s8 = sld [smem:[#allocation0]]
  $region54: #{block_forward.1} parent=0
    _
  %s10 = ssub.s32 1, %s8
  %s11 = scalar_select 0, %s10, %s8
  $region1: #{block_forward.1} parent=0
    #allocation2 [shape = 'u8[98304]{0}', space=vmem, size = 0x18000, scoped, tag = 'input window, operand 3, single buffered']
    #allocation3 [shape = 's32[1]{0}', space=sflag, size = 0x4, scoped, tag = 'scoped memory for block_forward.1']
    #allocation4 [shape = 's32[1]{0}', space=sflag, size = 0x4, scoped, tag = 'scoped memory for block_forward.1']
    #allocation5 [shape = 'u8[32768]{0}', space=vmem, size = 0x8000, scoped, tag = 'input window, operand 4, single buffered']
    #allocation6 [shape = 's32[1]{0}', space=sflag, size = 0x4, scoped, tag = 'scoped memory for block_forward.1']
    #allocation7 [shape = 'u8[131072]{0}', space=vmem, size = 0x20000, scoped, tag = 'input window, operand 5, single buffered']
    #allocation8 [shape = 'u8[131072]{0}', space=vmem, size = 0x20000, scoped, tag = 'input window, operand 6, single buffered']
    #allocation9 [shape = 's32[1]{0}', space=sflag, size = 0x4, scoped, tag = 'scoped memory for block_forward.1']
    #allocation10 [shape = 'u8[16384]{0}', space=vmem, size = 0x4000, scoped, tag = 'output window, operand 0, single buffered']
    %12 = vsyncpa [#allocation3], 0
    %13 = vsyncpa [#allocation6], 0
    %14 = vsyncpa [#allocation9], 0
    %15 = vsyncpa [#allocation4], 0
    // Predicated region
    $region2: #{block_forward.1} parent=1 // pred_check
      _
    $region3: #{block_forward.1} parent=1 // pred_check_branch
      %17 = sbr.rel (0) target = $region5
    $region4: #{block_forward.1} parent=1 // pred_region
      _
    $region5: #{block_forward.1} parent=1 // pred_fallthru
      _
    // Predicated region
    $region6: #{block_forward.1} parent=1 // pred_check
      _
    $region7: #{block_forward.1} parent=1 // pred_check_branch
      %19 = sbr.rel (0) target = $region9
    $region8: #{block_forward.1} parent=1 // pred_region
      _
    $region9: #{block_forward.1} parent=1 // pred_fallthru
      _
    // Predicated region
    $region10: #{block_forward.1} parent=1 // pred_check
      _
    $region11: #{block_forward.1} parent=1 // pred_check_branch
      %21 = sbr.rel (0) target = $region13
    $region12: #{block_forward.1} parent=1 // pred_region
      _
    $region13: #{block_forward.1} parent=1 // pred_fallthru
      _
    // Predicated region
    $region14: #{block_forward.1} parent=1 // pred_check
      _
    $region15: #{block_forward.1} parent=1 // pred_check_branch
      %23 = sbr.rel (0) target = $region17
    $region16: #{block_forward.1} parent=1 // pred_region
      %s25 = ssub.s32 3072, 3072
      %26 = vsyncadd [#allocation3], %s25
      %s27 = sshll.u32 [#allocation2], 4
      %s28 = int_to_ptr.vmem [resolvable:$true] %s27
      %33 = dma.hbm_to_vmem [thread:$0]  %s3, 3072, %s28, [#allocation3], 192, 192, 12
    $region17: #{block_forward.1} parent=1 // pred_fallthru
      _
    // Predicated region
    $region18: #{block_forward.1} parent=1 // pred_check
      _
    $region19: #{block_forward.1} parent=1 // pred_check_branch
      %35 = sbr.rel (0) target = $region21
    $region20: #{block_forward.1} parent=1 // pred_region
      %s37 = ssub.s32 1024, 1024
      %38 = vsyncadd [#allocation6], %s37
      %s39 = sshll.u32 [#allocation5], 4
      %s40 = int_to_ptr.vmem [resolvable:$true] %s39
      %45 = dma.hbm_to_vmem [thread:$0]  %s4, 1024, %s40, [#allocation6], 64, 64, 4
    $region21: #{block_forward.1} parent=1 // pred_fallthru
      _
    // Predicated region
    $region22: #{block_forward.1} parent=1 // pred_check
      _
    $region23: #{block_forward.1} parent=1 // pred_check_branch
      %47 = sbr.rel (0) target = $region25
    $region24: #{block_forward.1} parent=1 // pred_region
      %s49 = ssub.s32 4096, 4096
      %50 = vsyncadd [#allocation6], %s49
      %s51 = sshll.u32 [#allocation7], 4
      %s52 = int_to_ptr.vmem [resolvable:$true] %s51
      %57 = dma.hbm_to_vmem [thread:$0]  %s5, 4096, %s52, [#allocation6], 256, 256, 16
    $region25: #{block_forward.1} parent=1 // pred_fallthru
      _
    // Predicated region
    $region26: #{block_forward.1} parent=1 // pred_check
      _
    $region27: #{block_forward.1} parent=1 // pred_check_branch
      %59 = sbr.rel (0) target = $region29
    $region28: #{block_forward.1} parent=1 // pred_region
      %s61 = ssub.s32 4096, 4096
      %62 = vsyncadd [#allocation9], %s61
      %s63 = sshll.u32 [#allocation8], 4
      %s64 = int_to_ptr.vmem [resolvable:$true] %s63
      %69 = dma.hbm_to_vmem [thread:$0]  %s6, 4096, %s64, [#allocation9], 64, 64, 4
    $region29: #{block_forward.1} parent=1 // pred_fallthru
      _
    // Predicated region
    $region30: #{block_forward.1} parent=1 // pred_check
      _
    $region31: #{block_forward.1} parent=1 // pred_check_branch
      %71 = sbr.rel (0) target = $region33
    $region32: #{block_forward.1} parent=1 // pred_region
      %72 = dma.done [#allocation3], 3072
    $region33: #{block_forward.1} parent=1 // pred_fallthru
      _
    // Predicated region
    $region34: #{block_forward.1} parent=1 // pred_check
      _
    $region35: #{block_forward.1} parent=1 // pred_check_branch
      %74 = sbr.rel (0) target = $region37
    $region36: #{block_forward.1} parent=1 // pred_region
      %75 = dma.done [#allocation6], 1024
    $region37: #{block_forward.1} parent=1 // pred_fallthru
      _
    // Predicated region
    $region38: #{block_forward.1} parent=1 // pred_check
      _
    $region39: #{block_forward.1} parent=1 // pred_check_branch
      %77 = sbr.rel (0) target = $region41
    $region40: #{block_forward.1} parent=1 // pred_region
      %78 = dma.done [#allocation6], 4096
    $region41: #{block_forward.1} parent=1 // pred_fallthru
      _
    // Predicated region
    $region42: #{block_forward.1} parent=1 // pred_check
      _
    $region43: #{block_forward.1} parent=1 // pred_check_branch
      %80 = sbr.rel (0) target = $region45
    $region44: #{block_forward.1} parent=1 // pred_region
      %81 = dma.done [#allocation9], 4096
    $region45: #{block_forward.1} parent=1 // pred_fallthru
      _
    %v83 = vld [vmem:[%s0] sm:$0xff]
    %v84 = vld [vmem:[%s0 + $0x8] sm:$0xff]
    %v85 = vld [vmem:[%s0 + $0x10] sm:$0xff]
    %v86 = vld [vmem:[%s0 + $0x18] sm:$0xff]
    %v87 = vld [vmem:[%s1] sm:$0xff]
    %v88 = vld [vmem:[%s1 + $0x8] sm:$0x1]
    %89 = vadd.xlane.f32.xlu0 %v83
    %v90 = vpop.xlane.xlu0 %89
    %91 = vadd.xlane.f32.xlu0 %v84
    %v92 = vpop.xlane.xlu0 %91
    %93 = vadd.xlane.f32.xlu0 %v85
    %v94 = vpop.xlane.xlu0 %93
    %95 = vadd.xlane.f32.xlu0 %v86
    %v96 = vpop.xlane.xlu0 %95
    %v97 = vrcp.pop 128.0
    %v98 = vmul.f32 %v90, %v97
    %v99 = vmul.f32 %v92, %v97
    %v100 = vmul.f32 %v94, %v97
    %v101 = vmul.f32 %v96, %v97
    %v102 = vsub.f32 %v83, %v98
    %v103 = vsub.f32 %v84, %v99
    %v104 = vsub.f32 %v85, %v100
    %v105 = vsub.f32 %v86, %v101
    %v106 = vmul.f32 %v102, %v102
    %v107 = vmul.f32 %v103, %v103
    %v108 = vmul.f32 %v104, %v104
    %v109 = vmul.f32 %v105, %v105
    %110 = vadd.xlane.f32.xlu0 %v106
    %v111 = vpop.xlane.xlu0 %110
    %112 = vadd.xlane.f32.xlu0 %v107
    %v113 = vpop.xlane.xlu0 %112
    %114 = vadd.xlane.f32.xlu0 %v108
    %v115 = vpop.xlane.xlu0 %114
    %116 = vadd.xlane.f32.xlu0 %v109
    %v117 = vpop.xlane.xlu0 %116
    %v118 = vmul.f32 %v111, %v97
    %v119 = vmul.f32 %v113, %v97
    %v120 = vmul.f32 %v115, %v97
    %v121 = vmul.f32 %v117, %v97
    %v122 = vadd.f32 %v118, 1e-06
    %v123 = vadd.f32 %v119, 1e-06
    %v124 = vadd.f32 %v120, 1e-06
    %v125 = vadd.f32 %v121, 1e-06
    %v126 = vrsqrt.pop %v122
    %v127 = vrsqrt.pop %v123
    %v128 = vrsqrt.pop %v124
    %v129 = vrsqrt.pop %v125
    %v130 = vmul.f32 %v102, %v126
    %v131 = vmul.f32 %v103, %v127
    %v132 = vmul.f32 %v104, %v128
    %v133 = vmul.f32 %v105, %v129
    %v134 = vlaneseq
    %v135 = vshrl.u32 %v134, 7
    %v136 = vsub.s32 0, %v135
    %v137 = vrot.slane %v87, %v136
    %v138 = vmul.f32 %v130, %v137
    %v139 = vmul.f32 %v131, %v137
    %v140 = vmul.f32 %v132, %v137
    %v141 = vmul.f32 %v133, %v137
    %v142 = vlaneseq
    %v143 = vshrl.u32 %v142, 7
    %v144 = vsub.s32 1, %v143
    %v145 = vrot.slane %v87, %v144
    %v146 = vadd.f32 %v138, %v145
    %v147 = vadd.f32 %v139, %v145
    %v148 = vadd.f32 %v140, %v145
    %v149 = vadd.f32 %v141, %v145
    %v150 = vpack.c.bf16 %v147, %v146
    %v151 = vpack.c.bf16 %v149, %v148
    %v152 = vld [vmem:[#allocation2] sm:$0xff]
    %v153 = vld [vmem:[#allocation2 + $0x8] sm:$0xf]
    %v154 = vld [vmem:[#allocation2 + $0xc] sm:$0xff]
    %v155 = vld [vmem:[#allocation2 + $0x14] sm:$0xf]
    %v156 = vld [vmem:[#allocation2 + $0x18] sm:$0xff]
    %v157 = vld [vmem:[#allocation2 + $0x20] sm:$0xf]
    %v158 = vld [vmem:[#allocation2 + $0x24] sm:$0xff]
    %v159 = vld [vmem:[#allocation2 + $0x2c] sm:$0xf]
    %v160 = vld [vmem:[#allocation2 + $0x30] sm:$0xff]
    %v161 = vld [vmem:[#allocation2 + $0x38] sm:$0xf]
    %v162 = vld [vmem:[#allocation2 + $0x3c] sm:$0xff]
    %v163 = vld [vmem:[#allocation2 + $0x44] sm:$0xf]
    %v164 = vld [vmem:[#allocation2 + $0x48] sm:$0xff]
    %v165 = vld [vmem:[#allocation2 + $0x50] sm:$0xf]
    %v166 = vld [vmem:[#allocation2 + $0x54] sm:$0xff]
    %v167 = vld [vmem:[#allocation2 + $0x5c] sm:$0xf]
    %v168 = vld [vmem:[#allocation2 + $0x60] sm:$0xff]
    %v169 = vld [vmem:[#allocation2 + $0x68] sm:$0xf]
    %v170 = vld [vmem:[#allocation2 + $0x6c] sm:$0xff]
    %v171 = vld [vmem:[#allocation2 + $0x74] sm:$0xf]
    %v172 = vld [vmem:[#allocation2 + $0x78] sm:$0xff]
    %v173 = vld [vmem:[#allocation2 + $0x80] sm:$0xf]
    %v174 = vld [vmem:[#allocation2 + $0x84] sm:$0xff]
    %v175 = vld [vmem:[#allocation2 + $0x8c] sm:$0xf]
    %v176 = vld [vmem:[#allocation2 + $0x90] sm:$0xff]
    %v177 = vld [vmem:[#allocation2 + $0x98] sm:$0xf]
    %v178 = vld [vmem:[#allocation2 + $0x9c] sm:$0xff]
    %v179 = vld [vmem:[#allocation2 + $0xa4] sm:$0xf]
    %v180 = vld [vmem:[#allocation2 + $0xa8] sm:$0xff]
    %v181 = vld [vmem:[#allocation2 + $0xb0] sm:$0xf]
    %v182 = vld [vmem:[#allocation2 + $0xb4] sm:$0xff]
    %v183 = vld [vmem:[#allocation2 + $0xbc] sm:$0xf]
    %v216 = vunpack.c.l.b16 %v152
    %v217 = vunpack.c.h.b16 %v152
    %v218 = vunpack.c.l.b16 %v153
    %v219 = vunpack.c.l.b16 %v154
    %v220 = vunpack.c.h.b16 %v154
    %v221 = vunpack.c.l.b16 %v155
    %v222 = vunpack.c.l.b16 %v156
    %v223 = vunpack.c.h.b16 %v156
    %v224 = vunpack.c.l.b16 %v157
    %v225 = vunpack.c.l.b16 %v158
    %v226 = vunpack.c.h.b16 %v158
    %v227 = vunpack.c.l.b16 %v159
    %v228 = vunpack.c.l.b16 %v160
    %v229 = vunpack.c.h.b16 %v160
    %v230 = vunpack.c.l.b16 %v161
    %v231 = vunpack.c.l.b16 %v162
    %v232 = vunpack.c.h.b16 %v162
    %v233 = vunpack.c.l.b16 %v163
    %v234 = vunpack.c.l.b16 %v164
    %v235 = vunpack.c.h.b16 %v164
    %v236 = vunpack.c.l.b16 %v165
    %v237 = vunpack.c.l.b16 %v166
    %v238 = vunpack.c.h.b16 %v166
    %v239 = vunpack.c.l.b16 %v167
    %v240 = vunpack.c.l.b16 %v168
    %v241 = vunpack.c.h.b16 %v168
    %v242 = vunpack.c.l.b16 %v169
    %v243 = vunpack.c.l.b16 %v170
    %v244 = vunpack.c.h.b16 %v170
    %v245 = vunpack.c.l.b16 %v171
    %v246 = vunpack.c.l.b16 %v172
    %v247 = vunpack.c.h.b16 %v172
    %v248 = vunpack.c.l.b16 %v173
    %v249 = vunpack.c.l.b16 %v174
    %v250 = vunpack.c.h.b16 %v174
    %v251 = vunpack.c.l.b16 %v175
    %v252 = vunpack.c.l.b16 %v176
    %v253 = vunpack.c.h.b16 %v176
    %v254 = vunpack.c.l.b16 %v177
    %v255 = vunpack.c.l.b16 %v178
    %v256 = vunpack.c.h.b16 %v178
    %v257 = vunpack.c.l.b16 %v179
    %v258 = vunpack.c.l.b16 %v180
    %v259 = vunpack.c.h.b16 %v180
    %v260 = vunpack.c.l.b16 %v181
    %v261 = vunpack.c.l.b16 %v182
    %v262 = vunpack.c.h.b16 %v182
    %v263 = vunpack.c.l.b16 %v183
    %v264 = vpack.c.b16 %v219, %v216
    %v265 = vpack.c.b16 %v220, %v217
    %v266 = vpack.c.b16 %v221, %v218
    %v267 = vpack.c.b16 %v225, %v222
    %v268 = vpack.c.b16 %v226, %v223
    %v269 = vpack.c.b16 %v227, %v224
    %v270 = vpack.c.b16 %v231, %v228
    %v271 = vpack.c.b16 %v232, %v229
    %v272 = vpack.c.b16 %v233, %v230
    %v273 = vpack.c.b16 %v237, %v234
    %v274 = vpack.c.b16 %v238, %v235
    %v275 = vpack.c.b16 %v239, %v236
    %v276 = vpack.c.b16 %v243, %v240
    %v277 = vpack.c.b16 %v244, %v241
    %v278 = vpack.c.b16 %v245, %v242
    %v279 = vpack.c.b16 %v249, %v246
    %v280 = vpack.c.b16 %v250, %v247
    %v281 = vpack.c.b16 %v251, %v248
    %v282 = vpack.c.b16 %v255, %v252
    %v283 = vpack.c.b16 %v256, %v253
    %v284 = vpack.c.b16 %v257, %v254
    %v285 = vpack.c.b16 %v261, %v258
    %v286 = vpack.c.b16 %v262, %v259
    %v287 = vpack.c.b16 %v263, %v260
    %312 = vmatprep.subr.bf16.mxu0 %v286
    %313 = vmatpush1.bf16.msra.mxu0 %v285
    %314 = vmatprep.subr.bf16.mxu0 %v283
    %315 = vmatpush1.bf16.msra.mxu0 %v282
    %316 = vmatprep.subr.bf16.mxu0 %v280
    %317 = vmatpush1.bf16.msra.mxu0 %v279
    %318 = vmatprep.subr.bf16.mxu0 %v277
    %319 = vmatpush1.bf16.msra.mxu0 %v276
    %320 = vmatprep.subr.bf16.mxu0 %v274
    %321 = vmatpush1.bf16.msra.mxu0 %v273
    %322 = vmatprep.subr.bf16.mxu0 %v271
    %323 = vmatpush1.bf16.msra.mxu0 %v270
    %324 = vmatprep.subr.bf16.mxu0 %v268
    %325 = vmatpush1.bf16.msra.mxu0 %v267
    %326 = vmatprep.subr.bf16.mxu0 %v265
    %327 = vmatpush1.bf16.msra.mxu0 %v264
    %328 = vmatprep.subr.bf16.mxu0 0
    %329 = vmatpush2.bf16.msra.mxu0 0
    %330 = vmatprep.subr.bf16.mxu0 0
    %331 = vmatpush2.bf16.msra.mxu0 0
    %332 = vmatprep.subr.bf16.mxu0 0
    %333 = vmatpush2.bf16.msra.mxu0 0
    %334 = vmatprep.subr.bf16.mxu0 0
    %335 = vmatpush2.bf16.msra.mxu0 0
    %336 = vmatprep.subr.bf16.mxu0 0
    %337 = vmatpush2.bf16.msra.mxu0 0
    %338 = vmatprep.subr.bf16.mxu0 0
    %339 = vmatpush2.bf16.msra.mxu0 0
    %340 = vmatprep.subr.bf16.mxu0 0
    %341 = vmatpush2.bf16.msra.mxu0 0
    %342 = vmatprep.subr.bf16.mxu0 0
    %343 = vmatpush2.bf16.msra.mxu0 0
    %344 = vmatprep.mubr.bf16.mxu0 0
    %345 = vmatmul.mubr.bf16.gmra.mxu0 %v150
    %v346 = vpop.f32.mrf.mxu0
    %v347 = vadd.f32 0.0, %v346
    %v348 = vpop.f32.mrf.mxu0
    %v349 = vadd.f32 0.0, %v348
    %v350 = vpop.f32.mrf.mxu0
    %v351 = vadd.f32 0.0, %v350
    %v352 = vpop.f32.mrf.mxu0
    %v353 = vadd.f32 0.0, %v352
    %354 = vmatprep.mubr.bf16.mxu0 0
    %355 = vmatmul.mubr.bf16.gmra.mxu0 %v151
    %v356 = vpop.f32.mrf.mxu0
    %v357 = vadd.f32 0.0, %v356
    %v358 = vpop.f32.mrf.mxu0
    %v359 = vadd.f32 0.0, %v358
    %v360 = vpop.f32.mrf.mxu0
    %v361 = vadd.f32 0.0, %v360
    %v362 = vpop.f32.mrf.mxu0
    %v363 = vadd.f32 0.0, %v362
    %364 = vdwg.mxu0
    %365 = vmatprep.subr.bf16.mxu0 0
    %366 = vmatpush1.bf16.msra.mxu0 %v287
    %367 = vmatprep.subr.bf16.mxu0 0
    %368 = vmatpush1.bf16.msra.mxu0 %v284
    %369 = vmatprep.subr.bf16.mxu0 0
    %370 = vmatpush1.bf16.msra.mxu0 %v281
    %371 = vmatprep.subr.bf16.mxu0 0
    %372 = vmatpush1.bf16.msra.mxu0 %v278
    %373 = vmatprep.subr.bf16.mxu0 0
    %374 = vmatpush1.bf16.msra.mxu0 %v275
    %375 = vmatprep.subr.bf16.mxu0 0
    %376 = vmatpush1.bf16.msra.mxu0 %v272
    %377 = vmatprep.subr.bf16.mxu0 0
    %378 = vmatpush1.bf16.msra.mxu0 %v269
    %379 = vmatprep.subr.bf16.mxu0 0
    %380 = vmatpush1.bf16.msra.mxu0 %v266
    %381 = vmatprep.subr.bf16.mxu0 0
    %382 = vmatpush2.bf16.msra.mxu0 0
    %383 = vmatprep.subr.bf16.mxu0 0
    %384 = vmatpush2.bf16.msra.mxu0 0
    %385 = vmatprep.subr.bf16.mxu0 0
    %386 = vmatpush2.bf16.msra.mxu0 0
    %387 = vmatprep.subr.bf16.mxu0 0
    %388 = vmatpush2.bf16.msra.mxu0 0
    %389 = vmatprep.subr.bf16.mxu0 0
    %390 = vmatpush2.bf16.msra.mxu0 0
    %391 = vmatprep.subr.bf16.mxu0 0
    %392 = vmatpush2.bf16.msra.mxu0 0
    %393 = vmatprep.subr.bf16.mxu0 0
    %394 = vmatpush2.bf16.msra.mxu0 0
    %395 = vmatprep.subr.bf16.mxu0 0
    %396 = vmatpush2.bf16.msra.mxu0 0
    %397 = vmatprep.mubr.bf16.mxu0 0
    %398 = vmatmul.mubr.bf16.gmra.mxu0 %v150
    %v399 = vpop.f32.mrf.mxu0
    %v400 = vadd.f32 0.0, %v399
    %v401 = vpop.f32.mrf.mxu0
    %v402 = vpop.f32.mrf.mxu0
    %v403 = vadd.f32 0.0, %v402
    %v404 = vpop.f32.mrf.mxu0
    %405 = vmatprep.mubr.bf16.mxu0 0
    %406 = vmatmul.mubr.bf16.gmra.mxu0 %v151
    %v407 = vpop.f32.mrf.mxu0
    %v408 = vadd.f32 0.0, %v407
    %v409 = vpop.f32.mrf.mxu0
    %v410 = vpop.f32.mrf.mxu0
    %v411 = vadd.f32 0.0, %v410
    %v412 = vpop.f32.mrf.mxu0
    %413 = vdwg.mxu0
    %v414 = vlaneseq
    %v415 = vshrl.u32 %v414, 7
    %v416 = vsub.s32 6, %v415
    %v417 = vrot.slane %v87, %v416
    %v418 = vadd.f32 %v347, %v417
    %v419 = vadd.f32 %v351, %v417
    %v420 = vadd.f32 %v357, %v417
    %v421 = vadd.f32 %v361, %v417
    %v422 = vlaneseq
    %v423 = vshrl.u32 %v422, 7
    %v424 = vsub.s32 7, %v423
    %v425 = vrot.slane %v87, %v424
    %v426 = vadd.f32 %v349, %v425
    %v427 = vadd.f32 %v353, %v425
    %v428 = vadd.f32 %v359, %v425
    %v429 = vadd.f32 %v363, %v425
    %v430 = vlaneseq
    %v431 = vshrl.u32 %v430, 7
    %v432 = vsub.s32 0, %v431
    %v433 = vrot.slane %v88, %v432
    %v434 = vadd.f32 %v400, %v433
    %v435 = vadd.f32 %v403, %v433
    %v436 = vadd.f32 %v408, %v433
    %v437 = vadd.f32 %v411, %v433
    %v438 = vld [vmem:[#allocation5] sm:$0xf]
    %v439 = vld [vmem:[#allocation5 + $0x4] sm:$0xf]
    %v440 = vld [vmem:[#allocation5 + $0x8] sm:$0xf]
    %v441 = vld [vmem:[#allocation5 + $0xc] sm:$0xf]
    %v442 = vld [vmem:[#allocation5 + $0x10] sm:$0xf]
    %v443 = vld [vmem:[#allocation5 + $0x14] sm:$0xf]
    %v444 = vld [vmem:[#allocation5 + $0x18] sm:$0xf]
    %v445 = vld [vmem:[#allocation5 + $0x1c] sm:$0xf]
    %v446 = vld [vmem:[#allocation5 + $0x20] sm:$0xf]
    %v447 = vld [vmem:[#allocation5 + $0x24] sm:$0xf]
    %v448 = vld [vmem:[#allocation5 + $0x28] sm:$0xf]
    %v449 = vld [vmem:[#allocation5 + $0x2c] sm:$0xf]
    %v450 = vld [vmem:[#allocation5 + $0x30] sm:$0xf]
    %v451 = vld [vmem:[#allocation5 + $0x34] sm:$0xf]
    %v452 = vld [vmem:[#allocation5 + $0x38] sm:$0xf]
    %v453 = vld [vmem:[#allocation5 + $0x3c] sm:$0xf]
    %vm454 = vcmask 261120
    %v456 = vsel %vm454, %v418, 0
    %v459 = vsel %vm454, %v419, 0
    %v462 = vsel %vm454, %v426, 0
    %v465 = vsel %vm454, %v427, 0
    %467 = vmatprep.subr.mxu0 0.0
    %468 = vmatpush1.xpose.msra.mxu0 0.0
    %469 = vmatprep.subr.mxu0 0.0
    %470 = vmatpush1.xpose.msra.mxu0 0.0
    %471 = vmatprep.subr.mxu0 0.0
    %472 = vmatpush1.xpose.msra.mxu0 0.0
    %473 = vmatprep.subr.mxu0 0.0
    %474 = vmatpush1.xpose.msra.mxu0 0.0
    %475 = vmatprep.subr.mxu0 0.0
    %476 = vmatpush1.xpose.msra.mxu0 0.0
    %477 = vmatprep.subr.mxu0 0.0
    %478 = vmatpush1.xpose.msra.mxu0 0.0
    %479 = vmatprep.subr.mxu0 0.0
    %480 = vmatpush1.xpose.msra.mxu0 0.0
    %481 = vmatprep.subr.mxu0 0.0
    %482 = vmatpush1.xpose.msra.mxu0 0.0
    %483 = vmatprep.subr.mxu0 0.0
    %484 = vmatpush1.xpose.msra.mxu0 0.0
    %485 = vmatprep.subr.mxu0 0.0
    %486 = vmatpush1.xpose.msra.mxu0 0.0
    %487 = vmatprep.subr.mxu0 0.0
    %488 = vmatpush1.xpose.msra.mxu0 0.0
    %489 = vmatprep.subr.mxu0 0.0
    %490 = vmatpush1.xpose.msra.mxu0 0.0
    %491 = vmatprep.subr.mxu0 0.0
    %492 = vmatpush1.xpose.msra.mxu0 0.0
    %493 = vmatprep.subr.mxu0 0.0
    %494 = vmatpush1.xpose.msra.mxu0 0.0
    %495 = vmatprep.subr.mxu0 0.0
    %496 = vmatpush1.xpose.msra.mxu0 %v465
    %497 = vmatprep.subr.mxu0 0.0
    %498 = vmatpush1.xpose.msra.mxu0 %v462
    %499 = vmatprep.subr.mxu0 0.0
    %500 = vmatpush2.xpose.msra.mxu0 0.0
    %501 = vmatprep.subr.mxu0 0.0
    %502 = vmatpush2.xpose.msra.mxu0 0.0
    %503 = vmatprep.subr.mxu0 0.0
    %504 = vmatpush2.xpose.msra.mxu0 0.0
    %505 = vmatprep.subr.mxu0 0.0
    %506 = vmatpush2.xpose.msra.mxu0 0.0
    %507 = vmatprep.subr.mxu0 0.0
    %508 = vmatpush2.xpose.msra.mxu0 0.0
    %509 = vmatprep.subr.mxu0 0.0
    %510 = vmatpush2.xpose.msra.mxu0 0.0
    %511 = vmatprep.subr.mxu0 0.0
    %512 = vmatpush2.xpose.msra.mxu0 0.0
    %513 = vmatprep.subr.mxu0 0.0
    %514 = vmatpush2.xpose.msra.mxu0 0.0
    %515 = vmatprep.subr.mxu0 0.0
    %516 = vmatpush2.xpose.msra.mxu0 0.0
    %517 = vmatprep.subr.mxu0 0.0
    %518 = vmatpush2.xpose.msra.mxu0 0.0
    %519 = vmatprep.subr.mxu0 0.0
    %520 = vmatpush2.xpose.msra.mxu0 0.0
    %521 = vmatprep.subr.mxu0 0.0
    %522 = vmatpush2.xpose.msra.mxu0 0.0
    %523 = vmatprep.subr.mxu0 0.0
    %524 = vmatpush2.xpose.msra.mxu0 0.0
    %525 = vmatprep.subr.mxu0 0.0
    %526 = vmatpush2.xpose.msra.mxu0 0.0
    %527 = vmatprep.subr.mxu0 0.0
    %528 = vmatpush2.xpose.msra.mxu0 0.0
    %529 = vmatprep.subr.mxu0 0.0
    %530 = vmatpush2.xpose.msra.mxu0 0.0
    %531 = vmatprep.mubr.f32.mxu0 0.0
    %532 = vmatmul.mubr.f32.gmra.mxu0 %v456
    %v533 = vpop.f32.mrf.mxu0
    %v534 = vadd.f32 0.0, %v533
    %v535 = vpop.f32.mrf.mxu0
    %536 = vmatprep.mubr.f32.mxu0 0.0
    %537 = vmatmul.mubr.f32.gmra.mxu0 %v459
    %v538 = vpop.f32.mrf.mxu0
    %v539 = vadd.f32 0.0, %v538
    %v540 = vpop.f32.mrf.mxu0
    %541 = vdwg.mxu0
    %v542 = vmul.f32 %v534, 0.17677669
    %v543 = vmul.f32 %v539, 0.17677669
    %vm544 = vcmask 130048
    %v545 = vsel %vm544, %v542, -inf
    %546 = vmax.xlane.f32.xlu0 %v545
    %v547 = vpop.xlane.xlu0 %546
    %v548 = vsel %vm544, %v543, -inf
    %549 = vmax.xlane.f32.xlu0 %v548
    %v550 = vpop.xlane.xlu0 %549
    %v551 = vsub.f32 %v542, %v547
    %v552 = vsub.f32 %v543, %v550
    %v553 = vmul.f32 %v551, 1.442695
    %v554 = vpow.pop %v553
    %v555 = vmul.f32 %v552, 1.442695
    %v556 = vpow.pop %v555
    %v557 = vsel %vm544, %v554, 0.0
    %558 = vadd.xlane.f32.xlu0 %v557
    %v559 = vpop.xlane.xlu0 %558
    %v560 = vsel %vm544, %v556, 0.0
    %561 = vadd.xlane.f32.xlu0 %v560
    %v562 = vpop.xlane.xlu0 %561
    %v563 = vrcp.pop %v559
    %v564 = vrcp.pop %v562
    %v565 = vmul.f32 %v554, %v563
    %v566 = vmul.f32 %v556, %v564
    %v568 = vsel %vm544, %v565, 0
    %v571 = vsel %vm544, %v566, 0
    %573 = vmatprep.subr.mxu0 0.0
    %574 = vmatpush1.msra.mxu0 0.0
    %575 = vmatprep.subr.mxu0 0.0
    %576 = vmatpush1.msra.mxu0 0.0
    %577 = vmatprep.subr.mxu0 0.0
    %578 = vmatpush1.msra.mxu0 0.0
    %579 = vmatprep.subr.mxu0 0.0
    %580 = vmatpush1.msra.mxu0 0.0
    %581 = vmatprep.subr.mxu0 0.0
    %582 = vmatpush1.msra.mxu0 0.0
    %583 = vmatprep.subr.mxu0 0.0
    %584 = vmatpush1.msra.mxu0 0.0
    %585 = vmatprep.subr.mxu0 0.0
    %586 = vmatpush1.msra.mxu0 0.0
    %587 = vmatprep.subr.mxu0 0.0
    %588 = vmatpush1.msra.mxu0 0.0
    %589 = vmatprep.subr.mxu0 0.0
    %590 = vmatpush1.msra.mxu0 0.0
    %591 = vmatprep.subr.mxu0 0.0
    %592 = vmatpush1.msra.mxu0 0.0
    %593 = vmatprep.subr.mxu0 0.0
    %594 = vmatpush1.msra.mxu0 0.0
    %595 = vmatprep.subr.mxu0 0.0
    %596 = vmatpush1.msra.mxu0 0.0
    %597 = vmatprep.subr.mxu0 0.0
    %598 = vmatpush1.msra.mxu0 0.0
    %599 = vmatprep.subr.mxu0 0.0
    %600 = vmatpush1.msra.mxu0 0.0
    %601 = vmatprep.subr.mxu0 0.0
    %602 = vmatpush1.msra.mxu0 %v435
    %603 = vmatprep.subr.mxu0 0.0
    %604 = vmatpush1.msra.mxu0 %v434
    %605 = vmatprep.subr.mxu0 0.0
    %606 = vmatpush2.msra.mxu0 0.0
    %607 = vmatprep.subr.mxu0 0.0
    %608 = vmatpush2.msra.mxu0 0.0
    %609 = vmatprep.subr.mxu0 0.0
    %610 = vmatpush2.msra.mxu0 0.0
    %611 = vmatprep.subr.mxu0 0.0
    %612 = vmatpush2.msra.mxu0 0.0
    %613 = vmatprep.subr.mxu0 0.0
    %614 = vmatpush2.msra.mxu0 0.0
    %615 = vmatprep.subr.mxu0 0.0
    %616 = vmatpush2.msra.mxu0 0.0
    %617 = vmatprep.subr.mxu0 0.0
    %618 = vmatpush2.msra.mxu0 0.0
    %619 = vmatprep.subr.mxu0 0.0
    %620 = vmatpush2.msra.mxu0 0.0
    %621 = vmatprep.subr.mxu0 0.0
    %622 = vmatpush2.msra.mxu0 0.0
    %623 = vmatprep.subr.mxu0 0.0
    %624 = vmatpush2.msra.mxu0 0.0
    %625 = vmatprep.subr.mxu0 0.0
    %626 = vmatpush2.msra.mxu0 0.0
    %627 = vmatprep.subr.mxu0 0.0
    %628 = vmatpush2.msra.mxu0 0.0
    %629 = vmatprep.subr.mxu0 0.0
    %630 = vmatpush2.msra.mxu0 0.0
    %631 = vmatprep.subr.mxu0 0.0
    %632 = vmatpush2.msra.mxu0 0.0
    %633 = vmatprep.subr.mxu0 0.0
    %634 = vmatpush2.msra.mxu0 0.0
    %635 = vmatprep.subr.mxu0 0.0
    %636 = vmatpush2.msra.mxu0 0.0
    %637 = vmatprep.mubr.f32.mxu0 0.0
    %638 = vmatmul.mubr.f32.gmra.mxu0 %v568
    %v639 = vpop.f32.mrf.mxu0
    %v640 = vadd.f32 0.0, %v639
    %v641 = vpop.f32.mrf.mxu0
    %642 = vmatprep.mubr.f32.mxu0 0.0
    %643 = vmatmul.mubr.f32.gmra.mxu0 %v571
    %v644 = vpop.f32.mrf.mxu0
    %v645 = vadd.f32 0.0, %v644
    %v646 = vpop.f32.mrf.mxu0
    %647 = vdwg.mxu0
    %v648 = vpack.c.bf16 %v645, %v640
    %649 = vrot.lane.b32.xlu0 %v418, 96
    %v650 = vpop.permute.xlu0 %649
    %651 = vrot.lane.b32.xlu0 %v419, 96
    %v652 = vpop.permute.xlu0 %651
    %653 = vrot.lane.b32.xlu0 %v426, 96
    %v654 = vpop.permute.xlu0 %653
    %655 = vrot.lane.b32.xlu0 %v427, 96
    %v656 = vpop.permute.xlu0 %655
    %v657 = vsel %vm454, %v650, 0
    %v659 = vsel %vm454, %v652, 0
    %v661 = vsel %vm454, %v654, 0
    %v663 = vsel %vm454, %v656, 0
    %665 = vmatprep.subr.mxu0 0.0
    %666 = vmatpush1.xpose.msra.mxu0 0.0
    %667 = vmatprep.subr.mxu0 0.0
    %668 = vmatpush1.xpose.msra.mxu0 0.0
    %669 = vmatprep.subr.mxu0 0.0
    %670 = vmatpush1.xpose.msra.mxu0 0.0
    %671 = vmatprep.subr.mxu0 0.0
    %672 = vmatpush1.xpose.msra.mxu0 0.0
    %673 = vmatprep.subr.mxu0 0.0
    %674 = vmatpush1.xpose.msra.mxu0 0.0
    %675 = vmatprep.subr.mxu0 0.0
    %676 = vmatpush1.xpose.msra.mxu0 0.0
    %677 = vmatprep.subr.mxu0 0.0
    %678 = vmatpush1.xpose.msra.mxu0 0.0
    %679 = vmatprep.subr.mxu0 0.0
    %680 = vmatpush1.xpose.msra.mxu0 0.0
    %681 = vmatprep.subr.mxu0 0.0
    %682 = vmatpush1.xpose.msra.mxu0 0.0
    %683 = vmatprep.subr.mxu0 0.0
    %684 = vmatpush1.xpose.msra.mxu0 0.0
    %685 = vmatprep.subr.mxu0 0.0
    %686 = vmatpush1.xpose.msra.mxu0 0.0
    %687 = vmatprep.subr.mxu0 0.0
    %688 = vmatpush1.xpose.msra.mxu0 0.0
    %689 = vmatprep.subr.mxu0 0.0
    %690 = vmatpush1.xpose.msra.mxu0 0.0
    %691 = vmatprep.subr.mxu0 0.0
    %692 = vmatpush1.xpose.msra.mxu0 0.0
    %693 = vmatprep.subr.mxu0 0.0
    %694 = vmatpush1.xpose.msra.mxu0 %v663
    %695 = vmatprep.subr.mxu0 0.0
    %696 = vmatpush1.xpose.msra.mxu0 %v661
    %697 = vmatprep.subr.mxu0 0.0
    %698 = vmatpush2.xpose.msra.mxu0 0.0
    %699 = vmatprep.subr.mxu0 0.0
    %700 = vmatpush2.xpose.msra.mxu0 0.0
    %701 = vmatprep.subr.mxu0 0.0
    %702 = vmatpush2.xpose.msra.mxu0 0.0
    %703 = vmatprep.subr.mxu0 0.0
    %704 = vmatpush2.xpose.msra.mxu0 0.0
    %705 = vmatprep.subr.mxu0 0.0
    %706 = vmatpush2.xpose.msra.mxu0 0.0
    %707 = vmatprep.subr.mxu0 0.0
    %708 = vmatpush2.xpose.msra.mxu0 0.0
    %709 = vmatprep.subr.mxu0 0.0
    %710 = vmatpush2.xpose.msra.mxu0 0.0
    %711 = vmatprep.subr.mxu0 0.0
    %712 = vmatpush2.xpose.msra.mxu0 0.0
    %713 = vmatprep.subr.mxu0 0.0
    %714 = vmatpush2.xpose.msra.mxu0 0.0
    %715 = vmatprep.subr.mxu0 0.0
    %716 = vmatpush2.xpose.msra.mxu0 0.0
    %717 = vmatprep.subr.mxu0 0.0
    %718 = vmatpush2.xpose.msra.mxu0 0.0
    %719 = vmatprep.subr.mxu0 0.0
    %720 = vmatpush2.xpose.msra.mxu0 0.0
    %721 = vmatprep.subr.mxu0 0.0
    %722 = vmatpush2.xpose.msra.mxu0 0.0
    %723 = vmatprep.subr.mxu0 0.0
    %724 = vmatpush2.xpose.msra.mxu0 0.0
    %725 = vmatprep.subr.mxu0 0.0
    %726 = vmatpush2.xpose.msra.mxu0 0.0
    %727 = vmatprep.subr.mxu0 0.0
    %728 = vmatpush2.xpose.msra.mxu0 0.0
    %729 = vmatprep.mubr.f32.mxu0 0.0
    %730 = vmatmul.mubr.f32.gmra.mxu0 %v657
    %v731 = vpop.f32.mrf.mxu0
    %v732 = vadd.f32 0.0, %v731
    %v733 = vpop.f32.mrf.mxu0
    %734 = vmatprep.mubr.f32.mxu0 0.0
    %735 = vmatmul.mubr.f32.gmra.mxu0 %v659
    %v736 = vpop.f32.mrf.mxu0
    %v737 = vadd.f32 0.0, %v736
    %v738 = vpop.f32.mrf.mxu0
    %739 = vdwg.mxu0
    %v740 = vmul.f32 %v732, 0.17677669
    %v741 = vmul.f32 %v737, 0.17677669
    %v742 = vsel %vm544, %v740, -inf
    %743 = vmax.xlane.f32.xlu0 %v742
    %v744 = vpop.xlane.xlu0 %743
    %v745 = vsel %vm544, %v741, -inf
    %746 = vmax.xlane.f32.xlu0 %v745
    %v747 = vpop.xlane.xlu0 %746
    %v748 = vsub.f32 %v740, %v744
    %v749 = vsub.f32 %v741, %v747
    %v750 = vmul.f32 %v748, 1.442695
    %v751 = vpow.pop %v750
    %v752 = vmul.f32 %v749, 1.442695
    %v753 = vpow.pop %v752
    %v754 = vsel %vm544, %v751, 0.0
    %755 = vadd.xlane.f32.xlu0 %v754
    %v756 = vpop.xlane.xlu0 %755
    %v757 = vsel %vm544, %v753, 0.0
    %758 = vadd.xlane.f32.xlu0 %v757
    %v759 = vpop.xlane.xlu0 %758
    %v760 = vrcp.pop %v756
    %v761 = vrcp.pop %v759
    %v762 = vmul.f32 %v751, %v760
    %v763 = vmul.f32 %v753, %v761
    %766 = vrot.lane.b32.xlu0 %v434, 96
    %v767 = vpop.permute.xlu0 %766
    %768 = vrot.lane.b32.xlu0 %v435, 96
    %v769 = vpop.permute.xlu0 %768
    %v773 = vsel %vm544, %v762, 0
    %v776 = vsel %vm544, %v763, 0
    %778 = vmatprep.subr.mxu0 0.0
    %779 = vmatpush1.msra.mxu0 0.0
    %780 = vmatprep.subr.mxu0 0.0
    %781 = vmatpush1.msra.mxu0 0.0
    %782 = vmatprep.subr.mxu0 0.0
    %783 = vmatpush1.msra.mxu0 0.0
    %784 = vmatprep.subr.mxu0 0.0
    %785 = vmatpush1.msra.mxu0 0.0
    %786 = vmatprep.subr.mxu0 0.0
    %787 = vmatpush1.msra.mxu0 0.0
    %788 = vmatprep.subr.mxu0 0.0
    %789 = vmatpush1.msra.mxu0 0.0
    %790 = vmatprep.subr.mxu0 0.0
    %791 = vmatpush1.msra.mxu0 0.0
    %792 = vmatprep.subr.mxu0 0.0
    %793 = vmatpush1.msra.mxu0 0.0
    %794 = vmatprep.subr.mxu0 0.0
    %795 = vmatpush1.msra.mxu0 0.0
    %796 = vmatprep.subr.mxu0 0.0
    %797 = vmatpush1.msra.mxu0 0.0
    %798 = vmatprep.subr.mxu0 0.0
    %799 = vmatpush1.msra.mxu0 0.0
    %800 = vmatprep.subr.mxu0 0.0
    %801 = vmatpush1.msra.mxu0 0.0
    %802 = vmatprep.subr.mxu0 0.0
    %803 = vmatpush1.msra.mxu0 0.0
    %804 = vmatprep.subr.mxu0 0.0
    %805 = vmatpush1.msra.mxu0 0.0
    %806 = vmatprep.subr.mxu0 0.0
    %807 = vmatpush1.msra.mxu0 %v769
    %808 = vmatprep.subr.mxu0 0.0
    %809 = vmatpush1.msra.mxu0 %v767
    %810 = vmatprep.subr.mxu0 0.0
    %811 = vmatpush2.msra.mxu0 0.0
    %812 = vmatprep.subr.mxu0 0.0
    %813 = vmatpush2.msra.mxu0 0.0
    %814 = vmatprep.subr.mxu0 0.0
    %815 = vmatpush2.msra.mxu0 0.0
    %816 = vmatprep.subr.mxu0 0.0
    %817 = vmatpush2.msra.mxu0 0.0
    %818 = vmatprep.subr.mxu0 0.0
    %819 = vmatpush2.msra.mxu0 0.0
    %820 = vmatprep.subr.mxu0 0.0
    %821 = vmatpush2.msra.mxu0 0.0
    %822 = vmatprep.subr.mxu0 0.0
    %823 = vmatpush2.msra.mxu0 0.0
    %824 = vmatprep.subr.mxu0 0.0
    %825 = vmatpush2.msra.mxu0 0.0
    %826 = vmatprep.subr.mxu0 0.0
    %827 = vmatpush2.msra.mxu0 0.0
    %828 = vmatprep.subr.mxu0 0.0
    %829 = vmatpush2.msra.mxu0 0.0
    %830 = vmatprep.subr.mxu0 0.0
    %831 = vmatpush2.msra.mxu0 0.0
    %832 = vmatprep.subr.mxu0 0.0
    %833 = vmatpush2.msra.mxu0 0.0
    %834 = vmatprep.subr.mxu0 0.0
    %835 = vmatpush2.msra.mxu0 0.0
    %836 = vmatprep.subr.mxu0 0.0
    %837 = vmatpush2.msra.mxu0 0.0
    %838 = vmatprep.subr.mxu0 0.0
    %839 = vmatpush2.msra.mxu0 0.0
    %840 = vmatprep.subr.mxu0 0.0
    %841 = vmatpush2.msra.mxu0 0.0
    %842 = vmatprep.mubr.f32.mxu0 0.0
    %843 = vmatmul.mubr.f32.gmra.mxu0 %v773
    %v844 = vpop.f32.mrf.mxu0
    %v845 = vadd.f32 0.0, %v844
    %v846 = vpop.f32.mrf.mxu0
    %847 = vmatprep.mubr.f32.mxu0 0.0
    %848 = vmatmul.mubr.f32.gmra.mxu0 %v776
    %v849 = vpop.f32.mrf.mxu0
    %v850 = vadd.f32 0.0, %v849
    %v851 = vpop.f32.mrf.mxu0
    %852 = vdwg.mxu0
    %v853 = vpack.c.bf16 %v850, %v845
    %v858 = vunpack.c.l.b16 %v442
    %v859 = vunpack.c.l.b16 %v443
    %v860 = vunpack.c.l.b16 %v444
    %v861 = vunpack.c.l.b16 %v445
    %v862 = vpack.c.b16 %v859, %v858
    %v863 = vpack.c.b16 %v861, %v860
    %v867 = vsel %vm454, %v853, 0
    %869 = vmatprep.subr.bf16.mxu0 0
    %870 = vmatpush1.bf16.msra.mxu0 0
    %871 = vmatprep.subr.bf16.mxu0 0
    %872 = vmatpush1.bf16.msra.mxu0 0
    %873 = vmatprep.subr.bf16.mxu0 0
    %874 = vmatpush1.bf16.msra.mxu0 0
    %875 = vmatprep.subr.bf16.mxu0 0
    %876 = vmatpush1.bf16.msra.mxu0 0
    %877 = vmatprep.subr.bf16.mxu0 0
    %878 = vmatpush1.bf16.msra.mxu0 0
    %879 = vmatprep.subr.bf16.mxu0 0
    %880 = vmatpush1.bf16.msra.mxu0 0
    %881 = vmatprep.subr.bf16.mxu0 0
    %882 = vmatpush1.bf16.msra.mxu0 %v863
    %883 = vmatprep.subr.bf16.mxu0 0
    %884 = vmatpush1.bf16.msra.mxu0 %v862
    %885 = vmatprep.subr.bf16.mxu0 0
    %886 = vmatpush2.bf16.msra.mxu0 0
    %887 = vmatprep.subr.bf16.mxu0 0
    %888 = vmatpush2.bf16.msra.mxu0 0
    %889 = vmatprep.subr.bf16.mxu0 0
    %890 = vmatpush2.bf16.msra.mxu0 0
    %891 = vmatprep.subr.bf16.mxu0 0
    %892 = vmatpush2.bf16.msra.mxu0 0
    %893 = vmatprep.subr.bf16.mxu0 0
    %894 = vmatpush2.bf16.msra.mxu0 0
    %895 = vmatprep.subr.bf16.mxu0 0
    %896 = vmatpush2.bf16.msra.mxu0 0
    %897 = vmatprep.subr.bf16.mxu0 0
    %898 = vmatpush2.bf16.msra.mxu0 0
    %899 = vmatprep.subr.bf16.mxu0 0
    %900 = vmatpush2.bf16.msra.mxu0 0
    %901 = vmatprep.mubr.bf16.mxu0 0
    %902 = vmatmul.mubr.bf16.gmra.mxu0 %v867
    %v903 = vpop.f32.mrf.mxu0
    %v904 = vadd.f32 0.0, %v903
    %v905 = vpop.f32.mrf.mxu0
    %v906 = vpop.f32.mrf.mxu0
    %v907 = vadd.f32 0.0, %v906
    %v908 = vpop.f32.mrf.mxu0
    %909 = vdwg.mxu0
    %v914 = vunpack.c.l.b16 %v438
    %v915 = vunpack.c.l.b16 %v439
    %v916 = vunpack.c.l.b16 %v440
    %v917 = vunpack.c.l.b16 %v441
    %v918 = vpack.c.b16 %v915, %v914
    %v919 = vpack.c.b16 %v917, %v916
    %v923 = vsel %vm454, %v648, 0
    %925 = vmatprep.subr.bf16.mxu0 0
    %926 = vmatpush1.bf16.msra.mxu0 0
    %927 = vmatprep.subr.bf16.mxu0 0
    %928 = vmatpush1.bf16.msra.mxu0 0
    %929 = vmatprep.subr.bf16.mxu0 0
    %930 = vmatpush1.bf16.msra.mxu0 0
    %931 = vmatprep.subr.bf16.mxu0 0
    %932 = vmatpush1.bf16.msra.mxu0 0
    %933 = vmatprep.subr.bf16.mxu0 0
    %934 = vmatpush1.bf16.msra.mxu0 0
    %935 = vmatprep.subr.bf16.mxu0 0
    %936 = vmatpush1.bf16.msra.mxu0 0
    %937 = vmatprep.subr.bf16.mxu0 0
    %938 = vmatpush1.bf16.msra.mxu0 %v919
    %939 = vmatprep.subr.bf16.mxu0 0
    %940 = vmatpush1.bf16.msra.mxu0 %v918
    %941 = vmatprep.subr.bf16.mxu0 0
    %942 = vmatpush2.bf16.msra.mxu0 0
    %943 = vmatprep.subr.bf16.mxu0 0
    %944 = vmatpush2.bf16.msra.mxu0 0
    %945 = vmatprep.subr.bf16.mxu0 0
    %946 = vmatpush2.bf16.msra.mxu0 0
    %947 = vmatprep.subr.bf16.mxu0 0
    %948 = vmatpush2.bf16.msra.mxu0 0
    %949 = vmatprep.subr.bf16.mxu0 0
    %950 = vmatpush2.bf16.msra.mxu0 0
    %951 = vmatprep.subr.bf16.mxu0 0
    %952 = vmatpush2.bf16.msra.mxu0 0
    %953 = vmatprep.subr.bf16.mxu0 0
    %954 = vmatpush2.bf16.msra.mxu0 0
    %955 = vmatprep.subr.bf16.mxu0 0
    %956 = vmatpush2.bf16.msra.mxu0 0
    %957 = vmatprep.mubr.bf16.mxu0 0
    %958 = vmatmul.mubr.bf16.gmra.mxu0 %v923
    %v959 = vpop.f32.mrf.mxu0
    %v960 = vadd.f32 %v904, %v959
    %v961 = vpop.f32.mrf.mxu0
    %v962 = vpop.f32.mrf.mxu0
    %v963 = vadd.f32 %v907, %v962
    %v964 = vpop.f32.mrf.mxu0
    %965 = vdwg.mxu0
    %966 = vrot.lane.b32.xlu0 %v418, 64
    %v967 = vpop.permute.xlu0 %966
    %968 = vrot.lane.b32.xlu0 %v419, 64
    %v969 = vpop.permute.xlu0 %968
    %970 = vrot.lane.b32.xlu0 %v426, 64
    %v971 = vpop.permute.xlu0 %970
    %972 = vrot.lane.b32.xlu0 %v427, 64
    %v973 = vpop.permute.xlu0 %972
    %v974 = vsel %vm454, %v967, 0
    %v976 = vsel %vm454, %v969, 0
    %v978 = vsel %vm454, %v971, 0
    %v980 = vsel %vm454, %v973, 0
    %982 = vmatprep.subr.mxu0 0.0
    %983 = vmatpush1.xpose.msra.mxu0 0.0
    %984 = vmatprep.subr.mxu0 0.0
    %985 = vmatpush1.xpose.msra.mxu0 0.0
    %986 = vmatprep.subr.mxu0 0.0
    %987 = vmatpush1.xpose.msra.mxu0 0.0
    %988 = vmatprep.subr.mxu0 0.0
    %989 = vmatpush1.xpose.msra.mxu0 0.0
    %990 = vmatprep.subr.mxu0 0.0
    %991 = vmatpush1.xpose.msra.mxu0 0.0
    %992 = vmatprep.subr.mxu0 0.0
    %993 = vmatpush1.xpose.msra.mxu0 0.0
    %994 = vmatprep.subr.mxu0 0.0
    %995 = vmatpush1.xpose.msra.mxu0 0.0
    %996 = vmatprep.subr.mxu0 0.0
    %997 = vmatpush1.xpose.msra.mxu0 0.0
    %998 = vmatprep.subr.mxu0 0.0
    %999 = vmatpush1.xpose.msra.mxu0 0.0
    %1000 = vmatprep.subr.mxu0 0.0
    %1001 = vmatpush1.xpose.msra.mxu0 0.0
    %1002 = vmatprep.subr.mxu0 0.0
    %1003 = vmatpush1.xpose.msra.mxu0 0.0
    %1004 = vmatprep.subr.mxu0 0.0
    %1005 = vmatpush1.xpose.msra.mxu0 0.0
    %1006 = vmatprep.subr.mxu0 0.0
    %1007 = vmatpush1.xpose.msra.mxu0 0.0
    %1008 = vmatprep.subr.mxu0 0.0
    %1009 = vmatpush1.xpose.msra.mxu0 0.0
    %1010 = vmatprep.subr.mxu0 0.0
    %1011 = vmatpush1.xpose.msra.mxu0 %v980
    %1012 = vmatprep.subr.mxu0 0.0
    %1013 = vmatpush1.xpose.msra.mxu0 %v978
    %1014 = vmatprep.subr.mxu0 0.0
    %1015 = vmatpush2.xpose.msra.mxu0 0.0
    %1016 = vmatprep.subr.mxu0 0.0
    %1017 = vmatpush2.xpose.msra.mxu0 0.0
    %1018 = vmatprep.subr.mxu0 0.0
    %1019 = vmatpush2.xpose.msra.mxu0 0.0
    %1020 = vmatprep.subr.mxu0 0.0
    %1021 = vmatpush2.xpose.msra.mxu0 0.0
    %1022 = vmatprep.subr.mxu0 0.0
    %1023 = vmatpush2.xpose.msra.mxu0 0.0
    %1024 = vmatprep.subr.mxu0 0.0
    %1025 = vmatpush2.xpose.msra.mxu0 0.0
    %1026 = vmatprep.subr.mxu0 0.0
    %1027 = vmatpush2.xpose.msra.mxu0 0.0
    %1028 = vmatprep.subr.mxu0 0.0
    %1029 = vmatpush2.xpose.msra.mxu0 0.0
    %1030 = vmatprep.subr.mxu0 0.0
    %1031 = vmatpush2.xpose.msra.mxu0 0.0
    %1032 = vmatprep.subr.mxu0 0.0
    %1033 = vmatpush2.xpose.msra.mxu0 0.0
    %1034 = vmatprep.subr.mxu0 0.0
    %1035 = vmatpush2.xpose.msra.mxu0 0.0
    %1036 = vmatprep.subr.mxu0 0.0
    %1037 = vmatpush2.xpose.msra.mxu0 0.0
    %1038 = vmatprep.subr.mxu0 0.0
    %1039 = vmatpush2.xpose.msra.mxu0 0.0
    %1040 = vmatprep.subr.mxu0 0.0
    %1041 = vmatpush2.xpose.msra.mxu0 0.0
    %1042 = vmatprep.subr.mxu0 0.0
    %1043 = vmatpush2.xpose.msra.mxu0 0.0
    %1044 = vmatprep.subr.mxu0 0.0
    %1045 = vmatpush2.xpose.msra.mxu0 0.0
    %1046 = vmatprep.mubr.f32.mxu0 0.0
    %1047 = vmatmul.mubr.f32.gmra.mxu0 %v974
    %v1048 = vpop.f32.mrf.mxu0
    %v1049 = vadd.f32 0.0, %v1048
    %v1050 = vpop.f32.mrf.mxu0
    %1051 = vmatprep.mubr.f32.mxu0 0.0
    %1052 = vmatmul.mubr.f32.gmra.mxu0 %v976
    %v1053 = vpop.f32.mrf.mxu0
    %v1054 = vadd.f32 0.0, %v1053
    %v1055 = vpop.f32.mrf.mxu0
    %1056 = vdwg.mxu0
    %v1057 = vmul.f32 %v1049, 0.17677669
    %v1058 = vmul.f32 %v1054, 0.17677669
    %v1059 = vsel %vm544, %v1057, -inf
    %1060 = vmax.xlane.f32.xlu0 %v1059
    %v1061 = vpop.xlane.xlu0 %1060
    %v1062 = vsel %vm544, %v1058, -inf
    %1063 = vmax.xlane.f32.xlu0 %v1062
    %v1064 = vpop.xlane.xlu0 %1063
    %v1065 = vsub.f32 %v1057, %v1061
    %v1066 = vsub.f32 %v1058, %v1064
    %v1067 = vmul.f32 %v1065, 1.442695
    %v1068 = vpow.pop %v1067
    %v1069 = vmul.f32 %v1066, 1.442695
    %v1070 = vpow.pop %v1069
    %v1071 = vsel %vm544, %v1068, 0.0
    %1072 = vadd.xlane.f32.xlu0 %v1071
    %v1073 = vpop.xlane.xlu0 %1072
    %v1074 = vsel %vm544, %v1070, 0.0
    %1075 = vadd.xlane.f32.xlu0 %v1074
    %v1076 = vpop.xlane.xlu0 %1075
    %v1077 = vrcp.pop %v1073
    %v1078 = vrcp.pop %v1076
    %v1079 = vmul.f32 %v1068, %v1077
    %v1080 = vmul.f32 %v1070, %v1078
    %1081 = vrot.lane.b32.xlu0 %v434, 64
    %v1082 = vpop.permute.xlu0 %1081
    %1083 = vrot.lane.b32.xlu0 %v435, 64
    %v1084 = vpop.permute.xlu0 %1083
    %v1088 = vsel %vm544, %v1079, 0
    %v1091 = vsel %vm544, %v1080, 0
    %1093 = vmatprep.subr.mxu0 0.0
    %1094 = vmatpush1.msra.mxu0 0.0
    %1095 = vmatprep.subr.mxu0 0.0
    %1096 = vmatpush1.msra.mxu0 0.0
    %1097 = vmatprep.subr.mxu0 0.0
    %1098 = vmatpush1.msra.mxu0 0.0
    %1099 = vmatprep.subr.mxu0 0.0
    %1100 = vmatpush1.msra.mxu0 0.0
    %1101 = vmatprep.subr.mxu0 0.0
    %1102 = vmatpush1.msra.mxu0 0.0
    %1103 = vmatprep.subr.mxu0 0.0
    %1104 = vmatpush1.msra.mxu0 0.0
    %1105 = vmatprep.subr.mxu0 0.0
    %1106 = vmatpush1.msra.mxu0 0.0
    %1107 = vmatprep.subr.mxu0 0.0
    %1108 = vmatpush1.msra.mxu0 0.0
    %1109 = vmatprep.subr.mxu0 0.0
    %1110 = vmatpush1.msra.mxu0 0.0
    %1111 = vmatprep.subr.mxu0 0.0
    %1112 = vmatpush1.msra.mxu0 0.0
    %1113 = vmatprep.subr.mxu0 0.0
    %1114 = vmatpush1.msra.mxu0 0.0
    %1115 = vmatprep.subr.mxu0 0.0
    %1116 = vmatpush1.msra.mxu0 0.0
    %1117 = vmatprep.subr.mxu0 0.0
    %1118 = vmatpush1.msra.mxu0 0.0
    %1119 = vmatprep.subr.mxu0 0.0
    %1120 = vmatpush1.msra.mxu0 0.0
    %1121 = vmatprep.subr.mxu0 0.0
    %1122 = vmatpush1.msra.mxu0 %v1084
    %1123 = vmatprep.subr.mxu0 0.0
    %1124 = vmatpush1.msra.mxu0 %v1082
    %1125 = vmatprep.subr.mxu0 0.0
    %1126 = vmatpush2.msra.mxu0 0.0
    %1127 = vmatprep.subr.mxu0 0.0
    %1128 = vmatpush2.msra.mxu0 0.0
    %1129 = vmatprep.subr.mxu0 0.0
    %1130 = vmatpush2.msra.mxu0 0.0
    %1131 = vmatprep.subr.mxu0 0.0
    %1132 = vmatpush2.msra.mxu0 0.0
    %1133 = vmatprep.subr.mxu0 0.0
    %1134 = vmatpush2.msra.mxu0 0.0
    %1135 = vmatprep.subr.mxu0 0.0
    %1136 = vmatpush2.msra.mxu0 0.0
    %1137 = vmatprep.subr.mxu0 0.0
    %1138 = vmatpush2.msra.mxu0 0.0
    %1139 = vmatprep.subr.mxu0 0.0
    %1140 = vmatpush2.msra.mxu0 0.0
    %1141 = vmatprep.subr.mxu0 0.0
    %1142 = vmatpush2.msra.mxu0 0.0
    %1143 = vmatprep.subr.mxu0 0.0
    %1144 = vmatpush2.msra.mxu0 0.0
    %1145 = vmatprep.subr.mxu0 0.0
    %1146 = vmatpush2.msra.mxu0 0.0
    %1147 = vmatprep.subr.mxu0 0.0
    %1148 = vmatpush2.msra.mxu0 0.0
    %1149 = vmatprep.subr.mxu0 0.0
    %1150 = vmatpush2.msra.mxu0 0.0
    %1151 = vmatprep.subr.mxu0 0.0
    %1152 = vmatpush2.msra.mxu0 0.0
    %1153 = vmatprep.subr.mxu0 0.0
    %1154 = vmatpush2.msra.mxu0 0.0
    %1155 = vmatprep.subr.mxu0 0.0
    %1156 = vmatpush2.msra.mxu0 0.0
    %1157 = vmatprep.mubr.f32.mxu0 0.0
    %1158 = vmatmul.mubr.f32.gmra.mxu0 %v1088
    %v1159 = vpop.f32.mrf.mxu0
    %v1160 = vadd.f32 0.0, %v1159
    %v1161 = vpop.f32.mrf.mxu0
    %1162 = vmatprep.mubr.f32.mxu0 0.0
    %1163 = vmatmul.mubr.f32.gmra.mxu0 %v1091
    %v1164 = vpop.f32.mrf.mxu0
    %v1165 = vadd.f32 0.0, %v1164
    %v1166 = vpop.f32.mrf.mxu0
    %1167 = vdwg.mxu0
    %v1168 = vpack.c.bf16 %v1165, %v1160
    %v1173 = vunpack.c.l.b16 %v446
    %v1174 = vunpack.c.l.b16 %v447
    %v1175 = vunpack.c.l.b16 %v448
    %v1176 = vunpack.c.l.b16 %v449
    %v1177 = vpack.c.b16 %v1174, %v1173
    %v1178 = vpack.c.b16 %v1176, %v1175
    %v1182 = vsel %vm454, %v1168, 0
    %1184 = vmatprep.subr.bf16.mxu0 0
    %1185 = vmatpush1.bf16.msra.mxu0 0
    %1186 = vmatprep.subr.bf16.mxu0 0
    %1187 = vmatpush1.bf16.msra.mxu0 0
    %1188 = vmatprep.subr.bf16.mxu0 0
    %1189 = vmatpush1.bf16.msra.mxu0 0
    %1190 = vmatprep.subr.bf16.mxu0 0
    %1191 = vmatpush1.bf16.msra.mxu0 0
    %1192 = vmatprep.subr.bf16.mxu0 0
    %1193 = vmatpush1.bf16.msra.mxu0 0
    %1194 = vmatprep.subr.bf16.mxu0 0
    %1195 = vmatpush1.bf16.msra.mxu0 0
    %1196 = vmatprep.subr.bf16.mxu0 0
    %1197 = vmatpush1.bf16.msra.mxu0 %v1178
    %1198 = vmatprep.subr.bf16.mxu0 0
    %1199 = vmatpush1.bf16.msra.mxu0 %v1177
    %1200 = vmatprep.subr.bf16.mxu0 0
    %1201 = vmatpush2.bf16.msra.mxu0 0
    %1202 = vmatprep.subr.bf16.mxu0 0
    %1203 = vmatpush2.bf16.msra.mxu0 0
    %1204 = vmatprep.subr.bf16.mxu0 0
    %1205 = vmatpush2.bf16.msra.mxu0 0
    %1206 = vmatprep.subr.bf16.mxu0 0
    %1207 = vmatpush2.bf16.msra.mxu0 0
    %1208 = vmatprep.subr.bf16.mxu0 0
    %1209 = vmatpush2.bf16.msra.mxu0 0
    %1210 = vmatprep.subr.bf16.mxu0 0
    %1211 = vmatpush2.bf16.msra.mxu0 0
    %1212 = vmatprep.subr.bf16.mxu0 0
    %1213 = vmatpush2.bf16.msra.mxu0 0
    %1214 = vmatprep.subr.bf16.mxu0 0
    %1215 = vmatpush2.bf16.msra.mxu0 0
    %1216 = vmatprep.mubr.bf16.mxu0 0
    %1217 = vmatmul.mubr.bf16.gmra.mxu0 %v1182
    %v1218 = vpop.f32.mrf.mxu0
    %v1219 = vadd.f32 0.0, %v1218
    %v1220 = vpop.f32.mrf.mxu0
    %v1221 = vpop.f32.mrf.mxu0
    %v1222 = vadd.f32 0.0, %v1221
    %v1223 = vpop.f32.mrf.mxu0
    %1224 = vdwg.mxu0
    %v1225 = vadd.f32 %v960, %v1219
    %v1226 = vadd.f32 %v963, %v1222
    %1227 = vrot.lane.b32.xlu0 %v418, 32
    %v1228 = vpop.permute.xlu0 %1227
    %1229 = vrot.lane.b32.xlu0 %v419, 32
    %v1230 = vpop.permute.xlu0 %1229
    %1231 = vrot.lane.b32.xlu0 %v426, 32
    %v1232 = vpop.permute.xlu0 %1231
    %1233 = vrot.lane.b32.xlu0 %v427, 32
    %v1234 = vpop.permute.xlu0 %1233
    %v1235 = vsel %vm454, %v1228, 0
    %v1237 = vsel %vm454, %v1230, 0
    %v1239 = vsel %vm454, %v1232, 0
    %v1241 = vsel %vm454, %v1234, 0
    %1243 = vmatprep.subr.mxu0 0.0
    %1244 = vmatpush1.xpose.msra.mxu0 0.0
    %1245 = vmatprep.subr.mxu0 0.0
    %1246 = vmatpush1.xpose.msra.mxu0 0.0
    %1247 = vmatprep.subr.mxu0 0.0
    %1248 = vmatpush1.xpose.msra.mxu0 0.0
    %1249 = vmatprep.subr.mxu0 0.0
    %1250 = vmatpush1.xpose.msra.mxu0 0.0
    %1251 = vmatprep.subr.mxu0 0.0
    %1252 = vmatpush1.xpose.msra.mxu0 0.0
    %1253 = vmatprep.subr.mxu0 0.0
    %1254 = vmatpush1.xpose.msra.mxu0 0.0
    %1255 = vmatprep.subr.mxu0 0.0
    %1256 = vmatpush1.xpose.msra.mxu0 0.0
    %1257 = vmatprep.subr.mxu0 0.0
    %1258 = vmatpush1.xpose.msra.mxu0 0.0
    %1259 = vmatprep.subr.mxu0 0.0
    %1260 = vmatpush1.xpose.msra.mxu0 0.0
    %1261 = vmatprep.subr.mxu0 0.0
    %1262 = vmatpush1.xpose.msra.mxu0 0.0
    %1263 = vmatprep.subr.mxu0 0.0
    %1264 = vmatpush1.xpose.msra.mxu0 0.0
    %1265 = vmatprep.subr.mxu0 0.0
    %1266 = vmatpush1.xpose.msra.mxu0 0.0
    %1267 = vmatprep.subr.mxu0 0.0
    %1268 = vmatpush1.xpose.msra.mxu0 0.0
    %1269 = vmatprep.subr.mxu0 0.0
    %1270 = vmatpush1.xpose.msra.mxu0 0.0
    %1271 = vmatprep.subr.mxu0 0.0
    %1272 = vmatpush1.xpose.msra.mxu0 %v1241
    %1273 = vmatprep.subr.mxu0 0.0
    %1274 = vmatpush1.xpose.msra.mxu0 %v1239
    %1275 = vmatprep.subr.mxu0 0.0
    %1276 = vmatpush2.xpose.msra.mxu0 0.0
    %1277 = vmatprep.subr.mxu0 0.0
    %1278 = vmatpush2.xpose.msra.mxu0 0.0
    %1279 = vmatprep.subr.mxu0 0.0
    %1280 = vmatpush2.xpose.msra.mxu0 0.0
    %1281 = vmatprep.subr.mxu0 0.0
    %1282 = vmatpush2.xpose.msra.mxu0 0.0
    %1283 = vmatprep.subr.mxu0 0.0
    %1284 = vmatpush2.xpose.msra.mxu0 0.0
    %1285 = vmatprep.subr.mxu0 0.0
    %1286 = vmatpush2.xpose.msra.mxu0 0.0
    %1287 = vmatprep.subr.mxu0 0.0
    %1288 = vmatpush2.xpose.msra.mxu0 0.0
    %1289 = vmatprep.subr.mxu0 0.0
    %1290 = vmatpush2.xpose.msra.mxu0 0.0
    %1291 = vmatprep.subr.mxu0 0.0
    %1292 = vmatpush2.xpose.msra.mxu0 0.0
    %1293 = vmatprep.subr.mxu0 0.0
    %1294 = vmatpush2.xpose.msra.mxu0 0.0
    %1295 = vmatprep.subr.mxu0 0.0
    %1296 = vmatpush2.xpose.msra.mxu0 0.0
    %1297 = vmatprep.subr.mxu0 0.0
    %1298 = vmatpush2.xpose.msra.mxu0 0.0
    %1299 = vmatprep.subr.mxu0 0.0
    %1300 = vmatpush2.xpose.msra.mxu0 0.0
    %1301 = vmatprep.subr.mxu0 0.0
    %1302 = vmatpush2.xpose.msra.mxu0 0.0
    %1303 = vmatprep.subr.mxu0 0.0
    %1304 = vmatpush2.xpose.msra.mxu0 0.0
    %1305 = vmatprep.subr.mxu0 0.0
    %1306 = vmatpush2.xpose.msra.mxu0 0.0
    %1307 = vmatprep.mubr.f32.mxu0 0.0
    %1308 = vmatmul.mubr.f32.gmra.mxu0 %v1235
    %v1309 = vpop.f32.mrf.mxu0
    %v1310 = vadd.f32 0.0, %v1309
    %v1311 = vpop.f32.mrf.mxu0
    %1312 = vmatprep.mubr.f32.mxu0 0.0
    %1313 = vmatmul.mubr.f32.gmra.mxu0 %v1237
    %v1314 = vpop.f32.mrf.mxu0
    %v1315 = vadd.f32 0.0, %v1314
    %v1316 = vpop.f32.mrf.mxu0
    %1317 = vdwg.mxu0
    %v1318 = vmul.f32 %v1310, 0.17677669
    %v1319 = vmul.f32 %v1315, 0.17677669
    %v1320 = vsel %vm544, %v1318, -inf
    %1321 = vmax.xlane.f32.xlu0 %v1320
    %v1322 = vpop.xlane.xlu0 %1321
    %v1323 = vsel %vm544, %v1319, -inf
    %1324 = vmax.xlane.f32.xlu0 %v1323
    %v1325 = vpop.xlane.xlu0 %1324
    %v1326 = vsub.f32 %v1318, %v1322
    %v1327 = vsub.f32 %v1319, %v1325
    %v1328 = vmul.f32 %v1326, 1.442695
    %v1329 = vpow.pop %v1328
    %v1330 = vmul.f32 %v1327, 1.442695
    %v1331 = vpow.pop %v1330
    %v1332 = vsel %vm544, %v1329, 0.0
    %1333 = vadd.xlane.f32.xlu0 %v1332
    %v1334 = vpop.xlane.xlu0 %1333
    %v1335 = vsel %vm544, %v1331, 0.0
    %1336 = vadd.xlane.f32.xlu0 %v1335
    %v1337 = vpop.xlane.xlu0 %1336
    %v1338 = vrcp.pop %v1334
    %v1339 = vrcp.pop %v1337
    %v1340 = vmul.f32 %v1329, %v1338
    %v1341 = vmul.f32 %v1331, %v1339
    %1342 = vrot.lane.b32.xlu0 %v434, 32
    %v1343 = vpop.permute.xlu0 %1342
    %1344 = vrot.lane.b32.xlu0 %v435, 32
    %v1345 = vpop.permute.xlu0 %1344
    %v1349 = vsel %vm544, %v1340, 0
    %v1352 = vsel %vm544, %v1341, 0
    %1354 = vmatprep.subr.mxu0 0.0
    %1355 = vmatpush1.msra.mxu0 0.0
    %1356 = vmatprep.subr.mxu0 0.0
    %1357 = vmatpush1.msra.mxu0 0.0
    %1358 = vmatprep.subr.mxu0 0.0
    %1359 = vmatpush1.msra.mxu0 0.0
    %1360 = vmatprep.subr.mxu0 0.0
    %1361 = vmatpush1.msra.mxu0 0.0
    %1362 = vmatprep.subr.mxu0 0.0
    %1363 = vmatpush1.msra.mxu0 0.0
    %1364 = vmatprep.subr.mxu0 0.0
    %1365 = vmatpush1.msra.mxu0 0.0
    %1366 = vmatprep.subr.mxu0 0.0
    %1367 = vmatpush1.msra.mxu0 0.0
    %1368 = vmatprep.subr.mxu0 0.0
    %1369 = vmatpush1.msra.mxu0 0.0
    %1370 = vmatprep.subr.mxu0 0.0
    %1371 = vmatpush1.msra.mxu0 0.0
    %1372 = vmatprep.subr.mxu0 0.0
    %1373 = vmatpush1.msra.mxu0 0.0
    %1374 = vmatprep.subr.mxu0 0.0
    %1375 = vmatpush1.msra.mxu0 0.0
    %1376 = vmatprep.subr.mxu0 0.0
    %1377 = vmatpush1.msra.mxu0 0.0
    %1378 = vmatprep.subr.mxu0 0.0
    %1379 = vmatpush1.msra.mxu0 0.0
    %1380 = vmatprep.subr.mxu0 0.0
    %1381 = vmatpush1.msra.mxu0 0.0
    %1382 = vmatprep.subr.mxu0 0.0
    %1383 = vmatpush1.msra.mxu0 %v1345
    %1384 = vmatprep.subr.mxu0 0.0
    %1385 = vmatpush1.msra.mxu0 %v1343
    %1386 = vmatprep.subr.mxu0 0.0
    %1387 = vmatpush2.msra.mxu0 0.0
    %1388 = vmatprep.subr.mxu0 0.0
    %1389 = vmatpush2.msra.mxu0 0.0
    %1390 = vmatprep.subr.mxu0 0.0
    %1391 = vmatpush2.msra.mxu0 0.0
    %1392 = vmatprep.subr.mxu0 0.0
    %1393 = vmatpush2.msra.mxu0 0.0
    %1394 = vmatprep.subr.mxu0 0.0
    %1395 = vmatpush2.msra.mxu0 0.0
    %1396 = vmatprep.subr.mxu0 0.0
    %1397 = vmatpush2.msra.mxu0 0.0
    %1398 = vmatprep.subr.mxu0 0.0
    %1399 = vmatpush2.msra.mxu0 0.0
    %1400 = vmatprep.subr.mxu0 0.0
    %1401 = vmatpush2.msra.mxu0 0.0
    %1402 = vmatprep.subr.mxu0 0.0
    %1403 = vmatpush2.msra.mxu0 0.0
    %1404 = vmatprep.subr.mxu0 0.0
    %1405 = vmatpush2.msra.mxu0 0.0
    %1406 = vmatprep.subr.mxu0 0.0
    %1407 = vmatpush2.msra.mxu0 0.0
    %1408 = vmatprep.subr.mxu0 0.0
    %1409 = vmatpush2.msra.mxu0 0.0
    %1410 = vmatprep.subr.mxu0 0.0
    %1411 = vmatpush2.msra.mxu0 0.0
    %1412 = vmatprep.subr.mxu0 0.0
    %1413 = vmatpush2.msra.mxu0 0.0
    %1414 = vmatprep.subr.mxu0 0.0
    %1415 = vmatpush2.msra.mxu0 0.0
    %1416 = vmatprep.subr.mxu0 0.0
    %1417 = vmatpush2.msra.mxu0 0.0
    %1418 = vmatprep.mubr.f32.mxu0 0.0
    %1419 = vmatmul.mubr.f32.gmra.mxu0 %v1349
    %v1420 = vpop.f32.mrf.mxu0
    %v1421 = vadd.f32 0.0, %v1420
    %v1422 = vpop.f32.mrf.mxu0
    %1423 = vmatprep.mubr.f32.mxu0 0.0
    %1424 = vmatmul.mubr.f32.gmra.mxu0 %v1352
    %v1425 = vpop.f32.mrf.mxu0
    %v1426 = vadd.f32 0.0, %v1425
    %v1427 = vpop.f32.mrf.mxu0
    %1428 = vdwg.mxu0
    %v1429 = vpack.c.bf16 %v1426, %v1421
    %v1434 = vunpack.c.l.b16 %v450
    %v1435 = vunpack.c.l.b16 %v451
    %v1436 = vunpack.c.l.b16 %v452
    %v1437 = vunpack.c.l.b16 %v453
    %v1438 = vpack.c.b16 %v1435, %v1434
    %v1439 = vpack.c.b16 %v1437, %v1436
    %v1443 = vsel %vm454, %v1429, 0
    %1445 = vmatprep.subr.bf16.mxu0 0
    %1446 = vmatpush1.bf16.msra.mxu0 0
    %1447 = vmatprep.subr.bf16.mxu0 0
    %1448 = vmatpush1.bf16.msra.mxu0 0
    %1449 = vmatprep.subr.bf16.mxu0 0
    %1450 = vmatpush1.bf16.msra.mxu0 0
    %1451 = vmatprep.subr.bf16.mxu0 0
    %1452 = vmatpush1.bf16.msra.mxu0 0
    %1453 = vmatprep.subr.bf16.mxu0 0
    %1454 = vmatpush1.bf16.msra.mxu0 0
    %1455 = vmatprep.subr.bf16.mxu0 0
    %1456 = vmatpush1.bf16.msra.mxu0 0
    %1457 = vmatprep.subr.bf16.mxu0 0
    %1458 = vmatpush1.bf16.msra.mxu0 %v1439
    %1459 = vmatprep.subr.bf16.mxu0 0
    %1460 = vmatpush1.bf16.msra.mxu0 %v1438
    %1461 = vmatprep.subr.bf16.mxu0 0
    %1462 = vmatpush2.bf16.msra.mxu0 0
    %1463 = vmatprep.subr.bf16.mxu0 0
    %1464 = vmatpush2.bf16.msra.mxu0 0
    %1465 = vmatprep.subr.bf16.mxu0 0
    %1466 = vmatpush2.bf16.msra.mxu0 0
    %1467 = vmatprep.subr.bf16.mxu0 0
    %1468 = vmatpush2.bf16.msra.mxu0 0
    %1469 = vmatprep.subr.bf16.mxu0 0
    %1470 = vmatpush2.bf16.msra.mxu0 0
    %1471 = vmatprep.subr.bf16.mxu0 0
    %1472 = vmatpush2.bf16.msra.mxu0 0
    %1473 = vmatprep.subr.bf16.mxu0 0
    %1474 = vmatpush2.bf16.msra.mxu0 0
    %1475 = vmatprep.subr.bf16.mxu0 0
    %1476 = vmatpush2.bf16.msra.mxu0 0
    %1477 = vmatprep.mubr.bf16.mxu0 0
    %1478 = vmatmul.mubr.bf16.gmra.mxu0 %v1443
    %v1479 = vpop.f32.mrf.mxu0
    %v1480 = vadd.f32 0.0, %v1479
    %v1481 = vpop.f32.mrf.mxu0
    %v1482 = vpop.f32.mrf.mxu0
    %v1483 = vadd.f32 0.0, %v1482
    %v1484 = vpop.f32.mrf.mxu0
    %1485 = vdwg.mxu0
    %v1486 = vadd.f32 %v1225, %v1480
    %v1487 = vadd.f32 %v1226, %v1483
    %v1489 = vsel %vm454, %v420, 0
    %v1492 = vsel %vm454, %v421, 0
    %v1495 = vsel %vm454, %v428, 0
    %v1498 = vsel %vm454, %v429, 0
    %1500 = vmatprep.subr.mxu0 0.0
    %1501 = vmatpush1.xpose.msra.mxu0 0.0
    %1502 = vmatprep.subr.mxu0 0.0
    %1503 = vmatpush1.xpose.msra.mxu0 0.0
    %1504 = vmatprep.subr.mxu0 0.0
    %1505 = vmatpush1.xpose.msra.mxu0 0.0
    %1506 = vmatprep.subr.mxu0 0.0
    %1507 = vmatpush1.xpose.msra.mxu0 0.0
    %1508 = vmatprep.subr.mxu0 0.0
    %1509 = vmatpush1.xpose.msra.mxu0 0.0
    %1510 = vmatprep.subr.mxu0 0.0
    %1511 = vmatpush1.xpose.msra.mxu0 0.0
    %1512 = vmatprep.subr.mxu0 0.0
    %1513 = vmatpush1.xpose.msra.mxu0 0.0
    %1514 = vmatprep.subr.mxu0 0.0
    %1515 = vmatpush1.xpose.msra.mxu0 0.0
    %1516 = vmatprep.subr.mxu0 0.0
    %1517 = vmatpush1.xpose.msra.mxu0 0.0
    %1518 = vmatprep.subr.mxu0 0.0
    %1519 = vmatpush1.xpose.msra.mxu0 0.0
    %1520 = vmatprep.subr.mxu0 0.0
    %1521 = vmatpush1.xpose.msra.mxu0 0.0
    %1522 = vmatprep.subr.mxu0 0.0
    %1523 = vmatpush1.xpose.msra.mxu0 0.0
    %1524 = vmatprep.subr.mxu0 0.0
    %1525 = vmatpush1.xpose.msra.mxu0 0.0
    %1526 = vmatprep.subr.mxu0 0.0
    %1527 = vmatpush1.xpose.msra.mxu0 0.0
    %1528 = vmatprep.subr.mxu0 0.0
    %1529 = vmatpush1.xpose.msra.mxu0 %v1498
    %1530 = vmatprep.subr.mxu0 0.0
    %1531 = vmatpush1.xpose.msra.mxu0 %v1495
    %1532 = vmatprep.subr.mxu0 0.0
    %1533 = vmatpush2.xpose.msra.mxu0 0.0
    %1534 = vmatprep.subr.mxu0 0.0
    %1535 = vmatpush2.xpose.msra.mxu0 0.0
    %1536 = vmatprep.subr.mxu0 0.0
    %1537 = vmatpush2.xpose.msra.mxu0 0.0
    %1538 = vmatprep.subr.mxu0 0.0
    %1539 = vmatpush2.xpose.msra.mxu0 0.0
    %1540 = vmatprep.subr.mxu0 0.0
    %1541 = vmatpush2.xpose.msra.mxu0 0.0
    %1542 = vmatprep.subr.mxu0 0.0
    %1543 = vmatpush2.xpose.msra.mxu0 0.0
    %1544 = vmatprep.subr.mxu0 0.0
    %1545 = vmatpush2.xpose.msra.mxu0 0.0
    %1546 = vmatprep.subr.mxu0 0.0
    %1547 = vmatpush2.xpose.msra.mxu0 0.0
    %1548 = vmatprep.subr.mxu0 0.0
    %1549 = vmatpush2.xpose.msra.mxu0 0.0
    %1550 = vmatprep.subr.mxu0 0.0
    %1551 = vmatpush2.xpose.msra.mxu0 0.0
    %1552 = vmatprep.subr.mxu0 0.0
    %1553 = vmatpush2.xpose.msra.mxu0 0.0
    %1554 = vmatprep.subr.mxu0 0.0
    %1555 = vmatpush2.xpose.msra.mxu0 0.0
    %1556 = vmatprep.subr.mxu0 0.0
    %1557 = vmatpush2.xpose.msra.mxu0 0.0
    %1558 = vmatprep.subr.mxu0 0.0
    %1559 = vmatpush2.xpose.msra.mxu0 0.0
    %1560 = vmatprep.subr.mxu0 0.0
    %1561 = vmatpush2.xpose.msra.mxu0 0.0
    %1562 = vmatprep.subr.mxu0 0.0
    %1563 = vmatpush2.xpose.msra.mxu0 0.0
    %1564 = vmatprep.mubr.f32.mxu0 0.0
    %1565 = vmatmul.mubr.f32.gmra.mxu0 %v1489
    %v1566 = vpop.f32.mrf.mxu0
    %v1567 = vadd.f32 0.0, %v1566
    %v1568 = vpop.f32.mrf.mxu0
    %1569 = vmatprep.mubr.f32.mxu0 0.0
    %1570 = vmatmul.mubr.f32.gmra.mxu0 %v1492
    %v1571 = vpop.f32.mrf.mxu0
    %v1572 = vadd.f32 0.0, %v1571
    %v1573 = vpop.f32.mrf.mxu0
    %1574 = vdwg.mxu0
    %v1575 = vmul.f32 %v1567, 0.17677669
    %v1576 = vmul.f32 %v1572, 0.17677669
    %v1577 = vsel %vm544, %v1575, -inf
    %1578 = vmax.xlane.f32.xlu0 %v1577
    %v1579 = vpop.xlane.xlu0 %1578
    %v1580 = vsel %vm544, %v1576, -inf
    %1581 = vmax.xlane.f32.xlu0 %v1580
    %v1582 = vpop.xlane.xlu0 %1581
    %v1583 = vsub.f32 %v1575, %v1579
    %v1584 = vsub.f32 %v1576, %v1582
    %v1585 = vmul.f32 %v1583, 1.442695
    %v1586 = vpow.pop %v1585
    %v1587 = vmul.f32 %v1584, 1.442695
    %v1588 = vpow.pop %v1587
    %v1589 = vsel %vm544, %v1586, 0.0
    %1590 = vadd.xlane.f32.xlu0 %v1589
    %v1591 = vpop.xlane.xlu0 %1590
    %v1592 = vsel %vm544, %v1588, 0.0
    %1593 = vadd.xlane.f32.xlu0 %v1592
    %v1594 = vpop.xlane.xlu0 %1593
    %v1595 = vrcp.pop %v1591
    %v1596 = vrcp.pop %v1594
    %v1597 = vmul.f32 %v1586, %v1595
    %v1598 = vmul.f32 %v1588, %v1596
    %v1600 = vsel %vm544, %v1597, 0
    %v1603 = vsel %vm544, %v1598, 0
    %1605 = vmatprep.subr.mxu0 0.0
    %1606 = vmatpush1.msra.mxu0 0.0
    %1607 = vmatprep.subr.mxu0 0.0
    %1608 = vmatpush1.msra.mxu0 0.0
    %1609 = vmatprep.subr.mxu0 0.0
    %1610 = vmatpush1.msra.mxu0 0.0
    %1611 = vmatprep.subr.mxu0 0.0
    %1612 = vmatpush1.msra.mxu0 0.0
    %1613 = vmatprep.subr.mxu0 0.0
    %1614 = vmatpush1.msra.mxu0 0.0
    %1615 = vmatprep.subr.mxu0 0.0
    %1616 = vmatpush1.msra.mxu0 0.0
    %1617 = vmatprep.subr.mxu0 0.0
    %1618 = vmatpush1.msra.mxu0 0.0
    %1619 = vmatprep.subr.mxu0 0.0
    %1620 = vmatpush1.msra.mxu0 0.0
    %1621 = vmatprep.subr.mxu0 0.0
    %1622 = vmatpush1.msra.mxu0 0.0
    %1623 = vmatprep.subr.mxu0 0.0
    %1624 = vmatpush1.msra.mxu0 0.0
    %1625 = vmatprep.subr.mxu0 0.0
    %1626 = vmatpush1.msra.mxu0 0.0
    %1627 = vmatprep.subr.mxu0 0.0
    %1628 = vmatpush1.msra.mxu0 0.0
    %1629 = vmatprep.subr.mxu0 0.0
    %1630 = vmatpush1.msra.mxu0 0.0
    %1631 = vmatprep.subr.mxu0 0.0
    %1632 = vmatpush1.msra.mxu0 0.0
    %1633 = vmatprep.subr.mxu0 0.0
    %1634 = vmatpush1.msra.mxu0 %v437
    %1635 = vmatprep.subr.mxu0 0.0
    %1636 = vmatpush1.msra.mxu0 %v436
    %1637 = vmatprep.subr.mxu0 0.0
    %1638 = vmatpush2.msra.mxu0 0.0
    %1639 = vmatprep.subr.mxu0 0.0
    %1640 = vmatpush2.msra.mxu0 0.0
    %1641 = vmatprep.subr.mxu0 0.0
    %1642 = vmatpush2.msra.mxu0 0.0
    %1643 = vmatprep.subr.mxu0 0.0
    %1644 = vmatpush2.msra.mxu0 0.0
    %1645 = vmatprep.subr.mxu0 0.0
    %1646 = vmatpush2.msra.mxu0 0.0
    %1647 = vmatprep.subr.mxu0 0.0
    %1648 = vmatpush2.msra.mxu0 0.0
    %1649 = vmatprep.subr.mxu0 0.0
    %1650 = vmatpush2.msra.mxu0 0.0
    %1651 = vmatprep.subr.mxu0 0.0
    %1652 = vmatpush2.msra.mxu0 0.0
    %1653 = vmatprep.subr.mxu0 0.0
    %1654 = vmatpush2.msra.mxu0 0.0
    %1655 = vmatprep.subr.mxu0 0.0
    %1656 = vmatpush2.msra.mxu0 0.0
    %1657 = vmatprep.subr.mxu0 0.0
    %1658 = vmatpush2.msra.mxu0 0.0
    %1659 = vmatprep.subr.mxu0 0.0
    %1660 = vmatpush2.msra.mxu0 0.0
    %1661 = vmatprep.subr.mxu0 0.0
    %1662 = vmatpush2.msra.mxu0 0.0
    %1663 = vmatprep.subr.mxu0 0.0
    %1664 = vmatpush2.msra.mxu0 0.0
    %1665 = vmatprep.subr.mxu0 0.0
    %1666 = vmatpush2.msra.mxu0 0.0
    %1667 = vmatprep.subr.mxu0 0.0
    %1668 = vmatpush2.msra.mxu0 0.0
    %1669 = vmatprep.mubr.f32.mxu0 0.0
    %1670 = vmatmul.mubr.f32.gmra.mxu0 %v1600
    %v1671 = vpop.f32.mrf.mxu0
    %v1672 = vadd.f32 0.0, %v1671
    %v1673 = vpop.f32.mrf.mxu0
    %1674 = vmatprep.mubr.f32.mxu0 0.0
    %1675 = vmatmul.mubr.f32.gmra.mxu0 %v1603
    %v1676 = vpop.f32.mrf.mxu0
    %v1677 = vadd.f32 0.0, %v1676
    %v1678 = vpop.f32.mrf.mxu0
    %1679 = vdwg.mxu0
    %v1680 = vpack.c.bf16 %v1677, %v1672
    %1681 = vrot.lane.b32.xlu0 %v420, 96
    %v1682 = vpop.permute.xlu0 %1681
    %1683 = vrot.lane.b32.xlu0 %v421, 96
    %v1684 = vpop.permute.xlu0 %1683
    %1685 = vrot.lane.b32.xlu0 %v428, 96
    %v1686 = vpop.permute.xlu0 %1685
    %1687 = vrot.lane.b32.xlu0 %v429, 96
    %v1688 = vpop.permute.xlu0 %1687
    %v1689 = vsel %vm454, %v1682, 0
    %v1691 = vsel %vm454, %v1684, 0
    %v1693 = vsel %vm454, %v1686, 0
    %v1695 = vsel %vm454, %v1688, 0
    %1697 = vmatprep.subr.mxu0 0.0
    %1698 = vmatpush1.xpose.msra.mxu0 0.0
    %1699 = vmatprep.subr.mxu0 0.0
    %1700 = vmatpush1.xpose.msra.mxu0 0.0
    %1701 = vmatprep.subr.mxu0 0.0
    %1702 = vmatpush1.xpose.msra.mxu0 0.0
    %1703 = vmatprep.subr.mxu0 0.0
    %1704 = vmatpush1.xpose.msra.mxu0 0.0
    %1705 = vmatprep.subr.mxu0 0.0
    %1706 = vmatpush1.xpose.msra.mxu0 0.0
    %1707 = vmatprep.subr.mxu0 0.0
    %1708 = vmatpush1.xpose.msra.mxu0 0.0
    %1709 = vmatprep.subr.mxu0 0.0
    %1710 = vmatpush1.xpose.msra.mxu0 0.0
    %1711 = vmatprep.subr.mxu0 0.0
    %1712 = vmatpush1.xpose.msra.mxu0 0.0
    %1713 = vmatprep.subr.mxu0 0.0
    %1714 = vmatpush1.xpose.msra.mxu0 0.0
    %1715 = vmatprep.subr.mxu0 0.0
    %1716 = vmatpush1.xpose.msra.mxu0 0.0
    %1717 = vmatprep.subr.mxu0 0.0
    %1718 = vmatpush1.xpose.msra.mxu0 0.0
    %1719 = vmatprep.subr.mxu0 0.0
    %1720 = vmatpush1.xpose.msra.mxu0 0.0
    %1721 = vmatprep.subr.mxu0 0.0
    %1722 = vmatpush1.xpose.msra.mxu0 0.0
    %1723 = vmatprep.subr.mxu0 0.0
    %1724 = vmatpush1.xpose.msra.mxu0 0.0
    %1725 = vmatprep.subr.mxu0 0.0
    %1726 = vmatpush1.xpose.msra.mxu0 %v1695
    %1727 = vmatprep.subr.mxu0 0.0
    %1728 = vmatpush1.xpose.msra.mxu0 %v1693
    %1729 = vmatprep.subr.mxu0 0.0
    %1730 = vmatpush2.xpose.msra.mxu0 0.0
    %1731 = vmatprep.subr.mxu0 0.0
    %1732 = vmatpush2.xpose.msra.mxu0 0.0
    %1733 = vmatprep.subr.mxu0 0.0
    %1734 = vmatpush2.xpose.msra.mxu0 0.0
    %1735 = vmatprep.subr.mxu0 0.0
    %1736 = vmatpush2.xpose.msra.mxu0 0.0
    %1737 = vmatprep.subr.mxu0 0.0
    %1738 = vmatpush2.xpose.msra.mxu0 0.0
    %1739 = vmatprep.subr.mxu0 0.0
    %1740 = vmatpush2.xpose.msra.mxu0 0.0
    %1741 = vmatprep.subr.mxu0 0.0
    %1742 = vmatpush2.xpose.msra.mxu0 0.0
    %1743 = vmatprep.subr.mxu0 0.0
    %1744 = vmatpush2.xpose.msra.mxu0 0.0
    %1745 = vmatprep.subr.mxu0 0.0
    %1746 = vmatpush2.xpose.msra.mxu0 0.0
    %1747 = vmatprep.subr.mxu0 0.0
    %1748 = vmatpush2.xpose.msra.mxu0 0.0
    %1749 = vmatprep.subr.mxu0 0.0
    %1750 = vmatpush2.xpose.msra.mxu0 0.0
    %1751 = vmatprep.subr.mxu0 0.0
    %1752 = vmatpush2.xpose.msra.mxu0 0.0
    %1753 = vmatprep.subr.mxu0 0.0
    %1754 = vmatpush2.xpose.msra.mxu0 0.0
    %1755 = vmatprep.subr.mxu0 0.0
    %1756 = vmatpush2.xpose.msra.mxu0 0.0
    %1757 = vmatprep.subr.mxu0 0.0
    %1758 = vmatpush2.xpose.msra.mxu0 0.0
    %1759 = vmatprep.subr.mxu0 0.0
    %1760 = vmatpush2.xpose.msra.mxu0 0.0
    %1761 = vmatprep.mubr.f32.mxu0 0.0
    %1762 = vmatmul.mubr.f32.gmra.mxu0 %v1689
    %v1763 = vpop.f32.mrf.mxu0
    %v1764 = vadd.f32 0.0, %v1763
    %v1765 = vpop.f32.mrf.mxu0
    %1766 = vmatprep.mubr.f32.mxu0 0.0
    %1767 = vmatmul.mubr.f32.gmra.mxu0 %v1691
    %v1768 = vpop.f32.mrf.mxu0
    %v1769 = vadd.f32 0.0, %v1768
    %v1770 = vpop.f32.mrf.mxu0
    %1771 = vdwg.mxu0
    %v1772 = vmul.f32 %v1764, 0.17677669
    %v1773 = vmul.f32 %v1769, 0.17677669
    %v1774 = vsel %vm544, %v1772, -inf
    %1775 = vmax.xlane.f32.xlu0 %v1774
    %v1776 = vpop.xlane.xlu0 %1775
    %v1777 = vsel %vm544, %v1773, -inf
    %1778 = vmax.xlane.f32.xlu0 %v1777
    %v1779 = vpop.xlane.xlu0 %1778
    %v1780 = vsub.f32 %v1772, %v1776
    %v1781 = vsub.f32 %v1773, %v1779
    %v1782 = vmul.f32 %v1780, 1.442695
    %v1783 = vpow.pop %v1782
    %v1784 = vmul.f32 %v1781, 1.442695
    %v1785 = vpow.pop %v1784
    %v1786 = vsel %vm544, %v1783, 0.0
    %1787 = vadd.xlane.f32.xlu0 %v1786
    %v1788 = vpop.xlane.xlu0 %1787
    %v1789 = vsel %vm544, %v1785, 0.0
    %1790 = vadd.xlane.f32.xlu0 %v1789
    %v1791 = vpop.xlane.xlu0 %1790
    %v1792 = vrcp.pop %v1788
    %v1793 = vrcp.pop %v1791
    %v1794 = vmul.f32 %v1783, %v1792
    %v1795 = vmul.f32 %v1785, %v1793
    %1798 = vrot.lane.b32.xlu0 %v436, 96
    %v1799 = vpop.permute.xlu0 %1798
    %1800 = vrot.lane.b32.xlu0 %v437, 96
    %v1801 = vpop.permute.xlu0 %1800
    %v1805 = vsel %vm544, %v1794, 0
    %v1808 = vsel %vm544, %v1795, 0
    %1810 = vmatprep.subr.mxu0 0.0
    %1811 = vmatpush1.msra.mxu0 0.0
    %1812 = vmatprep.subr.mxu0 0.0
    %1813 = vmatpush1.msra.mxu0 0.0
    %1814 = vmatprep.subr.mxu0 0.0
    %1815 = vmatpush1.msra.mxu0 0.0
    %1816 = vmatprep.subr.mxu0 0.0
    %1817 = vmatpush1.msra.mxu0 0.0
    %1818 = vmatprep.subr.mxu0 0.0
    %1819 = vmatpush1.msra.mxu0 0.0
    %1820 = vmatprep.subr.mxu0 0.0
    %1821 = vmatpush1.msra.mxu0 0.0
    %1822 = vmatprep.subr.mxu0 0.0
    %1823 = vmatpush1.msra.mxu0 0.0
    %1824 = vmatprep.subr.mxu0 0.0
    %1825 = vmatpush1.msra.mxu0 0.0
    %1826 = vmatprep.subr.mxu0 0.0
    %1827 = vmatpush1.msra.mxu0 0.0
    %1828 = vmatprep.subr.mxu0 0.0
    %1829 = vmatpush1.msra.mxu0 0.0
    %1830 = vmatprep.subr.mxu0 0.0
    %1831 = vmatpush1.msra.mxu0 0.0
    %1832 = vmatprep.subr.mxu0 0.0
    %1833 = vmatpush1.msra.mxu0 0.0
    %1834 = vmatprep.subr.mxu0 0.0
    %1835 = vmatpush1.msra.mxu0 0.0
    %1836 = vmatprep.subr.mxu0 0.0
    %1837 = vmatpush1.msra.mxu0 0.0
    %1838 = vmatprep.subr.mxu0 0.0
    %1839 = vmatpush1.msra.mxu0 %v1801
    %1840 = vmatprep.subr.mxu0 0.0
    %1841 = vmatpush1.msra.mxu0 %v1799
    %1842 = vmatprep.subr.mxu0 0.0
    %1843 = vmatpush2.msra.mxu0 0.0
    %1844 = vmatprep.subr.mxu0 0.0
    %1845 = vmatpush2.msra.mxu0 0.0
    %1846 = vmatprep.subr.mxu0 0.0
    %1847 = vmatpush2.msra.mxu0 0.0
    %1848 = vmatprep.subr.mxu0 0.0
    %1849 = vmatpush2.msra.mxu0 0.0
    %1850 = vmatprep.subr.mxu0 0.0
    %1851 = vmatpush2.msra.mxu0 0.0
    %1852 = vmatprep.subr.mxu0 0.0
    %1853 = vmatpush2.msra.mxu0 0.0
    %1854 = vmatprep.subr.mxu0 0.0
    %1855 = vmatpush2.msra.mxu0 0.0
    %1856 = vmatprep.subr.mxu0 0.0
    %1857 = vmatpush2.msra.mxu0 0.0
    %1858 = vmatprep.subr.mxu0 0.0
    %1859 = vmatpush2.msra.mxu0 0.0
    %1860 = vmatprep.subr.mxu0 0.0
    %1861 = vmatpush2.msra.mxu0 0.0
    %1862 = vmatprep.subr.mxu0 0.0
    %1863 = vmatpush2.msra.mxu0 0.0
    %1864 = vmatprep.subr.mxu0 0.0
    %1865 = vmatpush2.msra.mxu0 0.0
    %1866 = vmatprep.subr.mxu0 0.0
    %1867 = vmatpush2.msra.mxu0 0.0
    %1868 = vmatprep.subr.mxu0 0.0
    %1869 = vmatpush2.msra.mxu0 0.0
    %1870 = vmatprep.subr.mxu0 0.0
    %1871 = vmatpush2.msra.mxu0 0.0
    %1872 = vmatprep.subr.mxu0 0.0
    %1873 = vmatpush2.msra.mxu0 0.0
    %1874 = vmatprep.mubr.f32.mxu0 0.0
    %1875 = vmatmul.mubr.f32.gmra.mxu0 %v1805
    %v1876 = vpop.f32.mrf.mxu0
    %v1877 = vadd.f32 0.0, %v1876
    %v1878 = vpop.f32.mrf.mxu0
    %1879 = vmatprep.mubr.f32.mxu0 0.0
    %1880 = vmatmul.mubr.f32.gmra.mxu0 %v1808
    %v1881 = vpop.f32.mrf.mxu0
    %v1882 = vadd.f32 0.0, %v1881
    %v1883 = vpop.f32.mrf.mxu0
    %1884 = vdwg.mxu0
    %v1885 = vpack.c.bf16 %v1882, %v1877
    %v1887 = vsel %vm454, %v1885, 0
    %1889 = vmatprep.subr.bf16.mxu0 0
    %1890 = vmatpush1.bf16.msra.mxu0 0
    %1891 = vmatprep.subr.bf16.mxu0 0
    %1892 = vmatpush1.bf16.msra.mxu0 0
    %1893 = vmatprep.subr.bf16.mxu0 0
    %1894 = vmatpush1.bf16.msra.mxu0 0
    %1895 = vmatprep.subr.bf16.mxu0 0
    %1896 = vmatpush1.bf16.msra.mxu0 0
    %1897 = vmatprep.subr.bf16.mxu0 0
    %1898 = vmatpush1.bf16.msra.mxu0 0
    %1899 = vmatprep.subr.bf16.mxu0 0
    %1900 = vmatpush1.bf16.msra.mxu0 0
    %1901 = vmatprep.subr.bf16.mxu0 0
    %1902 = vmatpush1.bf16.msra.mxu0 %v863
    %1903 = vmatprep.subr.bf16.mxu0 0
    %1904 = vmatpush1.bf16.msra.mxu0 %v862
    %1905 = vmatprep.subr.bf16.mxu0 0
    %1906 = vmatpush2.bf16.msra.mxu0 0
    %1907 = vmatprep.subr.bf16.mxu0 0
    %1908 = vmatpush2.bf16.msra.mxu0 0
    %1909 = vmatprep.subr.bf16.mxu0 0
    %1910 = vmatpush2.bf16.msra.mxu0 0
    %1911 = vmatprep.subr.bf16.mxu0 0
    %1912 = vmatpush2.bf16.msra.mxu0 0
    %1913 = vmatprep.subr.bf16.mxu0 0
    %1914 = vmatpush2.bf16.msra.mxu0 0
    %1915 = vmatprep.subr.bf16.mxu0 0
    %1916 = vmatpush2.bf16.msra.mxu0 0
    %1917 = vmatprep.subr.bf16.mxu0 0
    %1918 = vmatpush2.bf16.msra.mxu0 0
    %1919 = vmatprep.subr.bf16.mxu0 0
    %1920 = vmatpush2.bf16.msra.mxu0 0
    %1921 = vmatprep.mubr.bf16.mxu0 0
    %1922 = vmatmul.mubr.bf16.gmra.mxu0 %v1887
    %v1923 = vpop.f32.mrf.mxu0
    %v1924 = vadd.f32 0.0, %v1923
    %v1925 = vpop.f32.mrf.mxu0
    %v1926 = vpop.f32.mrf.mxu0
    %v1927 = vadd.f32 0.0, %v1926
    %v1928 = vpop.f32.mrf.mxu0
    %1929 = vdwg.mxu0
    %v1931 = vsel %vm454, %v1680, 0
    %1933 = vmatprep.subr.bf16.mxu0 0
    %1934 = vmatpush1.bf16.msra.mxu0 0
    %1935 = vmatprep.subr.bf16.mxu0 0
    %1936 = vmatpush1.bf16.msra.mxu0 0
    %1937 = vmatprep.subr.bf16.mxu0 0
    %1938 = vmatpush1.bf16.msra.mxu0 0
    %1939 = vmatprep.subr.bf16.mxu0 0
    %1940 = vmatpush1.bf16.msra.mxu0 0
    %1941 = vmatprep.subr.bf16.mxu0 0
    %1942 = vmatpush1.bf16.msra.mxu0 0
    %1943 = vmatprep.subr.bf16.mxu0 0
    %1944 = vmatpush1.bf16.msra.mxu0 0
    %1945 = vmatprep.subr.bf16.mxu0 0
    %1946 = vmatpush1.bf16.msra.mxu0 %v919
    %1947 = vmatprep.subr.bf16.mxu0 0
    %1948 = vmatpush1.bf16.msra.mxu0 %v918
    %1949 = vmatprep.subr.bf16.mxu0 0
    %1950 = vmatpush2.bf16.msra.mxu0 0
    %1951 = vmatprep.subr.bf16.mxu0 0
    %1952 = vmatpush2.bf16.msra.mxu0 0
    %1953 = vmatprep.subr.bf16.mxu0 0
    %1954 = vmatpush2.bf16.msra.mxu0 0
    %1955 = vmatprep.subr.bf16.mxu0 0
    %1956 = vmatpush2.bf16.msra.mxu0 0
    %1957 = vmatprep.subr.bf16.mxu0 0
    %1958 = vmatpush2.bf16.msra.mxu0 0
    %1959 = vmatprep.subr.bf16.mxu0 0
    %1960 = vmatpush2.bf16.msra.mxu0 0
    %1961 = vmatprep.subr.bf16.mxu0 0
    %1962 = vmatpush2.bf16.msra.mxu0 0
    %1963 = vmatprep.subr.bf16.mxu0 0
    %1964 = vmatpush2.bf16.msra.mxu0 0
    %1965 = vmatprep.mubr.bf16.mxu0 0
    %1966 = vmatmul.mubr.bf16.gmra.mxu0 %v1931
    %v1967 = vpop.f32.mrf.mxu0
    %v1968 = vadd.f32 %v1924, %v1967
    %v1969 = vpop.f32.mrf.mxu0
    %v1970 = vpop.f32.mrf.mxu0
    %v1971 = vadd.f32 %v1927, %v1970
    %v1972 = vpop.f32.mrf.mxu0
    %1973 = vdwg.mxu0
    %1974 = vrot.lane.b32.xlu0 %v420, 64
    %v1975 = vpop.permute.xlu0 %1974
    %1976 = vrot.lane.b32.xlu0 %v421, 64
    %v1977 = vpop.permute.xlu0 %1976
    %1978 = vrot.lane.b32.xlu0 %v428, 64
    %v1979 = vpop.permute.xlu0 %1978
    %1980 = vrot.lane.b32.xlu0 %v429, 64
    %v1981 = vpop.permute.xlu0 %1980
    %v1982 = vsel %vm454, %v1975, 0
    %v1984 = vsel %vm454, %v1977, 0
    %v1986 = vsel %vm454, %v1979, 0
    %v1988 = vsel %vm454, %v1981, 0
    %1990 = vmatprep.subr.mxu0 0.0
    %1991 = vmatpush1.xpose.msra.mxu0 0.0
    %1992 = vmatprep.subr.mxu0 0.0
    %1993 = vmatpush1.xpose.msra.mxu0 0.0
    %1994 = vmatprep.subr.mxu0 0.0
    %1995 = vmatpush1.xpose.msra.mxu0 0.0
    %1996 = vmatprep.subr.mxu0 0.0
    %1997 = vmatpush1.xpose.msra.mxu0 0.0
    %1998 = vmatprep.subr.mxu0 0.0
    %1999 = vmatpush1.xpose.msra.mxu0 0.0
    %2000 = vmatprep.subr.mxu0 0.0
    %2001 = vmatpush1.xpose.msra.mxu0 0.0
    %2002 = vmatprep.subr.mxu0 0.0
    %2003 = vmatpush1.xpose.msra.mxu0 0.0
    %2004 = vmatprep.subr.mxu0 0.0
    %2005 = vmatpush1.xpose.msra.mxu0 0.0
    %2006 = vmatprep.subr.mxu0 0.0
    %2007 = vmatpush1.xpose.msra.mxu0 0.0
    %2008 = vmatprep.subr.mxu0 0.0
    %2009 = vmatpush1.xpose.msra.mxu0 0.0
    %2010 = vmatprep.subr.mxu0 0.0
    %2011 = vmatpush1.xpose.msra.mxu0 0.0
    %2012 = vmatprep.subr.mxu0 0.0
    %2013 = vmatpush1.xpose.msra.mxu0 0.0
    %2014 = vmatprep.subr.mxu0 0.0
    %2015 = vmatpush1.xpose.msra.mxu0 0.0
    %2016 = vmatprep.subr.mxu0 0.0
    %2017 = vmatpush1.xpose.msra.mxu0 0.0
    %2018 = vmatprep.subr.mxu0 0.0
    %2019 = vmatpush1.xpose.msra.mxu0 %v1988
    %2020 = vmatprep.subr.mxu0 0.0
    %2021 = vmatpush1.xpose.msra.mxu0 %v1986
    %2022 = vmatprep.subr.mxu0 0.0
    %2023 = vmatpush2.xpose.msra.mxu0 0.0
    %2024 = vmatprep.subr.mxu0 0.0
    %2025 = vmatpush2.xpose.msra.mxu0 0.0
    %2026 = vmatprep.subr.mxu0 0.0
    %2027 = vmatpush2.xpose.msra.mxu0 0.0
    %2028 = vmatprep.subr.mxu0 0.0
    %2029 = vmatpush2.xpose.msra.mxu0 0.0
    %2030 = vmatprep.subr.mxu0 0.0
    %2031 = vmatpush2.xpose.msra.mxu0 0.0
    %2032 = vmatprep.subr.mxu0 0.0
    %2033 = vmatpush2.xpose.msra.mxu0 0.0
    %2034 = vmatprep.subr.mxu0 0.0
    %2035 = vmatpush2.xpose.msra.mxu0 0.0
    %2036 = vmatprep.subr.mxu0 0.0
    %2037 = vmatpush2.xpose.msra.mxu0 0.0
    %2038 = vmatprep.subr.mxu0 0.0
    %2039 = vmatpush2.xpose.msra.mxu0 0.0
    %2040 = vmatprep.subr.mxu0 0.0
    %2041 = vmatpush2.xpose.msra.mxu0 0.0
    %2042 = vmatprep.subr.mxu0 0.0
    %2043 = vmatpush2.xpose.msra.mxu0 0.0
    %2044 = vmatprep.subr.mxu0 0.0
    %2045 = vmatpush2.xpose.msra.mxu0 0.0
    %2046 = vmatprep.subr.mxu0 0.0
    %2047 = vmatpush2.xpose.msra.mxu0 0.0
    %2048 = vmatprep.subr.mxu0 0.0
    %2049 = vmatpush2.xpose.msra.mxu0 0.0
    %2050 = vmatprep.subr.mxu0 0.0
    %2051 = vmatpush2.xpose.msra.mxu0 0.0
    %2052 = vmatprep.subr.mxu0 0.0
    %2053 = vmatpush2.xpose.msra.mxu0 0.0
    %2054 = vmatprep.mubr.f32.mxu0 0.0
    %2055 = vmatmul.mubr.f32.gmra.mxu0 %v1982
    %v2056 = vpop.f32.mrf.mxu0
    %v2057 = vadd.f32 0.0, %v2056
    %v2058 = vpop.f32.mrf.mxu0
    %2059 = vmatprep.mubr.f32.mxu0 0.0
    %2060 = vmatmul.mubr.f32.gmra.mxu0 %v1984
    %v2061 = vpop.f32.mrf.mxu0
    %v2062 = vadd.f32 0.0, %v2061
    %v2063 = vpop.f32.mrf.mxu0
    %2064 = vdwg.mxu0
    %v2065 = vmul.f32 %v2057, 0.17677669
    %v2066 = vmul.f32 %v2062, 0.17677669
    %v2067 = vsel %vm544, %v2065, -inf
    %2068 = vmax.xlane.f32.xlu0 %v2067
    %v2069 = vpop.xlane.xlu0 %2068
    %v2070 = vsel %vm544, %v2066, -inf
    %2071 = vmax.xlane.f32.xlu0 %v2070
    %v2072 = vpop.xlane.xlu0 %2071
    %v2073 = vsub.f32 %v2065, %v2069
    %v2074 = vsub.f32 %v2066, %v2072
    %v2075 = vmul.f32 %v2073, 1.442695
    %v2076 = vpow.pop %v2075
    %v2077 = vmul.f32 %v2074, 1.442695
    %v2078 = vpow.pop %v2077
    %v2079 = vsel %vm544, %v2076, 0.0
    %2080 = vadd.xlane.f32.xlu0 %v2079
    %v2081 = vpop.xlane.xlu0 %2080
    %v2082 = vsel %vm544, %v2078, 0.0
    %2083 = vadd.xlane.f32.xlu0 %v2082
    %v2084 = vpop.xlane.xlu0 %2083
    %v2085 = vrcp.pop %v2081
    %v2086 = vrcp.pop %v2084
    %v2087 = vmul.f32 %v2076, %v2085
    %v2088 = vmul.f32 %v2078, %v2086
    %2089 = vrot.lane.b32.xlu0 %v436, 64
    %v2090 = vpop.permute.xlu0 %2089
    %2091 = vrot.lane.b32.xlu0 %v437, 64
    %v2092 = vpop.permute.xlu0 %2091
    %v2096 = vsel %vm544, %v2087, 0
    %v2099 = vsel %vm544, %v2088, 0
    %2101 = vmatprep.subr.mxu0 0.0
    %2102 = vmatpush1.msra.mxu0 0.0
    %2103 = vmatprep.subr.mxu0 0.0
    %2104 = vmatpush1.msra.mxu0 0.0
    %2105 = vmatprep.subr.mxu0 0.0
    %2106 = vmatpush1.msra.mxu0 0.0
    %2107 = vmatprep.subr.mxu0 0.0
    %2108 = vmatpush1.msra.mxu0 0.0
    %2109 = vmatprep.subr.mxu0 0.0
    %2110 = vmatpush1.msra.mxu0 0.0
    %2111 = vmatprep.subr.mxu0 0.0
    %2112 = vmatpush1.msra.mxu0 0.0
    %2113 = vmatprep.subr.mxu0 0.0
    %2114 = vmatpush1.msra.mxu0 0.0
    %2115 = vmatprep.subr.mxu0 0.0
    %2116 = vmatpush1.msra.mxu0 0.0
    %2117 = vmatprep.subr.mxu0 0.0
    %2118 = vmatpush1.msra.mxu0 0.0
    %2119 = vmatprep.subr.mxu0 0.0
    %2120 = vmatpush1.msra.mxu0 0.0
    %2121 = vmatprep.subr.mxu0 0.0
    %2122 = vmatpush1.msra.mxu0 0.0
    %2123 = vmatprep.subr.mxu0 0.0
    %2124 = vmatpush1.msra.mxu0 0.0
    %2125 = vmatprep.subr.mxu0 0.0
    %2126 = vmatpush1.msra.mxu0 0.0
    %2127 = vmatprep.subr.mxu0 0.0
    %2128 = vmatpush1.msra.mxu0 0.0
    %2129 = vmatprep.subr.mxu0 0.0
    %2130 = vmatpush1.msra.mxu0 %v2092
    %2131 = vmatprep.subr.mxu0 0.0
    %2132 = vmatpush1.msra.mxu0 %v2090
    %2133 = vmatprep.subr.mxu0 0.0
    %2134 = vmatpush2.msra.mxu0 0.0
    %2135 = vmatprep.subr.mxu0 0.0
    %2136 = vmatpush2.msra.mxu0 0.0
    %2137 = vmatprep.subr.mxu0 0.0
    %2138 = vmatpush2.msra.mxu0 0.0
    %2139 = vmatprep.subr.mxu0 0.0
    %2140 = vmatpush2.msra.mxu0 0.0
    %2141 = vmatprep.subr.mxu0 0.0
    %2142 = vmatpush2.msra.mxu0 0.0
    %2143 = vmatprep.subr.mxu0 0.0
    %2144 = vmatpush2.msra.mxu0 0.0
    %2145 = vmatprep.subr.mxu0 0.0
    %2146 = vmatpush2.msra.mxu0 0.0
    %2147 = vmatprep.subr.mxu0 0.0
    %2148 = vmatpush2.msra.mxu0 0.0
    %2149 = vmatprep.subr.mxu0 0.0
    %2150 = vmatpush2.msra.mxu0 0.0
    %2151 = vmatprep.subr.mxu0 0.0
    %2152 = vmatpush2.msra.mxu0 0.0
    %2153 = vmatprep.subr.mxu0 0.0
    %2154 = vmatpush2.msra.mxu0 0.0
    %2155 = vmatprep.subr.mxu0 0.0
    %2156 = vmatpush2.msra.mxu0 0.0
    %2157 = vmatprep.subr.mxu0 0.0
    %2158 = vmatpush2.msra.mxu0 0.0
    %2159 = vmatprep.subr.mxu0 0.0
    %2160 = vmatpush2.msra.mxu0 0.0
    %2161 = vmatprep.subr.mxu0 0.0
    %2162 = vmatpush2.msra.mxu0 0.0
    %2163 = vmatprep.subr.mxu0 0.0
    %2164 = vmatpush2.msra.mxu0 0.0
    %2165 = vmatprep.mubr.f32.mxu0 0.0
    %2166 = vmatmul.mubr.f32.gmra.mxu0 %v2096
    %v2167 = vpop.f32.mrf.mxu0
    %v2168 = vadd.f32 0.0, %v2167
    %v2169 = vpop.f32.mrf.mxu0
    %2170 = vmatprep.mubr.f32.mxu0 0.0
    %2171 = vmatmul.mubr.f32.gmra.mxu0 %v2099
    %v2172 = vpop.f32.mrf.mxu0
    %v2173 = vadd.f32 0.0, %v2172
    %v2174 = vpop.f32.mrf.mxu0
    %2175 = vdwg.mxu0
    %v2176 = vpack.c.bf16 %v2173, %v2168
    %v2178 = vsel %vm454, %v2176, 0
    %2180 = vmatprep.subr.bf16.mxu0 0
    %2181 = vmatpush1.bf16.msra.mxu0 0
    %2182 = vmatprep.subr.bf16.mxu0 0
    %2183 = vmatpush1.bf16.msra.mxu0 0
    %2184 = vmatprep.subr.bf16.mxu0 0
    %2185 = vmatpush1.bf16.msra.mxu0 0
    %2186 = vmatprep.subr.bf16.mxu0 0
    %2187 = vmatpush1.bf16.msra.mxu0 0
    %2188 = vmatprep.subr.bf16.mxu0 0
    %2189 = vmatpush1.bf16.msra.mxu0 0
    %2190 = vmatprep.subr.bf16.mxu0 0
    %2191 = vmatpush1.bf16.msra.mxu0 0
    %2192 = vmatprep.subr.bf16.mxu0 0
    %2193 = vmatpush1.bf16.msra.mxu0 %v1178
    %2194 = vmatprep.subr.bf16.mxu0 0
    %2195 = vmatpush1.bf16.msra.mxu0 %v1177
    %2196 = vmatprep.subr.bf16.mxu0 0
    %2197 = vmatpush2.bf16.msra.mxu0 0
    %2198 = vmatprep.subr.bf16.mxu0 0
    %2199 = vmatpush2.bf16.msra.mxu0 0
    %2200 = vmatprep.subr.bf16.mxu0 0
    %2201 = vmatpush2.bf16.msra.mxu0 0
    %2202 = vmatprep.subr.bf16.mxu0 0
    %2203 = vmatpush2.bf16.msra.mxu0 0
    %2204 = vmatprep.subr.bf16.mxu0 0
    %2205 = vmatpush2.bf16.msra.mxu0 0
    %2206 = vmatprep.subr.bf16.mxu0 0
    %2207 = vmatpush2.bf16.msra.mxu0 0
    %2208 = vmatprep.subr.bf16.mxu0 0
    %2209 = vmatpush2.bf16.msra.mxu0 0
    %2210 = vmatprep.subr.bf16.mxu0 0
    %2211 = vmatpush2.bf16.msra.mxu0 0
    %2212 = vmatprep.mubr.bf16.mxu0 0
    %2213 = vmatmul.mubr.bf16.gmra.mxu0 %v2178
    %v2214 = vpop.f32.mrf.mxu0
    %v2215 = vadd.f32 0.0, %v2214
    %v2216 = vpop.f32.mrf.mxu0
    %v2217 = vpop.f32.mrf.mxu0
    %v2218 = vadd.f32 0.0, %v2217
    %v2219 = vpop.f32.mrf.mxu0
    %2220 = vdwg.mxu0
    %v2221 = vadd.f32 %v1968, %v2215
    %v2222 = vadd.f32 %v1971, %v2218
    %2223 = vrot.lane.b32.xlu0 %v420, 32
    %v2224 = vpop.permute.xlu0 %2223
    %2225 = vrot.lane.b32.xlu0 %v421, 32
    %v2226 = vpop.permute.xlu0 %2225
    %2227 = vrot.lane.b32.xlu0 %v428, 32
    %v2228 = vpop.permute.xlu0 %2227
    %2229 = vrot.lane.b32.xlu0 %v429, 32
    %v2230 = vpop.permute.xlu0 %2229
    %v2231 = vsel %vm454, %v2224, 0
    %v2233 = vsel %vm454, %v2226, 0
    %v2235 = vsel %vm454, %v2228, 0
    %v2237 = vsel %vm454, %v2230, 0
    %2239 = vmatprep.subr.mxu0 0.0
    %2240 = vmatpush1.xpose.msra.mxu0 0.0
    %2241 = vmatprep.subr.mxu0 0.0
    %2242 = vmatpush1.xpose.msra.mxu0 0.0
    %2243 = vmatprep.subr.mxu0 0.0
    %2244 = vmatpush1.xpose.msra.mxu0 0.0
    %2245 = vmatprep.subr.mxu0 0.0
    %2246 = vmatpush1.xpose.msra.mxu0 0.0
    %2247 = vmatprep.subr.mxu0 0.0
    %2248 = vmatpush1.xpose.msra.mxu0 0.0
    %2249 = vmatprep.subr.mxu0 0.0
    %2250 = vmatpush1.xpose.msra.mxu0 0.0
    %2251 = vmatprep.subr.mxu0 0.0
    %2252 = vmatpush1.xpose.msra.mxu0 0.0
    %2253 = vmatprep.subr.mxu0 0.0
    %2254 = vmatpush1.xpose.msra.mxu0 0.0
    %2255 = vmatprep.subr.mxu0 0.0
    %2256 = vmatpush1.xpose.msra.mxu0 0.0
    %2257 = vmatprep.subr.mxu0 0.0
    %2258 = vmatpush1.xpose.msra.mxu0 0.0
    %2259 = vmatprep.subr.mxu0 0.0
    %2260 = vmatpush1.xpose.msra.mxu0 0.0
    %2261 = vmatprep.subr.mxu0 0.0
    %2262 = vmatpush1.xpose.msra.mxu0 0.0
    %2263 = vmatprep.subr.mxu0 0.0
    %2264 = vmatpush1.xpose.msra.mxu0 0.0
    %2265 = vmatprep.subr.mxu0 0.0
    %2266 = vmatpush1.xpose.msra.mxu0 0.0
    %2267 = vmatprep.subr.mxu0 0.0
    %2268 = vmatpush1.xpose.msra.mxu0 %v2237
    %2269 = vmatprep.subr.mxu0 0.0
    %2270 = vmatpush1.xpose.msra.mxu0 %v2235
    %2271 = vmatprep.subr.mxu0 0.0
    %2272 = vmatpush2.xpose.msra.mxu0 0.0
    %2273 = vmatprep.subr.mxu0 0.0
    %2274 = vmatpush2.xpose.msra.mxu0 0.0
    %2275 = vmatprep.subr.mxu0 0.0
    %2276 = vmatpush2.xpose.msra.mxu0 0.0
    %2277 = vmatprep.subr.mxu0 0.0
    %2278 = vmatpush2.xpose.msra.mxu0 0.0
    %2279 = vmatprep.subr.mxu0 0.0
    %2280 = vmatpush2.xpose.msra.mxu0 0.0
    %2281 = vmatprep.subr.mxu0 0.0
    %2282 = vmatpush2.xpose.msra.mxu0 0.0
    %2283 = vmatprep.subr.mxu0 0.0
    %2284 = vmatpush2.xpose.msra.mxu0 0.0
    %2285 = vmatprep.subr.mxu0 0.0
    %2286 = vmatpush2.xpose.msra.mxu0 0.0
    %2287 = vmatprep.subr.mxu0 0.0
    %2288 = vmatpush2.xpose.msra.mxu0 0.0
    %2289 = vmatprep.subr.mxu0 0.0
    %2290 = vmatpush2.xpose.msra.mxu0 0.0
    %2291 = vmatprep.subr.mxu0 0.0
    %2292 = vmatpush2.xpose.msra.mxu0 0.0
    %2293 = vmatprep.subr.mxu0 0.0
    %2294 = vmatpush2.xpose.msra.mxu0 0.0
    %2295 = vmatprep.subr.mxu0 0.0
    %2296 = vmatpush2.xpose.msra.mxu0 0.0
    %2297 = vmatprep.subr.mxu0 0.0
    %2298 = vmatpush2.xpose.msra.mxu0 0.0
    %2299 = vmatprep.subr.mxu0 0.0
    %2300 = vmatpush2.xpose.msra.mxu0 0.0
    %2301 = vmatprep.subr.mxu0 0.0
    %2302 = vmatpush2.xpose.msra.mxu0 0.0
    %2303 = vmatprep.mubr.f32.mxu0 0.0
    %2304 = vmatmul.mubr.f32.gmra.mxu0 %v2231
    %v2305 = vpop.f32.mrf.mxu0
    %v2306 = vadd.f32 0.0, %v2305
    %v2307 = vpop.f32.mrf.mxu0
    %2308 = vmatprep.mubr.f32.mxu0 0.0
    %2309 = vmatmul.mubr.f32.gmra.mxu0 %v2233
    %v2310 = vpop.f32.mrf.mxu0
    %v2311 = vadd.f32 0.0, %v2310
    %v2312 = vpop.f32.mrf.mxu0
    %2313 = vdwg.mxu0
    %v2314 = vmul.f32 %v2306, 0.17677669
    %v2315 = vmul.f32 %v2311, 0.17677669
    %v2316 = vsel %vm544, %v2314, -inf
    %2317 = vmax.xlane.f32.xlu0 %v2316
    %v2318 = vpop.xlane.xlu0 %2317
    %v2319 = vsel %vm544, %v2315, -inf
    %2320 = vmax.xlane.f32.xlu0 %v2319
    %v2321 = vpop.xlane.xlu0 %2320
    %v2322 = vsub.f32 %v2314, %v2318
    %v2323 = vsub.f32 %v2315, %v2321
    %v2324 = vmul.f32 %v2322, 1.442695
    %v2325 = vpow.pop %v2324
    %v2326 = vmul.f32 %v2323, 1.442695
    %v2327 = vpow.pop %v2326
    %v2328 = vsel %vm544, %v2325, 0.0
    %2329 = vadd.xlane.f32.xlu0 %v2328
    %v2330 = vpop.xlane.xlu0 %2329
    %v2331 = vsel %vm544, %v2327, 0.0
    %2332 = vadd.xlane.f32.xlu0 %v2331
    %v2333 = vpop.xlane.xlu0 %2332
    %v2334 = vrcp.pop %v2330
    %v2335 = vrcp.pop %v2333
    %v2336 = vmul.f32 %v2325, %v2334
    %v2337 = vmul.f32 %v2327, %v2335
    %2338 = vrot.lane.b32.xlu0 %v436, 32
    %v2339 = vpop.permute.xlu0 %2338
    %2340 = vrot.lane.b32.xlu0 %v437, 32
    %v2341 = vpop.permute.xlu0 %2340
    %v2345 = vsel %vm544, %v2336, 0
    %v2348 = vsel %vm544, %v2337, 0
    %2350 = vmatprep.subr.mxu0 0.0
    %2351 = vmatpush1.msra.mxu0 0.0
    %2352 = vmatprep.subr.mxu0 0.0
    %2353 = vmatpush1.msra.mxu0 0.0
    %2354 = vmatprep.subr.mxu0 0.0
    %2355 = vmatpush1.msra.mxu0 0.0
    %2356 = vmatprep.subr.mxu0 0.0
    %2357 = vmatpush1.msra.mxu0 0.0
    %2358 = vmatprep.subr.mxu0 0.0
    %2359 = vmatpush1.msra.mxu0 0.0
    %2360 = vmatprep.subr.mxu0 0.0
    %2361 = vmatpush1.msra.mxu0 0.0
    %2362 = vmatprep.subr.mxu0 0.0
    %2363 = vmatpush1.msra.mxu0 0.0
    %2364 = vmatprep.subr.mxu0 0.0
    %2365 = vmatpush1.msra.mxu0 0.0
    %2366 = vmatprep.subr.mxu0 0.0
    %2367 = vmatpush1.msra.mxu0 0.0
    %2368 = vmatprep.subr.mxu0 0.0
    %2369 = vmatpush1.msra.mxu0 0.0
    %2370 = vmatprep.subr.mxu0 0.0
    %2371 = vmatpush1.msra.mxu0 0.0
    %2372 = vmatprep.subr.mxu0 0.0
    %2373 = vmatpush1.msra.mxu0 0.0
    %2374 = vmatprep.subr.mxu0 0.0
    %2375 = vmatpush1.msra.mxu0 0.0
    %2376 = vmatprep.subr.mxu0 0.0
    %2377 = vmatpush1.msra.mxu0 0.0
    %2378 = vmatprep.subr.mxu0 0.0
    %2379 = vmatpush1.msra.mxu0 %v2341
    %2380 = vmatprep.subr.mxu0 0.0
    %2381 = vmatpush1.msra.mxu0 %v2339
    %2382 = vmatprep.subr.mxu0 0.0
    %2383 = vmatpush2.msra.mxu0 0.0
    %2384 = vmatprep.subr.mxu0 0.0
    %2385 = vmatpush2.msra.mxu0 0.0
    %2386 = vmatprep.subr.mxu0 0.0
    %2387 = vmatpush2.msra.mxu0 0.0
    %2388 = vmatprep.subr.mxu0 0.0
    %2389 = vmatpush2.msra.mxu0 0.0
    %2390 = vmatprep.subr.mxu0 0.0
    %2391 = vmatpush2.msra.mxu0 0.0
    %2392 = vmatprep.subr.mxu0 0.0
    %2393 = vmatpush2.msra.mxu0 0.0
    %2394 = vmatprep.subr.mxu0 0.0
    %2395 = vmatpush2.msra.mxu0 0.0
    %2396 = vmatprep.subr.mxu0 0.0
    %2397 = vmatpush2.msra.mxu0 0.0
    %2398 = vmatprep.subr.mxu0 0.0
    %2399 = vmatpush2.msra.mxu0 0.0
    %2400 = vmatprep.subr.mxu0 0.0
    %2401 = vmatpush2.msra.mxu0 0.0
    %2402 = vmatprep.subr.mxu0 0.0
    %2403 = vmatpush2.msra.mxu0 0.0
    %2404 = vmatprep.subr.mxu0 0.0
    %2405 = vmatpush2.msra.mxu0 0.0
    %2406 = vmatprep.subr.mxu0 0.0
    %2407 = vmatpush2.msra.mxu0 0.0
    %2408 = vmatprep.subr.mxu0 0.0
    %2409 = vmatpush2.msra.mxu0 0.0
    %2410 = vmatprep.subr.mxu0 0.0
    %2411 = vmatpush2.msra.mxu0 0.0
    %2412 = vmatprep.subr.mxu0 0.0
    %2413 = vmatpush2.msra.mxu0 0.0
    %2414 = vmatprep.mubr.f32.mxu0 0.0
    %2415 = vmatmul.mubr.f32.gmra.mxu0 %v2345
    %v2416 = vpop.f32.mrf.mxu0
    %v2417 = vadd.f32 0.0, %v2416
    %v2418 = vpop.f32.mrf.mxu0
    %2419 = vmatprep.mubr.f32.mxu0 0.0
    %2420 = vmatmul.mubr.f32.gmra.mxu0 %v2348
    %v2421 = vpop.f32.mrf.mxu0
    %v2422 = vadd.f32 0.0, %v2421
    %v2423 = vpop.f32.mrf.mxu0
    %2424 = vdwg.mxu0
    %v2425 = vpack.c.bf16 %v2422, %v2417
    %v2427 = vsel %vm454, %v2425, 0
    %2429 = vmatprep.subr.bf16.mxu0 0
    %2430 = vmatpush1.bf16.msra.mxu0 0
    %2431 = vmatprep.subr.bf16.mxu0 0
    %2432 = vmatpush1.bf16.msra.mxu0 0
    %2433 = vmatprep.subr.bf16.mxu0 0
    %2434 = vmatpush1.bf16.msra.mxu0 0
    %2435 = vmatprep.subr.bf16.mxu0 0
    %2436 = vmatpush1.bf16.msra.mxu0 0
    %2437 = vmatprep.subr.bf16.mxu0 0
    %2438 = vmatpush1.bf16.msra.mxu0 0
    %2439 = vmatprep.subr.bf16.mxu0 0
    %2440 = vmatpush1.bf16.msra.mxu0 0
    %2441 = vmatprep.subr.bf16.mxu0 0
    %2442 = vmatpush1.bf16.msra.mxu0 %v1439
    %2443 = vmatprep.subr.bf16.mxu0 0
    %2444 = vmatpush1.bf16.msra.mxu0 %v1438
    %2445 = vmatprep.subr.bf16.mxu0 0
    %2446 = vmatpush2.bf16.msra.mxu0 0
    %2447 = vmatprep.subr.bf16.mxu0 0
    %2448 = vmatpush2.bf16.msra.mxu0 0
    %2449 = vmatprep.subr.bf16.mxu0 0
    %2450 = vmatpush2.bf16.msra.mxu0 0
    %2451 = vmatprep.subr.bf16.mxu0 0
    %2452 = vmatpush2.bf16.msra.mxu0 0
    %2453 = vmatprep.subr.bf16.mxu0 0
    %2454 = vmatpush2.bf16.msra.mxu0 0
    %2455 = vmatprep.subr.bf16.mxu0 0
    %2456 = vmatpush2.bf16.msra.mxu0 0
    %2457 = vmatprep.subr.bf16.mxu0 0
    %2458 = vmatpush2.bf16.msra.mxu0 0
    %2459 = vmatprep.subr.bf16.mxu0 0
    %2460 = vmatpush2.bf16.msra.mxu0 0
    %2461 = vmatprep.mubr.bf16.mxu0 0
    %2462 = vmatmul.mubr.bf16.gmra.mxu0 %v2427
    %v2463 = vpop.f32.mrf.mxu0
    %v2464 = vadd.f32 0.0, %v2463
    %v2465 = vpop.f32.mrf.mxu0
    %v2466 = vpop.f32.mrf.mxu0
    %v2467 = vadd.f32 0.0, %v2466
    %v2468 = vpop.f32.mrf.mxu0
    %2469 = vdwg.mxu0
    %v2470 = vadd.f32 %v2221, %v2464
    %v2471 = vadd.f32 %v2222, %v2467
    %v2472 = vlaneseq
    %v2473 = vshrl.u32 %v2472, 7
    %v2474 = vsub.s32 4, %v2473
    %v2475 = vrot.slane %v87, %v2474
    %v2476 = vadd.f32 %v1486, %v2475
    %v2477 = vadd.f32 %v1487, %v2475
    %v2478 = vadd.f32 %v2470, %v2475
    %v2479 = vadd.f32 %v2471, %v2475
    %v2480 = vadd.f32 %v83, %v2476
    %v2481 = vadd.f32 %v84, %v2477
    %v2482 = vadd.f32 %v85, %v2478
    %v2483 = vadd.f32 %v86, %v2479
    %2484 = vadd.xlane.f32.xlu0 %v2480
    %v2485 = vpop.xlane.xlu0 %2484
    %2486 = vadd.xlane.f32.xlu0 %v2481
    %v2487 = vpop.xlane.xlu0 %2486
    %2488 = vadd.xlane.f32.xlu0 %v2482
    %v2489 = vpop.xlane.xlu0 %2488
    %2490 = vadd.xlane.f32.xlu0 %v2483
    %v2491 = vpop.xlane.xlu0 %2490
    %v2492 = vmul.f32 %v2485, %v97
    %v2493 = vmul.f32 %v2487, %v97
    %v2494 = vmul.f32 %v2489, %v97
    %v2495 = vmul.f32 %v2491, %v97
    %v2496 = vsub.f32 %v2480, %v2492
    %v2497 = vsub.f32 %v2481, %v2493
    %v2498 = vsub.f32 %v2482, %v2494
    %v2499 = vsub.f32 %v2483, %v2495
    %v2500 = vmul.f32 %v2496, %v2496
    %v2501 = vmul.f32 %v2497, %v2497
    %v2502 = vmul.f32 %v2498, %v2498
    %v2503 = vmul.f32 %v2499, %v2499
    %2504 = vadd.xlane.f32.xlu0 %v2500
    %v2505 = vpop.xlane.xlu0 %2504
    %2506 = vadd.xlane.f32.xlu0 %v2501
    %v2507 = vpop.xlane.xlu0 %2506
    %2508 = vadd.xlane.f32.xlu0 %v2502
    %v2509 = vpop.xlane.xlu0 %2508
    %2510 = vadd.xlane.f32.xlu0 %v2503
    %v2511 = vpop.xlane.xlu0 %2510
    %v2512 = vmul.f32 %v2505, %v97
    %v2513 = vmul.f32 %v2507, %v97
    %v2514 = vmul.f32 %v2509, %v97
    %v2515 = vmul.f32 %v2511, %v97
    %v2516 = vadd.f32 %v2512, 1e-06
    %v2517 = vadd.f32 %v2513, 1e-06
    %v2518 = vadd.f32 %v2514, 1e-06
    %v2519 = vadd.f32 %v2515, 1e-06
    %v2520 = vrsqrt.pop %v2516
    %v2521 = vrsqrt.pop %v2517
    %v2522 = vrsqrt.pop %v2518
    %v2523 = vrsqrt.pop %v2519
    %v2524 = vmul.f32 %v2496, %v2520
    %v2525 = vmul.f32 %v2497, %v2521
    %v2526 = vmul.f32 %v2498, %v2522
    %v2527 = vmul.f32 %v2499, %v2523
    %v2528 = vlaneseq
    %v2529 = vshrl.u32 %v2528, 7
    %v2530 = vsub.s32 2, %v2529
    %v2531 = vrot.slane %v87, %v2530
    %v2532 = vmul.f32 %v2524, %v2531
    %v2533 = vmul.f32 %v2525, %v2531
    %v2534 = vmul.f32 %v2526, %v2531
    %v2535 = vmul.f32 %v2527, %v2531
    %v2536 = vlaneseq
    %v2537 = vshrl.u32 %v2536, 7
    %v2538 = vsub.s32 3, %v2537
    %v2539 = vrot.slane %v87, %v2538
    %v2540 = vadd.f32 %v2532, %v2539
    %v2541 = vadd.f32 %v2533, %v2539
    %v2542 = vadd.f32 %v2534, %v2539
    %v2543 = vadd.f32 %v2535, %v2539
    %v2544 = vpack.c.bf16 %v2541, %v2540
    %v2545 = vpack.c.bf16 %v2543, %v2542
    %v2546 = vld [vmem:[#allocation7] sm:$0xff]
    %v2547 = vld [vmem:[#allocation7 + $0x8] sm:$0xff]
    %v2548 = vld [vmem:[#allocation7 + $0x10] sm:$0xff]
    %v2549 = vld [vmem:[#allocation7 + $0x18] sm:$0xff]
    %v2550 = vld [vmem:[#allocation7 + $0x20] sm:$0xff]
    %v2551 = vld [vmem:[#allocation7 + $0x28] sm:$0xff]
    %v2552 = vld [vmem:[#allocation7 + $0x30] sm:$0xff]
    %v2553 = vld [vmem:[#allocation7 + $0x38] sm:$0xff]
    %v2554 = vld [vmem:[#allocation7 + $0x40] sm:$0xff]
    %v2555 = vld [vmem:[#allocation7 + $0x48] sm:$0xff]
    %v2556 = vld [vmem:[#allocation7 + $0x50] sm:$0xff]
    %v2557 = vld [vmem:[#allocation7 + $0x58] sm:$0xff]
    %v2558 = vld [vmem:[#allocation7 + $0x60] sm:$0xff]
    %v2559 = vld [vmem:[#allocation7 + $0x68] sm:$0xff]
    %v2560 = vld [vmem:[#allocation7 + $0x70] sm:$0xff]
    %v2561 = vld [vmem:[#allocation7 + $0x78] sm:$0xff]
    %v2562 = vld [vmem:[#allocation7 + $0x80] sm:$0xff]
    %v2563 = vld [vmem:[#allocation7 + $0x88] sm:$0xff]
    %v2564 = vld [vmem:[#allocation7 + $0x90] sm:$0xff]
    %v2565 = vld [vmem:[#allocation7 + $0x98] sm:$0xff]
    %v2566 = vld [vmem:[#allocation7 + $0xa0] sm:$0xff]
    %v2567 = vld [vmem:[#allocation7 + $0xa8] sm:$0xff]
    %v2568 = vld [vmem:[#allocation7 + $0xb0] sm:$0xff]
    %v2569 = vld [vmem:[#allocation7 + $0xb8] sm:$0xff]
    %v2570 = vld [vmem:[#allocation7 + $0xc0] sm:$0xff]
    %v2571 = vld [vmem:[#allocation7 + $0xc8] sm:$0xff]
    %v2572 = vld [vmem:[#allocation7 + $0xd0] sm:$0xff]
    %v2573 = vld [vmem:[#allocation7 + $0xd8] sm:$0xff]
    %v2574 = vld [vmem:[#allocation7 + $0xe0] sm:$0xff]
    %v2575 = vld [vmem:[#allocation7 + $0xe8] sm:$0xff]
    %v2576 = vld [vmem:[#allocation7 + $0xf0] sm:$0xff]
    %v2577 = vld [vmem:[#allocation7 + $0xf8] sm:$0xff]
    %v2578 = vld [vmem:[%s2] sm:$0xf]
    %v2580 = vlaneseq
    %v2581 = vshrl.u32 %v2580, 7
    %v2582 = vsub.s32 0, %v2581
    %v2583 = vrot.slane %v2578, %v2582
    %v2584 = vlaneseq
    %v2585 = vshrl.u32 %v2584, 7
    %v2586 = vsub.s32 1, %v2585
    %v2587 = vrot.slane %v2578, %v2586
    %v2588 = vlaneseq
    %v2589 = vshrl.u32 %v2588, 7
    %v2590 = vsub.s32 2, %v2589
    %v2591 = vrot.slane %v2578, %v2590
    %v2592 = vlaneseq
    %v2593 = vshrl.u32 %v2592, 7
    %v2594 = vsub.s32 3, %v2593
    %v2595 = vrot.slane %v2578, %v2594
    %v2632 = vunpack.c.l.b16 %v2546
    %v2633 = vunpack.c.h.b16 %v2546
    %v2634 = vunpack.c.l.b16 %v2547
    %v2635 = vunpack.c.h.b16 %v2547
    %v2636 = vunpack.c.l.b16 %v2548
    %v2637 = vunpack.c.h.b16 %v2548
    %v2638 = vunpack.c.l.b16 %v2549
    %v2639 = vunpack.c.h.b16 %v2549
    %v2640 = vunpack.c.l.b16 %v2550
    %v2641 = vunpack.c.h.b16 %v2550
    %v2642 = vunpack.c.l.b16 %v2551
    %v2643 = vunpack.c.h.b16 %v2551
    %v2644 = vunpack.c.l.b16 %v2552
    %v2645 = vunpack.c.h.b16 %v2552
    %v2646 = vunpack.c.l.b16 %v2553
    %v2647 = vunpack.c.h.b16 %v2553
    %v2648 = vunpack.c.l.b16 %v2554
    %v2649 = vunpack.c.h.b16 %v2554
    %v2650 = vunpack.c.l.b16 %v2555
    %v2651 = vunpack.c.h.b16 %v2555
    %v2652 = vunpack.c.l.b16 %v2556
    %v2653 = vunpack.c.h.b16 %v2556
    %v2654 = vunpack.c.l.b16 %v2557
    %v2655 = vunpack.c.h.b16 %v2557
    %v2656 = vunpack.c.l.b16 %v2558
    %v2657 = vunpack.c.h.b16 %v2558
    %v2658 = vunpack.c.l.b16 %v2559
    %v2659 = vunpack.c.h.b16 %v2559
    %v2660 = vunpack.c.l.b16 %v2560
    %v2661 = vunpack.c.h.b16 %v2560
    %v2662 = vunpack.c.l.b16 %v2561
    %v2663 = vunpack.c.h.b16 %v2561
    %v2664 = vunpack.c.l.b16 %v2562
    %v2665 = vunpack.c.h.b16 %v2562
    %v2666 = vunpack.c.l.b16 %v2563
    %v2667 = vunpack.c.h.b16 %v2563
    %v2668 = vunpack.c.l.b16 %v2564
    %v2669 = vunpack.c.h.b16 %v2564
    %v2670 = vunpack.c.l.b16 %v2565
    %v2671 = vunpack.c.h.b16 %v2565
    %v2672 = vunpack.c.l.b16 %v2566
    %v2673 = vunpack.c.h.b16 %v2566
    %v2674 = vunpack.c.l.b16 %v2567
    %v2675 = vunpack.c.h.b16 %v2567
    %v2676 = vunpack.c.l.b16 %v2568
    %v2677 = vunpack.c.h.b16 %v2568
    %v2678 = vunpack.c.l.b16 %v2569
    %v2679 = vunpack.c.h.b16 %v2569
    %v2680 = vunpack.c.l.b16 %v2570
    %v2681 = vunpack.c.h.b16 %v2570
    %v2682 = vunpack.c.l.b16 %v2571
    %v2683 = vunpack.c.h.b16 %v2571
    %v2684 = vunpack.c.l.b16 %v2572
    %v2685 = vunpack.c.h.b16 %v2572
    %v2686 = vunpack.c.l.b16 %v2573
    %v2687 = vunpack.c.h.b16 %v2573
    %v2688 = vunpack.c.l.b16 %v2574
    %v2689 = vunpack.c.h.b16 %v2574
    %v2690 = vunpack.c.l.b16 %v2575
    %v2691 = vunpack.c.h.b16 %v2575
    %v2692 = vunpack.c.l.b16 %v2576
    %v2693 = vunpack.c.h.b16 %v2576
    %v2694 = vunpack.c.l.b16 %v2577
    %v2695 = vunpack.c.h.b16 %v2577
    %v2696 = vpack.c.b16 %v2636, %v2632
    %v2697 = vpack.c.b16 %v2637, %v2633
    %v2698 = vpack.c.b16 %v2638, %v2634
    %v2699 = vpack.c.b16 %v2639, %v2635
    %v2700 = vpack.c.b16 %v2644, %v2640
    %v2701 = vpack.c.b16 %v2645, %v2641
    %v2702 = vpack.c.b16 %v2646, %v2642
    %v2703 = vpack.c.b16 %v2647, %v2643
    %v2704 = vpack.c.b16 %v2652, %v2648
    %v2705 = vpack.c.b16 %v2653, %v2649
    %v2706 = vpack.c.b16 %v2654, %v2650
    %v2707 = vpack.c.b16 %v2655, %v2651
    %v2708 = vpack.c.b16 %v2660, %v2656
    %v2709 = vpack.c.b16 %v2661, %v2657
    %v2710 = vpack.c.b16 %v2662, %v2658
    %v2711 = vpack.c.b16 %v2663, %v2659
    %v2712 = vpack.c.b16 %v2668, %v2664
    %v2713 = vpack.c.b16 %v2669, %v2665
    %v2714 = vpack.c.b16 %v2670, %v2666
    %v2715 = vpack.c.b16 %v2671, %v2667
    %v2716 = vpack.c.b16 %v2676, %v2672
    %v2717 = vpack.c.b16 %v2677, %v2673
    %v2718 = vpack.c.b16 %v2678, %v2674
    %v2719 = vpack.c.b16 %v2679, %v2675
    %v2720 = vpack.c.b16 %v2684, %v2680
    %v2721 = vpack.c.b16 %v2685, %v2681
    %v2722 = vpack.c.b16 %v2686, %v2682
    %v2723 = vpack.c.b16 %v2687, %v2683
    %v2724 = vpack.c.b16 %v2692, %v2688
    %v2725 = vpack.c.b16 %v2693, %v2689
    %v2726 = vpack.c.b16 %v2694, %v2690
    %v2727 = vpack.c.b16 %v2695, %v2691
    %2760 = vmatprep.subr.bf16.mxu0 %v2725
    %2761 = vmatpush1.bf16.msra.mxu0 %v2724
    %2762 = vmatprep.subr.bf16.mxu0 %v2721
    %2763 = vmatpush1.bf16.msra.mxu0 %v2720
    %2764 = vmatprep.subr.bf16.mxu0 %v2717
    %2765 = vmatpush1.bf16.msra.mxu0 %v2716
    %2766 = vmatprep.subr.bf16.mxu0 %v2713
    %2767 = vmatpush1.bf16.msra.mxu0 %v2712
    %2768 = vmatprep.subr.bf16.mxu0 %v2709
    %2769 = vmatpush1.bf16.msra.mxu0 %v2708
    %2770 = vmatprep.subr.bf16.mxu0 %v2705
    %2771 = vmatpush1.bf16.msra.mxu0 %v2704
    %2772 = vmatprep.subr.bf16.mxu0 %v2701
    %2773 = vmatpush1.bf16.msra.mxu0 %v2700
    %2774 = vmatprep.subr.bf16.mxu0 %v2697
    %2775 = vmatpush1.bf16.msra.mxu0 %v2696
    %2776 = vmatprep.subr.bf16.mxu0 0
    %2777 = vmatpush2.bf16.msra.mxu0 0
    %2778 = vmatprep.subr.bf16.mxu0 0
    %2779 = vmatpush2.bf16.msra.mxu0 0
    %2780 = vmatprep.subr.bf16.mxu0 0
    %2781 = vmatpush2.bf16.msra.mxu0 0
    %2782 = vmatprep.subr.bf16.mxu0 0
    %2783 = vmatpush2.bf16.msra.mxu0 0
    %2784 = vmatprep.subr.bf16.mxu0 0
    %2785 = vmatpush2.bf16.msra.mxu0 0
    %2786 = vmatprep.subr.bf16.mxu0 0
    %2787 = vmatpush2.bf16.msra.mxu0 0
    %2788 = vmatprep.subr.bf16.mxu0 0
    %2789 = vmatpush2.bf16.msra.mxu0 0
    %2790 = vmatprep.subr.bf16.mxu0 0
    %2791 = vmatpush2.bf16.msra.mxu0 0
    %2792 = vmatprep.mubr.bf16.mxu0 0
    %2793 = vmatmul.mubr.bf16.gmra.mxu0 %v2544
    %v2794 = vpop.f32.mrf.mxu0
    %v2795 = vadd.f32 %v2583, %v2794
    %v2796 = vpop.f32.mrf.mxu0
    %v2797 = vadd.f32 %v2587, %v2796
    %v2798 = vpop.f32.mrf.mxu0
    %v2799 = vadd.f32 %v2583, %v2798
    %v2800 = vpop.f32.mrf.mxu0
    %v2801 = vadd.f32 %v2587, %v2800
    %2802 = vmatprep.mubr.bf16.mxu0 0
    %2803 = vmatmul.mubr.bf16.gmra.mxu0 %v2545
    %v2804 = vpop.f32.mrf.mxu0
    %v2805 = vadd.f32 %v2583, %v2804
    %v2806 = vpop.f32.mrf.mxu0
    %v2807 = vadd.f32 %v2587, %v2806
    %v2808 = vpop.f32.mrf.mxu0
    %v2809 = vadd.f32 %v2583, %v2808
    %v2810 = vpop.f32.mrf.mxu0
    %v2811 = vadd.f32 %v2587, %v2810
    %2812 = vdwg.mxu0
    %2813 = vmatprep.subr.bf16.mxu0 %v2727
    %2814 = vmatpush1.bf16.msra.mxu0 %v2726
    %2815 = vmatprep.subr.bf16.mxu0 %v2723
    %2816 = vmatpush1.bf16.msra.mxu0 %v2722
    %2817 = vmatprep.subr.bf16.mxu0 %v2719
    %2818 = vmatpush1.bf16.msra.mxu0 %v2718
    %2819 = vmatprep.subr.bf16.mxu0 %v2715
    %2820 = vmatpush1.bf16.msra.mxu0 %v2714
    %2821 = vmatprep.subr.bf16.mxu0 %v2711
    %2822 = vmatpush1.bf16.msra.mxu0 %v2710
    %2823 = vmatprep.subr.bf16.mxu0 %v2707
    %2824 = vmatpush1.bf16.msra.mxu0 %v2706
    %2825 = vmatprep.subr.bf16.mxu0 %v2703
    %2826 = vmatpush1.bf16.msra.mxu0 %v2702
    %2827 = vmatprep.subr.bf16.mxu0 %v2699
    %2828 = vmatpush1.bf16.msra.mxu0 %v2698
    %2829 = vmatprep.subr.bf16.mxu0 0
    %2830 = vmatpush2.bf16.msra.mxu0 0
    %2831 = vmatprep.subr.bf16.mxu0 0
    %2832 = vmatpush2.bf16.msra.mxu0 0
    %2833 = vmatprep.subr.bf16.mxu0 0
    %2834 = vmatpush2.bf16.msra.mxu0 0
    %2835 = vmatprep.subr.bf16.mxu0 0
    %2836 = vmatpush2.bf16.msra.mxu0 0
    %2837 = vmatprep.subr.bf16.mxu0 0
    %2838 = vmatpush2.bf16.msra.mxu0 0
    %2839 = vmatprep.subr.bf16.mxu0 0
    %2840 = vmatpush2.bf16.msra.mxu0 0
    %2841 = vmatprep.subr.bf16.mxu0 0
    %2842 = vmatpush2.bf16.msra.mxu0 0
    %2843 = vmatprep.subr.bf16.mxu0 0
    %2844 = vmatpush2.bf16.msra.mxu0 0
    %2845 = vmatprep.mubr.bf16.mxu0 0
    %2846 = vmatmul.mubr.bf16.gmra.mxu0 %v2544
    %v2847 = vpop.f32.mrf.mxu0
    %v2848 = vadd.f32 %v2591, %v2847
    %v2849 = vpop.f32.mrf.mxu0
    %v2850 = vadd.f32 %v2595, %v2849
    %v2851 = vpop.f32.mrf.mxu0
    %v2852 = vadd.f32 %v2591, %v2851
    %v2853 = vpop.f32.mrf.mxu0
    %v2854 = vadd.f32 %v2595, %v2853
    %2855 = vmatprep.mubr.bf16.mxu0 0
    %2856 = vmatmul.mubr.bf16.gmra.mxu0 %v2545
    %v2857 = vpop.f32.mrf.mxu0
    %v2858 = vadd.f32 %v2591, %v2857
    %v2859 = vpop.f32.mrf.mxu0
    %v2860 = vadd.f32 %v2595, %v2859
    %v2861 = vpop.f32.mrf.mxu0
    %v2862 = vadd.f32 %v2591, %v2861
    %v2863 = vpop.f32.mrf.mxu0
    %v2864 = vadd.f32 %v2595, %v2863
    %2865 = vdwg.mxu0
    %v2866 = vmul.f32 %v2795, 0.5
    %v2867 = vmul.f32 %v2797, 0.5
    %v2868 = vmul.f32 %v2848, 0.5
    %v2869 = vmul.f32 %v2850, 0.5
    %v2870 = vmul.f32 %v2799, 0.5
    %v2871 = vmul.f32 %v2801, 0.5
    %v2872 = vmul.f32 %v2852, 0.5
    %v2873 = vmul.f32 %v2854, 0.5
    %v2874 = vmul.f32 %v2805, 0.5
    %v2875 = vmul.f32 %v2807, 0.5
    %v2876 = vmul.f32 %v2858, 0.5
    %v2877 = vmul.f32 %v2860, 0.5
    %v2878 = vmul.f32 %v2809, 0.5
    %v2879 = vmul.f32 %v2811, 0.5
    %v2880 = vmul.f32 %v2862, 0.5
    %v2881 = vmul.f32 %v2864, 0.5
    %v2882 = vmul.f32 %v2795, 0.044715
    %v2883 = vmul.f32 %v2797, 0.044715
    %v2884 = vmul.f32 %v2848, 0.044715
    %v2885 = vmul.f32 %v2850, 0.044715
    %v2886 = vmul.f32 %v2799, 0.044715
    %v2887 = vmul.f32 %v2801, 0.044715
    %v2888 = vmul.f32 %v2852, 0.044715
    %v2889 = vmul.f32 %v2854, 0.044715
    %v2890 = vmul.f32 %v2805, 0.044715
    %v2891 = vmul.f32 %v2807, 0.044715
    %v2892 = vmul.f32 %v2858, 0.044715
    %v2893 = vmul.f32 %v2860, 0.044715
    %v2894 = vmul.f32 %v2809, 0.044715
    %v2895 = vmul.f32 %v2811, 0.044715
    %v2896 = vmul.f32 %v2862, 0.044715
    %v2897 = vmul.f32 %v2864, 0.044715
    %v2898 = vmul.f32 %v2882, %v2795
    %v2899 = vmul.f32 %v2883, %v2797
    %v2900 = vmul.f32 %v2884, %v2848
    %v2901 = vmul.f32 %v2885, %v2850
    %v2902 = vmul.f32 %v2886, %v2799
    %v2903 = vmul.f32 %v2887, %v2801
    %v2904 = vmul.f32 %v2888, %v2852
    %v2905 = vmul.f32 %v2889, %v2854
    %v2906 = vmul.f32 %v2890, %v2805
    %v2907 = vmul.f32 %v2891, %v2807
    %v2908 = vmul.f32 %v2892, %v2858
    %v2909 = vmul.f32 %v2893, %v2860
    %v2910 = vmul.f32 %v2894, %v2809
    %v2911 = vmul.f32 %v2895, %v2811
    %v2912 = vmul.f32 %v2896, %v2862
    %v2913 = vmul.f32 %v2897, %v2864
    %v2914 = vmul.f32 %v2898, %v2795
    %v2915 = vmul.f32 %v2899, %v2797
    %v2916 = vmul.f32 %v2900, %v2848
    %v2917 = vmul.f32 %v2901, %v2850
    %v2918 = vmul.f32 %v2902, %v2799
    %v2919 = vmul.f32 %v2903, %v2801
    %v2920 = vmul.f32 %v2904, %v2852
    %v2921 = vmul.f32 %v2905, %v2854
    %v2922 = vmul.f32 %v2906, %v2805
    %v2923 = vmul.f32 %v2907, %v2807
    %v2924 = vmul.f32 %v2908, %v2858
    %v2925 = vmul.f32 %v2909, %v2860
    %v2926 = vmul.f32 %v2910, %v2809
    %v2927 = vmul.f32 %v2911, %v2811
    %v2928 = vmul.f32 %v2912, %v2862
    %v2929 = vmul.f32 %v2913, %v2864
    %v2930 = vadd.f32 %v2795, %v2914
    %v2931 = vadd.f32 %v2797, %v2915
    %v2932 = vadd.f32 %v2848, %v2916
    %v2933 = vadd.f32 %v2850, %v2917
    %v2934 = vadd.f32 %v2799, %v2918
    %v2935 = vadd.f32 %v2801, %v2919
    %v2936 = vadd.f32 %v2852, %v2920
    %v2937 = vadd.f32 %v2854, %v2921
    %v2938 = vadd.f32 %v2805, %v2922
    %v2939 = vadd.f32 %v2807, %v2923
    %v2940 = vadd.f32 %v2858, %v2924
    %v2941 = vadd.f32 %v2860, %v2925
    %v2942 = vadd.f32 %v2809, %v2926
    %v2943 = vadd.f32 %v2811, %v2927
    %v2944 = vadd.f32 %v2862, %v2928
    %v2945 = vadd.f32 %v2864, %v2929
    %v2946 = vmul.f32 %v2930, 0.7978846
    %v2947 = vmul.f32 %v2931, 0.7978846
    %v2948 = vmul.f32 %v2932, 0.7978846
    %v2949 = vmul.f32 %v2933, 0.7978846
    %v2950 = vmul.f32 %v2934, 0.7978846
    %v2951 = vmul.f32 %v2935, 0.7978846
    %v2952 = vmul.f32 %v2936, 0.7978846
    %v2953 = vmul.f32 %v2937, 0.7978846
    %v2954 = vmul.f32 %v2938, 0.7978846
    %v2955 = vmul.f32 %v2939, 0.7978846
    %v2956 = vmul.f32 %v2940, 0.7978846
    %v2957 = vmul.f32 %v2941, 0.7978846
    %v2958 = vmul.f32 %v2942, 0.7978846
    %v2959 = vmul.f32 %v2943, 0.7978846
    %v2960 = vmul.f32 %v2944, 0.7978846
    %v2961 = vmul.f32 %v2945, 0.7978846
    %v2962 = vtanh.pop %v2946
    %v2963 = vtanh.pop %v2947
    %v2964 = vtanh.pop %v2948
    %v2965 = vtanh.pop %v2949
    %v2966 = vtanh.pop %v2950
    %v2967 = vtanh.pop %v2951
    %v2968 = vtanh.pop %v2952
    %v2969 = vtanh.pop %v2953
    %v2970 = vtanh.pop %v2954
    %v2971 = vtanh.pop %v2955
    %v2972 = vtanh.pop %v2956
    %v2973 = vtanh.pop %v2957
    %v2974 = vtanh.pop %v2958
    %v2975 = vtanh.pop %v2959
    %v2976 = vtanh.pop %v2960
    %v2977 = vtanh.pop %v2961
    %v2978 = vadd.f32 %v2962, 1.0
    %v2979 = vadd.f32 %v2963, 1.0
    %v2980 = vadd.f32 %v2964, 1.0
    %v2981 = vadd.f32 %v2965, 1.0
    %v2982 = vadd.f32 %v2966, 1.0
    %v2983 = vadd.f32 %v2967, 1.0
    %v2984 = vadd.f32 %v2968, 1.0
    %v2985 = vadd.f32 %v2969, 1.0
    %v2986 = vadd.f32 %v2970, 1.0
    %v2987 = vadd.f32 %v2971, 1.0
    %v2988 = vadd.f32 %v2972, 1.0
    %v2989 = vadd.f32 %v2973, 1.0
    %v2990 = vadd.f32 %v2974, 1.0
    %v2991 = vadd.f32 %v2975, 1.0
    %v2992 = vadd.f32 %v2976, 1.0
    %v2993 = vadd.f32 %v2977, 1.0
    %v2994 = vmul.f32 %v2866, %v2978
    %v2995 = vmul.f32 %v2867, %v2979
    %v2996 = vmul.f32 %v2868, %v2980
    %v2997 = vmul.f32 %v2869, %v2981
    %v2998 = vmul.f32 %v2870, %v2982
    %v2999 = vmul.f32 %v2871, %v2983
    %v3000 = vmul.f32 %v2872, %v2984
    %v3001 = vmul.f32 %v2873, %v2985
    %v3002 = vmul.f32 %v2874, %v2986
    %v3003 = vmul.f32 %v2875, %v2987
    %v3004 = vmul.f32 %v2876, %v2988
    %v3005 = vmul.f32 %v2877, %v2989
    %v3006 = vmul.f32 %v2878, %v2990
    %v3007 = vmul.f32 %v2879, %v2991
    %v3008 = vmul.f32 %v2880, %v2992
    %v3009 = vmul.f32 %v2881, %v2993
    %v3010 = vpack.c.bf16 %v2998, %v2994
    %v3011 = vpack.c.bf16 %v2999, %v2995
    %v3012 = vpack.c.bf16 %v3000, %v2996
    %v3013 = vpack.c.bf16 %v3001, %v2997
    %v3014 = vpack.c.bf16 %v3006, %v3002
    %v3015 = vpack.c.bf16 %v3007, %v3003
    %v3016 = vpack.c.bf16 %v3008, %v3004
    %v3017 = vpack.c.bf16 %v3009, %v3005
    %v3018 = vld [vmem:[#allocation8] sm:$0xf]
    %v3019 = vld [vmem:[#allocation8 + $0x4] sm:$0xf]
    %v3020 = vld [vmem:[#allocation8 + $0x8] sm:$0xf]
    %v3021 = vld [vmem:[#allocation8 + $0xc] sm:$0xf]
    %v3022 = vld [vmem:[#allocation8 + $0x10] sm:$0xf]
    %v3023 = vld [vmem:[#allocation8 + $0x14] sm:$0xf]
    %v3024 = vld [vmem:[#allocation8 + $0x18] sm:$0xf]
    %v3025 = vld [vmem:[#allocation8 + $0x1c] sm:$0xf]
    %v3026 = vld [vmem:[#allocation8 + $0x20] sm:$0xf]
    %v3027 = vld [vmem:[#allocation8 + $0x24] sm:$0xf]
    %v3028 = vld [vmem:[#allocation8 + $0x28] sm:$0xf]
    %v3029 = vld [vmem:[#allocation8 + $0x2c] sm:$0xf]
    %v3030 = vld [vmem:[#allocation8 + $0x30] sm:$0xf]
    %v3031 = vld [vmem:[#allocation8 + $0x34] sm:$0xf]
    %v3032 = vld [vmem:[#allocation8 + $0x38] sm:$0xf]
    %v3033 = vld [vmem:[#allocation8 + $0x3c] sm:$0xf]
    %v3034 = vld [vmem:[#allocation8 + $0x40] sm:$0xf]
    %v3035 = vld [vmem:[#allocation8 + $0x44] sm:$0xf]
    %v3036 = vld [vmem:[#allocation8 + $0x48] sm:$0xf]
    %v3037 = vld [vmem:[#allocation8 + $0x4c] sm:$0xf]
    %v3038 = vld [vmem:[#allocation8 + $0x50] sm:$0xf]
    %v3039 = vld [vmem:[#allocation8 + $0x54] sm:$0xf]
    %v3040 = vld [vmem:[#allocation8 + $0x58] sm:$0xf]
    %v3041 = vld [vmem:[#allocation8 + $0x5c] sm:$0xf]
    %v3042 = vld [vmem:[#allocation8 + $0x60] sm:$0xf]
    %v3043 = vld [vmem:[#allocation8 + $0x64] sm:$0xf]
    %v3044 = vld [vmem:[#allocation8 + $0x68] sm:$0xf]
    %v3045 = vld [vmem:[#allocation8 + $0x6c] sm:$0xf]
    %v3046 = vld [vmem:[#allocation8 + $0x70] sm:$0xf]
    %v3047 = vld [vmem:[#allocation8 + $0x74] sm:$0xf]
    %v3048 = vld [vmem:[#allocation8 + $0x78] sm:$0xf]
    %v3049 = vld [vmem:[#allocation8 + $0x7c] sm:$0xf]
    %v3050 = vld [vmem:[#allocation8 + $0x80] sm:$0xf]
    %v3051 = vld [vmem:[#allocation8 + $0x84] sm:$0xf]
    %v3052 = vld [vmem:[#allocation8 + $0x88] sm:$0xf]
    %v3053 = vld [vmem:[#allocation8 + $0x8c] sm:$0xf]
    %v3054 = vld [vmem:[#allocation8 + $0x90] sm:$0xf]
    %v3055 = vld [vmem:[#allocation8 + $0x94] sm:$0xf]
    %v3056 = vld [vmem:[#allocation8 + $0x98] sm:$0xf]
    %v3057 = vld [vmem:[#allocation8 + $0x9c] sm:$0xf]
    %v3058 = vld [vmem:[#allocation8 + $0xa0] sm:$0xf]
    %v3059 = vld [vmem:[#allocation8 + $0xa4] sm:$0xf]
    %v3060 = vld [vmem:[#allocation8 + $0xa8] sm:$0xf]
    %v3061 = vld [vmem:[#allocation8 + $0xac] sm:$0xf]
    %v3062 = vld [vmem:[#allocation8 + $0xb0] sm:$0xf]
    %v3063 = vld [vmem:[#allocation8 + $0xb4] sm:$0xf]
    %v3064 = vld [vmem:[#allocation8 + $0xb8] sm:$0xf]
    %v3065 = vld [vmem:[#allocation8 + $0xbc] sm:$0xf]
    %v3066 = vld [vmem:[#allocation8 + $0xc0] sm:$0xf]
    %v3067 = vld [vmem:[#allocation8 + $0xc4] sm:$0xf]
    %v3068 = vld [vmem:[#allocation8 + $0xc8] sm:$0xf]
    %v3069 = vld [vmem:[#allocation8 + $0xcc] sm:$0xf]
    %v3070 = vld [vmem:[#allocation8 + $0xd0] sm:$0xf]
    %v3071 = vld [vmem:[#allocation8 + $0xd4] sm:$0xf]
    %v3072 = vld [vmem:[#allocation8 + $0xd8] sm:$0xf]
    %v3073 = vld [vmem:[#allocation8 + $0xdc] sm:$0xf]
    %v3074 = vld [vmem:[#allocation8 + $0xe0] sm:$0xf]
    %v3075 = vld [vmem:[#allocation8 + $0xe4] sm:$0xf]
    %v3076 = vld [vmem:[#allocation8 + $0xe8] sm:$0xf]
    %v3077 = vld [vmem:[#allocation8 + $0xec] sm:$0xf]
    %v3078 = vld [vmem:[#allocation8 + $0xf0] sm:$0xf]
    %v3079 = vld [vmem:[#allocation8 + $0xf4] sm:$0xf]
    %v3080 = vld [vmem:[#allocation8 + $0xf8] sm:$0xf]
    %v3081 = vld [vmem:[#allocation8 + $0xfc] sm:$0xf]
    %v3082 = vlaneseq
    %v3083 = vshrl.u32 %v3082, 7
    %v3084 = vsub.s32 5, %v3083
    %v3085 = vrot.slane %v87, %v3084
    %v3150 = vunpack.c.l.b16 %v3018
    %v3151 = vunpack.c.l.b16 %v3019
    %v3152 = vunpack.c.l.b16 %v3020
    %v3153 = vunpack.c.l.b16 %v3021
    %v3154 = vunpack.c.l.b16 %v3022
    %v3155 = vunpack.c.l.b16 %v3023
    %v3156 = vunpack.c.l.b16 %v3024
    %v3157 = vunpack.c.l.b16 %v3025
    %v3158 = vunpack.c.l.b16 %v3026
    %v3159 = vunpack.c.l.b16 %v3027
    %v3160 = vunpack.c.l.b16 %v3028
    %v3161 = vunpack.c.l.b16 %v3029
    %v3162 = vunpack.c.l.b16 %v3030
    %v3163 = vunpack.c.l.b16 %v3031
    %v3164 = vunpack.c.l.b16 %v3032
    %v3165 = vunpack.c.l.b16 %v3033
    %v3166 = vunpack.c.l.b16 %v3034
    %v3167 = vunpack.c.l.b16 %v3035
    %v3168 = vunpack.c.l.b16 %v3036
    %v3169 = vunpack.c.l.b16 %v3037
    %v3170 = vunpack.c.l.b16 %v3038
    %v3171 = vunpack.c.l.b16 %v3039
    %v3172 = vunpack.c.l.b16 %v3040
    %v3173 = vunpack.c.l.b16 %v3041
    %v3174 = vunpack.c.l.b16 %v3042
    %v3175 = vunpack.c.l.b16 %v3043
    %v3176 = vunpack.c.l.b16 %v3044
    %v3177 = vunpack.c.l.b16 %v3045
    %v3178 = vunpack.c.l.b16 %v3046
    %v3179 = vunpack.c.l.b16 %v3047
    %v3180 = vunpack.c.l.b16 %v3048
    %v3181 = vunpack.c.l.b16 %v3049
    %v3182 = vunpack.c.l.b16 %v3050
    %v3183 = vunpack.c.l.b16 %v3051
    %v3184 = vunpack.c.l.b16 %v3052
    %v3185 = vunpack.c.l.b16 %v3053
    %v3186 = vunpack.c.l.b16 %v3054
    %v3187 = vunpack.c.l.b16 %v3055
    %v3188 = vunpack.c.l.b16 %v3056
    %v3189 = vunpack.c.l.b16 %v3057
    %v3190 = vunpack.c.l.b16 %v3058
    %v3191 = vunpack.c.l.b16 %v3059
    %v3192 = vunpack.c.l.b16 %v3060
    %v3193 = vunpack.c.l.b16 %v3061
    %v3194 = vunpack.c.l.b16 %v3062
    %v3195 = vunpack.c.l.b16 %v3063
    %v3196 = vunpack.c.l.b16 %v3064
    %v3197 = vunpack.c.l.b16 %v3065
    %v3198 = vunpack.c.l.b16 %v3066
    %v3199 = vunpack.c.l.b16 %v3067
    %v3200 = vunpack.c.l.b16 %v3068
    %v3201 = vunpack.c.l.b16 %v3069
    %v3202 = vunpack.c.l.b16 %v3070
    %v3203 = vunpack.c.l.b16 %v3071
    %v3204 = vunpack.c.l.b16 %v3072
    %v3205 = vunpack.c.l.b16 %v3073
    %v3206 = vunpack.c.l.b16 %v3074
    %v3207 = vunpack.c.l.b16 %v3075
    %v3208 = vunpack.c.l.b16 %v3076
    %v3209 = vunpack.c.l.b16 %v3077
    %v3210 = vunpack.c.l.b16 %v3078
    %v3211 = vunpack.c.l.b16 %v3079
    %v3212 = vunpack.c.l.b16 %v3080
    %v3213 = vunpack.c.l.b16 %v3081
    %v3214 = vpack.c.b16 %v3151, %v3150
    %v3215 = vpack.c.b16 %v3153, %v3152
    %v3216 = vpack.c.b16 %v3155, %v3154
    %v3217 = vpack.c.b16 %v3157, %v3156
    %v3218 = vpack.c.b16 %v3159, %v3158
    %v3219 = vpack.c.b16 %v3161, %v3160
    %v3220 = vpack.c.b16 %v3163, %v3162
    %v3221 = vpack.c.b16 %v3165, %v3164
    %v3222 = vpack.c.b16 %v3167, %v3166
    %v3223 = vpack.c.b16 %v3169, %v3168
    %v3224 = vpack.c.b16 %v3171, %v3170
    %v3225 = vpack.c.b16 %v3173, %v3172
    %v3226 = vpack.c.b16 %v3175, %v3174
    %v3227 = vpack.c.b16 %v3177, %v3176
    %v3228 = vpack.c.b16 %v3179, %v3178
    %v3229 = vpack.c.b16 %v3181, %v3180
    %v3230 = vpack.c.b16 %v3183, %v3182
    %v3231 = vpack.c.b16 %v3185, %v3184
    %v3232 = vpack.c.b16 %v3187, %v3186
    %v3233 = vpack.c.b16 %v3189, %v3188
    %v3234 = vpack.c.b16 %v3191, %v3190
    %v3235 = vpack.c.b16 %v3193, %v3192
    %v3236 = vpack.c.b16 %v3195, %v3194
    %v3237 = vpack.c.b16 %v3197, %v3196
    %v3238 = vpack.c.b16 %v3199, %v3198
    %v3239 = vpack.c.b16 %v3201, %v3200
    %v3240 = vpack.c.b16 %v3203, %v3202
    %v3241 = vpack.c.b16 %v3205, %v3204
    %v3242 = vpack.c.b16 %v3207, %v3206
    %v3243 = vpack.c.b16 %v3209, %v3208
    %v3244 = vpack.c.b16 %v3211, %v3210
    %v3245 = vpack.c.b16 %v3213, %v3212
    %3278 = vmatprep.subr.bf16.mxu0 0
    %3279 = vmatpush1.bf16.msra.mxu0 %v3221
    %3280 = vmatprep.subr.bf16.mxu0 0
    %3281 = vmatpush1.bf16.msra.mxu0 %v3220
    %3282 = vmatprep.subr.bf16.mxu0 0
    %3283 = vmatpush1.bf16.msra.mxu0 %v3219
    %3284 = vmatprep.subr.bf16.mxu0 0
    %3285 = vmatpush1.bf16.msra.mxu0 %v3218
    %3286 = vmatprep.subr.bf16.mxu0 0
    %3287 = vmatpush1.bf16.msra.mxu0 %v3217
    %3288 = vmatprep.subr.bf16.mxu0 0
    %3289 = vmatpush1.bf16.msra.mxu0 %v3216
    %3290 = vmatprep.subr.bf16.mxu0 0
    %3291 = vmatpush1.bf16.msra.mxu0 %v3215
    %3292 = vmatprep.subr.bf16.mxu0 0
    %3293 = vmatpush1.bf16.msra.mxu0 %v3214
    %3294 = vmatprep.subr.bf16.mxu0 0
    %3295 = vmatpush2.bf16.msra.mxu0 %v3229
    %3296 = vmatprep.subr.bf16.mxu0 0
    %3297 = vmatpush2.bf16.msra.mxu0 %v3228
    %3298 = vmatprep.subr.bf16.mxu0 0
    %3299 = vmatpush2.bf16.msra.mxu0 %v3227
    %3300 = vmatprep.subr.bf16.mxu0 0
    %3301 = vmatpush2.bf16.msra.mxu0 %v3226
    %3302 = vmatprep.subr.bf16.mxu0 0
    %3303 = vmatpush2.bf16.msra.mxu0 %v3225
    %3304 = vmatprep.subr.bf16.mxu0 0
    %3305 = vmatpush2.bf16.msra.mxu0 %v3224
    %3306 = vmatprep.subr.bf16.mxu0 0
    %3307 = vmatpush2.bf16.msra.mxu0 %v3223
    %3308 = vmatprep.subr.bf16.mxu0 0
    %3309 = vmatpush2.bf16.msra.mxu0 %v3222
    %3310 = vmatprep.mubr.bf16.mxu0 %v3011
    %3311 = vmatmul.mubr.bf16.gmra.mxu0 %v3010
    %v3312 = vpop.f32.mrf.mxu0
    %v3313 = vadd.f32 %v3085, %v3312
    %v3314 = vpop.f32.mrf.mxu0
    %v3315 = vpop.f32.mrf.mxu0
    %v3316 = vadd.f32 %v3085, %v3315
    %v3317 = vpop.f32.mrf.mxu0
    %3318 = vmatprep.mubr.bf16.mxu0 %v3015
    %3319 = vmatmul.mubr.bf16.gmra.mxu0 %v3014
    %v3320 = vpop.f32.mrf.mxu0
    %v3321 = vadd.f32 %v3085, %v3320
    %v3322 = vpop.f32.mrf.mxu0
    %v3323 = vpop.f32.mrf.mxu0
    %v3324 = vadd.f32 %v3085, %v3323
    %v3325 = vpop.f32.mrf.mxu0
    %3326 = vdwg.mxu0
    %3327 = vmatprep.subr.bf16.mxu0 0
    %3328 = vmatpush1.bf16.msra.mxu0 %v3237
    %3329 = vmatprep.subr.bf16.mxu0 0
    %3330 = vmatpush1.bf16.msra.mxu0 %v3236
    %3331 = vmatprep.subr.bf16.mxu0 0
    %3332 = vmatpush1.bf16.msra.mxu0 %v3235
    %3333 = vmatprep.subr.bf16.mxu0 0
    %3334 = vmatpush1.bf16.msra.mxu0 %v3234
    %3335 = vmatprep.subr.bf16.mxu0 0
    %3336 = vmatpush1.bf16.msra.mxu0 %v3233
    %3337 = vmatprep.subr.bf16.mxu0 0
    %3338 = vmatpush1.bf16.msra.mxu0 %v3232
    %3339 = vmatprep.subr.bf16.mxu0 0
    %3340 = vmatpush1.bf16.msra.mxu0 %v3231
    %3341 = vmatprep.subr.bf16.mxu0 0
    %3342 = vmatpush1.bf16.msra.mxu0 %v3230
    %3343 = vmatprep.subr.bf16.mxu0 0
    %3344 = vmatpush2.bf16.msra.mxu0 %v3245
    %3345 = vmatprep.subr.bf16.mxu0 0
    %3346 = vmatpush2.bf16.msra.mxu0 %v3244
    %3347 = vmatprep.subr.bf16.mxu0 0
    %3348 = vmatpush2.bf16.msra.mxu0 %v3243
    %3349 = vmatprep.subr.bf16.mxu0 0
    %3350 = vmatpush2.bf16.msra.mxu0 %v3242
    %3351 = vmatprep.subr.bf16.mxu0 0
    %3352 = vmatpush2.bf16.msra.mxu0 %v3241
    %3353 = vmatprep.subr.bf16.mxu0 0
    %3354 = vmatpush2.bf16.msra.mxu0 %v3240
    %3355 = vmatprep.subr.bf16.mxu0 0
    %3356 = vmatpush2.bf16.msra.mxu0 %v3239
    %3357 = vmatprep.subr.bf16.mxu0 0
    %3358 = vmatpush2.bf16.msra.mxu0 %v3238
    %3359 = vmatprep.mubr.bf16.mxu0 %v3013
    %3360 = vmatmul.mubr.bf16.gmra.mxu0 %v3012
    %v3361 = vpop.f32.mrf.mxu0
    %v3362 = vadd.f32 %v3313, %v3361
    %v3363 = vpop.f32.mrf.mxu0
    %v3364 = vpop.f32.mrf.mxu0
    %v3365 = vadd.f32 %v3316, %v3364
    %v3366 = vpop.f32.mrf.mxu0
    %3367 = vmatprep.mubr.bf16.mxu0 %v3017
    %3368 = vmatmul.mubr.bf16.gmra.mxu0 %v3016
    %v3369 = vpop.f32.mrf.mxu0
    %v3370 = vadd.f32 %v3321, %v3369
    %v3371 = vpop.f32.mrf.mxu0
    %v3372 = vpop.f32.mrf.mxu0
    %v3373 = vadd.f32 %v3324, %v3372
    %v3374 = vpop.f32.mrf.mxu0
    %3375 = vdwg.mxu0
    %v3376 = vadd.f32 %v2480, %v3362
    %v3377 = vadd.f32 %v2481, %v3365
    %v3378 = vadd.f32 %v2482, %v3370
    %v3379 = vadd.f32 %v2483, %v3373
    %3380 = vst [vmem:[#allocation10] sm:$0xff] %v3376
    %3381 = vst [vmem:[#allocation10 + $0x8] sm:$0xff] %v3377
    %3382 = vst [vmem:[#allocation10 + $0x10] sm:$0xff] %v3378
    %3383 = vst [vmem:[#allocation10 + $0x18] sm:$0xff] %v3379
    // Predicated region
    $region46: #{block_forward.1} parent=1 // pred_check
      _
    $region47: #{block_forward.1} parent=1 // pred_check_branch
      %3385 = sbr.rel (0) target = $region49
    $region48: #{block_forward.1} parent=1 // pred_region
      %s3387 = ssub.s32 512, 512
      %3388 = vsyncadd [#allocation4], %s3387
      %s3389 = sshll.u32 [#allocation10], 4
      %s3390 = int_to_ptr.vmem [resolvable:$true] %s3389
      %3395 = dma.vmem_to_hbm [thread:$0]  %s3390, 512, %s7, [#allocation4], 128, 128, 8
    $region49: #{block_forward.1} parent=1 // pred_fallthru
      _
    // Predicated region
    $region50: #{block_forward.1} parent=1 // pred_check
      _
    $region51: #{block_forward.1} parent=1 // pred_check_branch
      %3397 = sbr.rel (0) target = $region53
    $region52: #{block_forward.1} parent=1 // pred_region
      %3398 = dma.done [#allocation4], 512
    $region53: #{block_forward.1} parent=1 // pred_fallthru
      _
    %3399 = vsyncpa [#allocation3], 1
    %3400 = vsyncpa [#allocation6], 1
    %3401 = vsyncpa [#allocation9], 1
    %3402 = vsyncpa [#allocation4], 1

</llo_original>
